<compile_context>
chip_gen: v7x
topology: tpu7x:2x2x1
jax: 0.10.0
libtpu: 0.0.40
codegen_flags: <defaults>
</compile_context>

<pallas_src>
import functools
import math

import jax
import jax.numpy as jnp
from jax.experimental import pallas as pl
from jax.experimental.pallas import tpu as pltpu

BN_EPS = 1e-5
LRELU_SLOPE = 0.2

_VMEM_SPEC = pl.BlockSpec(memory_space=pltpu.MemorySpace.VMEM)


def _round_up_128(n):
    return ((n + 127) // 128) * 128


# -----------------------------------------------------------------------------
# Fused kernel: whole autoencoder forward in one pallas_call.
# -----------------------------------------------------------------------------

def _fused_autoencoder_kernel(
    # activations
    atac_ref, rna_ref,
    # atac encoder (stacked, padded)
    ea_w, ea_b, ea_g, ea_be,
    # rna encoder
    er_w, er_b, er_g, er_be,
    # atac decoder
    da_w, da_b, da_g, da_be,
    # rna decoder
    dr_w, dr_b, dr_g, dr_be,
    # fusion (split weight: atac part, rna part, bias)
    wf_a, wf_r, bf,
    # outputs
    recon_a_ref, recon_r_ref, z_ref, la_ref, lr_ref,
    *, use_tanh_atac, use_tanh_rna, use_bn_atac, use_bn_rna):

    def mlp4(x, w_ref, b_ref, g_ref, be_ref, use_bn, use_tanh):
        """3x (Linear -> [BN training] -> LeakyReLU) + final Linear [+ tanh]."""
        h = x
        for i in range(3):
            y = jnp.dot(h, w_ref[i], preferred_element_type=jnp.float32) + b_ref[i]
            if use_bn:
                # BatchNorm1d (training mode): biased batch stats, single
                # centered pass (yc reused for var and normalization).
                mean = jnp.mean(y, axis=0, keepdims=True)
                yc = y - mean
                var = jnp.mean(yc * yc, axis=0, keepdims=True)
                y = g_ref[i] * (yc * jax.lax.rsqrt(var + BN_EPS)) + be_ref[i]
            h = jnp.where(y >= 0.0, y, LRELU_SLOPE * y)
        out = jnp.dot(h, w_ref[3], preferred_element_type=jnp.float32) + b_ref[3]
        if use_tanh:
            out = jnp.tanh(out)
        return out

    # Encoders (padded feature columns stay exactly zero end-to-end because the
    # padded weight/bias/gamma/beta entries are zero).
    la = mlp4(atac_ref[...], ea_w, ea_b, ea_g, ea_be, use_bn_atac, use_tanh_atac)
    lr = mlp4(rna_ref[...], er_w, er_b, er_g, er_be, use_bn_rna, use_tanh_rna)
    la_ref[...] = la
    lr_ref[...] = lr

    # Fusion: z = [la, lr] @ W_f + b_f  ==  la @ W_fa + lr @ W_fr + b_f
    z_ref[...] = (
        jnp.dot(la, wf_a[...], preferred_element_type=jnp.float32)
        + jnp.dot(lr, wf_r[...], preferred_element_type=jnp.float32)
        + bf[...]
    )

    # Decoders.
    recon_a_ref[...] = mlp4(la, da_w, da_b, da_g, da_be, use_bn_atac, False)
    recon_r_ref[...] = mlp4(lr, dr_w, dr_b, dr_g, dr_be, use_bn_rna, False)


def _branch_args(p):
    return (p['W'], p['B'], p['G'], p['BE'])


def autoencoder_forward(atac, rna, packed_params, *, cfg_atac, cfg_rna, feat_pad):
    """Fused forward.  Inputs unpadded; outputs sliced back to real sizes."""
    n = atac.shape[0]
    atac_p = jnp.pad(atac, ((0, 0), (0, feat_pad - atac.shape[1])))
    rna_p = jnp.pad(rna, ((0, 0), (0, feat_pad - rna.shape[1])))

    kernel = functools.partial(
        _fused_autoencoder_kernel,
        use_tanh_atac=cfg_atac['use_tanh'],
        use_tanh_rna=cfg_rna['use_tanh'],
        use_bn_atac=cfg_atac['use_batchnorm'],
        use_bn_rna=cfg_rna['use_batchnorm'],
    )

    out_shape = tuple(
        jax.ShapeDtypeStruct((n, feat_pad), jnp.float32) for _ in range(5))

    recon_a_p, recon_r_p, z_p, la_p, lr_p = pl.pallas_call(
        kernel,
        out_shape=out_shape,
        in_specs=[_VMEM_SPEC] * 21,
        out_specs=tuple([_VMEM_SPEC] * 5),
    )(
        atac_p, rna_p,
        *_branch_args(packed_params['atac_encoder']),
        *_branch_args(packed_params['rna_encoder']),
        *_branch_args(packed_params['atac_decoder']),
        *_branch_args(packed_params['rna_decoder']),
        packed_params['fusion']['Wa'],
        packed_params['fusion']['Wr'],
        packed_params['fusion']['b'],
    )

    recon_atac = recon_a_p[:, :cfg_atac['in_features']]
    recon_rna = recon_r_p[:, :cfg_rna['in_features']]
    z = z_p[:, :2]
    latent_atac = la_p[:, :cfg_atac['layers'][-1]]
    latent_rna = lr_p[:, :cfg_rna['layers'][-1]]
    return recon_atac, recon_rna, z, latent_atac, latent_rna


# -----------------------------------------------------------------------------
# Parameter construction (PyTorch-like uniform init) + lane-dense packing
# -----------------------------------------------------------------------------

def _init_linear(key, fan_in, fan_out):
    kw, kb = jax.random.split(key)
    bound = 1.0 / math.sqrt(float(fan_in))
    w = jax.random.uniform(kw, (fan_in, fan_out), jnp.float32, -bound, bound)
    b = jax.random.uniform(kb, (1, fan_out), jnp.float32, -bound, bound)
    return w, b


def init_mlp4_params(key, dims):
    """Raw (unpadded) parameters for a 4-layer MLP with BN on layers 1..3."""
    keys = jax.random.split(key, 4)
    layers = []
    for i in range(4):
        w, b = _init_linear(keys[i], dims[i], dims[i + 1])
        if i < 3:
            g = jnp.ones((1, dims[i + 1]), jnp.float32)
            be = jnp.zeros((1, dims[i + 1]), jnp.float32)
            layers.append((w, b, g, be))
        else:
            layers.append((w, b))
    return layers


def _pad2(a, rows, cols):
    r, c = a.shape
    return jnp.pad(a, ((0, rows - r), (0, cols - c)))


def pack_mlp4(layers, feat_pad):
    """Zero-pad every layer to [feat_pad, feat_pad] and stack (lane-dense)."""
    Ws, Bs, Gs, BEs = [], [], [], []
    for i in range(4):
        if i < 3:
            w, b, g, be = layers[i]
            Gs.append(_pad2(g, 1, feat_pad))
            BEs.append(_pad2(be, 1, feat_pad))
        else:
            w, b = layers[i]
        Ws.append(_pad2(w, feat_pad, feat_pad))
        Bs.append(_pad2(b, 1, feat_pad))
    return {'W': jnp.stack(Ws), 'B': jnp.stack(Bs),
            'G': jnp.stack(Gs), 'BE': jnp.stack(BEs)}


def pack_fusion(w_f, b_f, d_atac, feat_pad):
    wa = _pad2(w_f[:d_atac], feat_pad, feat_pad)
    wr = _pad2(w_f[d_atac:], feat_pad, feat_pad)
    b = _pad2(b_f, 1, feat_pad)
    return {'Wa': wa, 'Wr': wr, 'b': b}


# -----------------------------------------------------------------------------
# Pure-JAX reference (for correctness check)
# -----------------------------------------------------------------------------

_HI = jax.lax.Precision.HIGHEST


def _ref_mlp4(x, layers, use_bn, use_tanh):
    h = x
    for i in range(3):
        w, b, g, be = layers[i]
        y = jnp.dot(h, w, precision=_HI) + b
        if use_bn:
            mean = jnp.mean(y, axis=0, keepdims=True)
            var = jnp.mean((y - mean) ** 2, axis=0, keepdims=True)
            y = g * (y - mean) / jnp.sqrt(var + BN_EPS) + be
        h = jnp.where(y >= 0.0, y, LRELU_SLOPE * y)
    w, b = layers[3]
    out = jnp.dot(h, w, precision=_HI) + b
    if use_tanh:
        out = jnp.tanh(out)
    return out


def reference_forward(atac, rna, raw, cfg_atac, cfg_rna):
    la = _ref_mlp4(atac, raw['atac_encoder'],
                   cfg_atac['use_batchnorm'], cfg_atac['use_tanh'])
    lr = _ref_mlp4(rna, raw['rna_encoder'],
                   cfg_rna['use_batchnorm'], cfg_rna['use_tanh'])
    w_f, b_f = raw['fusion']
    z = jnp.dot(jnp.concatenate([la, lr], axis=1), w_f, precision=_HI) + b_f
    ra = _ref_mlp4(la, raw['atac_decoder'], cfg_atac['use_batchnorm'], False)
    rr = _ref_mlp4(lr, raw['rna_decoder'], cfg_rna['use_batchnorm'], False)
    return ra, rr, z, la, lr


# -----------------------------------------------------------------------------
# Main
# -----------------------------------------------------------------------------

if __name__ == "__main__":
    # Small configs consistent with the module structure (4-layer MLPs,
    # batchnorm on, tanh off, 2-D latent).
    cfg_rna = {'in_features': 48, 'layers': [40, 32, 24, 2],
               'minibatch_size': 8, 'use_batchnorm': True, 'use_tanh': False}
    cfg_atac = {'in_features': 56, 'layers': [44, 36, 28, 2],
                'minibatch_size': 8, 'use_batchnorm': True, 'use_tanh': False}
    batch = 8

    all_dims = ([cfg_rna['in_features'], cfg_atac['in_features'], 2]
                + cfg_rna['layers'] + cfg_atac['layers'])
    P = _round_up_128(max(all_dims))   # 128: lane-dense internal width

    root = jax.random.PRNGKey(0)
    k_ae, k_re, k_f, k_ad, k_rd, k_xa, k_xr = jax.random.split(root, 7)

    enc_dims_atac = [cfg_atac['in_features']] + cfg_atac['layers']
    enc_dims_rna = [cfg_rna['in_features']] + cfg_rna['layers']
    dec_dims_atac = cfg_atac['layers'][::-1] + [cfg_atac['in_features']]
    dec_dims_rna = cfg_rna['layers'][::-1] + [cfg_rna['in_features']]

    raw_params = {
        'atac_encoder': init_mlp4_params(k_ae, enc_dims_atac),
        'rna_encoder': init_mlp4_params(k_re, enc_dims_rna),
        'atac_decoder': init_mlp4_params(k_ad, dec_dims_atac),
        'rna_decoder': init_mlp4_params(k_rd, dec_dims_rna),
        'fusion': _init_linear(
            k_f, cfg_rna['layers'][-1] + cfg_atac['layers'][-1], 2),
    }

    packed_params = {
        'atac_encoder': pack_mlp4(raw_params['atac_encoder'], P),
        'rna_encoder': pack_mlp4(raw_params['rna_encoder'], P),
        'atac_decoder': pack_mlp4(raw_params['atac_decoder'], P),
        'rna_decoder': pack_mlp4(raw_params['rna_decoder'], P),
        'fusion': pack_fusion(raw_params['fusion'][0], raw_params['fusion'][1],
                              cfg_atac['layers'][-1], P),
    }

    atac = jax.random.normal(k_xa, (batch, cfg_atac['in_features']), jnp.float32)
    rna = jax.random.normal(k_xr, (batch, cfg_rna['in_features']), jnp.float32)

    fwd = jax.jit(functools.partial(
        autoencoder_forward, cfg_atac=cfg_atac, cfg_rna=cfg_rna, feat_pad=P))

    outs = fwd(atac, rna, packed_params)
    jax.block_until_ready(outs)
    recon_atac, recon_rna, z, latent_atac, latent_rna = outs

    assert recon_atac.shape == (batch, cfg_atac['in_features'])
    assert recon_rna.shape == (batch, cfg_rna['in_features'])
    assert z.shape == (batch, 2)
    assert latent_atac.shape == (batch, cfg_atac['layers'][-1])
    assert latent_rna.shape == (batch, cfg_rna['layers'][-1])

    # Numerical check against a pure-JAX reference of the PyTorch forward.
    ref = reference_forward(atac, rna, raw_params, cfg_atac, cfg_rna)
    names = ['recon_atac', 'recon_rna', 'z', 'latent_atac', 'latent_rna']
    for name, got, want in zip(names, outs, ref):
        assert jnp.allclose(got, want, rtol=2e-3, atol=2e-3), name

    print("KERNEL_OK")
</pallas_src>

<mosaic_0001>
module attributes {stable_mosaic.version = 11 : i64} {
  func.func @_fused_autoencoder_kernel(%arg0: memref<8x128xf32, #tpu.memory_space<vmem>>, %arg1: memref<8x128xf32, #tpu.memory_space<vmem>>, %arg2: memref<4x128x128xf32, #tpu.memory_space<vmem>>, %arg3: memref<4x1x128xf32, #tpu.memory_space<vmem>>, %arg4: memref<3x1x128xf32, #tpu.memory_space<vmem>>, %arg5: memref<3x1x128xf32, #tpu.memory_space<vmem>>, %arg6: memref<4x128x128xf32, #tpu.memory_space<vmem>>, %arg7: memref<4x1x128xf32, #tpu.memory_space<vmem>>, %arg8: memref<3x1x128xf32, #tpu.memory_space<vmem>>, %arg9: memref<3x1x128xf32, #tpu.memory_space<vmem>>, %arg10: memref<4x128x128xf32, #tpu.memory_space<vmem>>, %arg11: memref<4x1x128xf32, #tpu.memory_space<vmem>>, %arg12: memref<3x1x128xf32, #tpu.memory_space<vmem>>, %arg13: memref<3x1x128xf32, #tpu.memory_space<vmem>>, %arg14: memref<4x128x128xf32, #tpu.memory_space<vmem>>, %arg15: memref<4x1x128xf32, #tpu.memory_space<vmem>>, %arg16: memref<3x1x128xf32, #tpu.memory_space<vmem>>, %arg17: memref<3x1x128xf32, #tpu.memory_space<vmem>>, %arg18: memref<128x128xf32, #tpu.memory_space<vmem>>, %arg19: memref<128x128xf32, #tpu.memory_space<vmem>>, %arg20: memref<1x128xf32, #tpu.memory_space<vmem>>, %arg21: memref<8x128xf32, #tpu.memory_space<vmem>>, %arg22: memref<8x128xf32, #tpu.memory_space<vmem>>, %arg23: memref<8x128xf32, #tpu.memory_space<vmem>>, %arg24: memref<8x128xf32, #tpu.memory_space<vmem>>, %arg25: memref<8x128xf32, #tpu.memory_space<vmem>>) attributes {dimension_semantics = [], scalar_prefetch = 0 : i64, scratch_operands = 0 : i64, tpu.core_type = #tpu.core_type<tc>} {
    %c0 = arith.constant 0 : index
    %c0_0 = arith.constant 0 : index
    %0 = vector.load %arg0[%c0, %c0_0] : memref<8x128xf32, #tpu.memory_space<vmem>>, vector<8x128xf32>
    %c0_1 = arith.constant 0 : index
    %c0_2 = arith.constant 0 : index
    %c0_3 = arith.constant 0 : index
    %1 = vector.load %arg2[%c0_1, %c0_2, %c0_3] : memref<4x128x128xf32, #tpu.memory_space<vmem>>, vector<1x128x128xf32>
    %2 = vector.shape_cast %1 : vector<1x128x128xf32> to vector<128x128xf32>
    %cst = arith.constant dense<0.000000e+00> : vector<8x128xf32>
    %3 = tpu.matmul %0, %2, %cst {dimension_numbers = #tpu.dot_dimension_numbers<[1], [0], [0], [1], [0, 0, 1, 1], [], []>} : vector<8x128xf32>, vector<128x128xf32>, vector<8x128xf32> -> vector<8x128xf32>
    %c0_4 = arith.constant 0 : index
    %c0_5 = arith.constant 0 : index
    %c0_6 = arith.constant 0 : index
    %4 = vector.load %arg3[%c0_4, %c0_5, %c0_6] : memref<4x1x128xf32, #tpu.memory_space<vmem>>, vector<1x1x128xf32>
    %5 = vector.shape_cast %4 : vector<1x1x128xf32> to vector<1x128xf32>
    %6 = vector.broadcast %5 : vector<1x128xf32> to vector<8x128xf32>
    %7 = arith.addf %3, %6 : vector<8x128xf32>
    %cst_7 = arith.constant dense<0.000000e+00> : vector<128xf32>
    %8 = vector.multi_reduction <add>, %7, %cst_7 [0] : vector<8x128xf32> to vector<128xf32>
    %9 = vector.shape_cast %8 : vector<128xf32> to vector<1x128xf32>
    %cst_8 = arith.constant 8.000000e+00 : f32
    %10 = vector.broadcast %cst_8 : f32 to vector<1x128xf32>
    %11 = arith.divf %9, %10 : vector<1x128xf32>
    %12 = vector.broadcast %11 : vector<1x128xf32> to vector<8x128xf32>
    %13 = arith.subf %7, %12 : vector<8x128xf32>
    %14 = arith.mulf %13, %13 : vector<8x128xf32>
    %cst_9 = arith.constant dense<0.000000e+00> : vector<128xf32>
    %15 = vector.multi_reduction <add>, %14, %cst_9 [0] : vector<8x128xf32> to vector<128xf32>
    %16 = vector.shape_cast %15 : vector<128xf32> to vector<1x128xf32>
    %cst_10 = arith.constant 8.000000e+00 : f32
    %17 = vector.broadcast %cst_10 : f32 to vector<1x128xf32>
    %18 = arith.divf %16, %17 : vector<1x128xf32>
    %c0_11 = arith.constant 0 : index
    %c0_12 = arith.constant 0 : index
    %c0_13 = arith.constant 0 : index
    %19 = vector.load %arg4[%c0_11, %c0_12, %c0_13] : memref<3x1x128xf32, #tpu.memory_space<vmem>>, vector<1x1x128xf32>
    %20 = vector.shape_cast %19 : vector<1x1x128xf32> to vector<1x128xf32>
    %cst_14 = arith.constant 9.99999974E-6 : f32
    %21 = vector.broadcast %cst_14 : f32 to vector<1x128xf32>
    %22 = arith.addf %18, %21 : vector<1x128xf32>
    %23 = math.rsqrt %22 : vector<1x128xf32>
    %24 = vector.broadcast %23 : vector<1x128xf32> to vector<8x128xf32>
    %25 = arith.mulf %13, %24 : vector<8x128xf32>
    %26 = vector.broadcast %20 : vector<1x128xf32> to vector<8x128xf32>
    %27 = arith.mulf %26, %25 : vector<8x128xf32>
    %c0_15 = arith.constant 0 : index
    %c0_16 = arith.constant 0 : index
    %c0_17 = arith.constant 0 : index
    %28 = vector.load %arg5[%c0_15, %c0_16, %c0_17] : memref<3x1x128xf32, #tpu.memory_space<vmem>>, vector<1x1x128xf32>
    %29 = vector.shape_cast %28 : vector<1x1x128xf32> to vector<1x128xf32>
    %30 = vector.broadcast %29 : vector<1x128xf32> to vector<8x128xf32>
    %31 = arith.addf %27, %30 : vector<8x128xf32>
    %cst_18 = arith.constant 0.000000e+00 : f32
    %32 = vector.broadcast %cst_18 : f32 to vector<8x128xf32>
    %33 = arith.cmpf oge, %31, %32 : vector<8x128xf32>
    %cst_19 = arith.constant 2.000000e-01 : f32
    %34 = vector.broadcast %cst_19 : f32 to vector<8x128xf32>
    %35 = arith.mulf %34, %31 : vector<8x128xf32>
    %36 = arith.select %33, %31, %35 : vector<8x128xi1>, vector<8x128xf32>
    %c1 = arith.constant 1 : index
    %c0_20 = arith.constant 0 : index
    %c0_21 = arith.constant 0 : index
    %37 = vector.load %arg2[%c1, %c0_20, %c0_21] : memref<4x128x128xf32, #tpu.memory_space<vmem>>, vector<1x128x128xf32>
    %38 = vector.shape_cast %37 : vector<1x128x128xf32> to vector<128x128xf32>
    %cst_22 = arith.constant dense<0.000000e+00> : vector<8x128xf32>
    %39 = tpu.matmul %36, %38, %cst_22 {dimension_numbers = #tpu.dot_dimension_numbers<[1], [0], [0], [1], [0, 0, 1, 1], [], []>} : vector<8x128xf32>, vector<128x128xf32>, vector<8x128xf32> -> vector<8x128xf32>
    %c1_23 = arith.constant 1 : index
    %c0_24 = arith.constant 0 : index
    %c0_25 = arith.constant 0 : index
    %40 = vector.load %arg3[%c1_23, %c0_24, %c0_25] : memref<4x1x128xf32, #tpu.memory_space<vmem>>, vector<1x1x128xf32>
    %41 = vector.shape_cast %40 : vector<1x1x128xf32> to vector<1x128xf32>
    %42 = vector.broadcast %41 : vector<1x128xf32> to vector<8x128xf32>
    %43 = arith.addf %39, %42 : vector<8x128xf32>
    %cst_26 = arith.constant dense<0.000000e+00> : vector<128xf32>
    %44 = vector.multi_reduction <add>, %43, %cst_26 [0] : vector<8x128xf32> to vector<128xf32>
    %45 = vector.shape_cast %44 : vector<128xf32> to vector<1x128xf32>
    %cst_27 = arith.constant 8.000000e+00 : f32
    %46 = vector.broadcast %cst_27 : f32 to vector<1x128xf32>
    %47 = arith.divf %45, %46 : vector<1x128xf32>
    %48 = vector.broadcast %47 : vector<1x128xf32> to vector<8x128xf32>
    %49 = arith.subf %43, %48 : vector<8x128xf32>
    %50 = arith.mulf %49, %49 : vector<8x128xf32>
    %cst_28 = arith.constant dense<0.000000e+00> : vector<128xf32>
    %51 = vector.multi_reduction <add>, %50, %cst_28 [0] : vector<8x128xf32> to vector<128xf32>
    %52 = vector.shape_cast %51 : vector<128xf32> to vector<1x128xf32>
    %cst_29 = arith.constant 8.000000e+00 : f32
    %53 = vector.broadcast %cst_29 : f32 to vector<1x128xf32>
    %54 = arith.divf %52, %53 : vector<1x128xf32>
    %c1_30 = arith.constant 1 : index
    %c0_31 = arith.constant 0 : index
    %c0_32 = arith.constant 0 : index
    %55 = vector.load %arg4[%c1_30, %c0_31, %c0_32] : memref<3x1x128xf32, #tpu.memory_space<vmem>>, vector<1x1x128xf32>
    %56 = vector.shape_cast %55 : vector<1x1x128xf32> to vector<1x128xf32>
    %cst_33 = arith.constant 9.99999974E-6 : f32
    %57 = vector.broadcast %cst_33 : f32 to vector<1x128xf32>
    %58 = arith.addf %54, %57 : vector<1x128xf32>
    %59 = math.rsqrt %58 : vector<1x128xf32>
    %60 = vector.broadcast %59 : vector<1x128xf32> to vector<8x128xf32>
    %61 = arith.mulf %49, %60 : vector<8x128xf32>
    %62 = vector.broadcast %56 : vector<1x128xf32> to vector<8x128xf32>
    %63 = arith.mulf %62, %61 : vector<8x128xf32>
    %c1_34 = arith.constant 1 : index
    %c0_35 = arith.constant 0 : index
    %c0_36 = arith.constant 0 : index
    %64 = vector.load %arg5[%c1_34, %c0_35, %c0_36] : memref<3x1x128xf32, #tpu.memory_space<vmem>>, vector<1x1x128xf32>
    %65 = vector.shape_cast %64 : vector<1x1x128xf32> to vector<1x128xf32>
    %66 = vector.broadcast %65 : vector<1x128xf32> to vector<8x128xf32>
    %67 = arith.addf %63, %66 : vector<8x128xf32>
    %cst_37 = arith.constant 0.000000e+00 : f32
    %68 = vector.broadcast %cst_37 : f32 to vector<8x128xf32>
    %69 = arith.cmpf oge, %67, %68 : vector<8x128xf32>
    %cst_38 = arith.constant 2.000000e-01 : f32
    %70 = vector.broadcast %cst_38 : f32 to vector<8x128xf32>
    %71 = arith.mulf %70, %67 : vector<8x128xf32>
    %72 = arith.select %69, %67, %71 : vector<8x128xi1>, vector<8x128xf32>
    %c2 = arith.constant 2 : index
    %c0_39 = arith.constant 0 : index
    %c0_40 = arith.constant 0 : index
    %73 = vector.load %arg2[%c2, %c0_39, %c0_40] : memref<4x128x128xf32, #tpu.memory_space<vmem>>, vector<1x128x128xf32>
    %74 = vector.shape_cast %73 : vector<1x128x128xf32> to vector<128x128xf32>
    %cst_41 = arith.constant dense<0.000000e+00> : vector<8x128xf32>
    %75 = tpu.matmul %72, %74, %cst_41 {dimension_numbers = #tpu.dot_dimension_numbers<[1], [0], [0], [1], [0, 0, 1, 1], [], []>} : vector<8x128xf32>, vector<128x128xf32>, vector<8x128xf32> -> vector<8x128xf32>
    %c2_42 = arith.constant 2 : index
    %c0_43 = arith.constant 0 : index
    %c0_44 = arith.constant 0 : index
    %76 = vector.load %arg3[%c2_42, %c0_43, %c0_44] : memref<4x1x128xf32, #tpu.memory_space<vmem>>, vector<1x1x128xf32>
    %77 = vector.shape_cast %76 : vector<1x1x128xf32> to vector<1x128xf32>
    %78 = vector.broadcast %77 : vector<1x128xf32> to vector<8x128xf32>
    %79 = arith.addf %75, %78 : vector<8x128xf32>
    %cst_45 = arith.constant dense<0.000000e+00> : vector<128xf32>
    %80 = vector.multi_reduction <add>, %79, %cst_45 [0] : vector<8x128xf32> to vector<128xf32>
    %81 = vector.shape_cast %80 : vector<128xf32> to vector<1x128xf32>
    %cst_46 = arith.constant 8.000000e+00 : f32
    %82 = vector.broadcast %cst_46 : f32 to vector<1x128xf32>
    %83 = arith.divf %81, %82 : vector<1x128xf32>
    %84 = vector.broadcast %83 : vector<1x128xf32> to vector<8x128xf32>
    %85 = arith.subf %79, %84 : vector<8x128xf32>
    %86 = arith.mulf %85, %85 : vector<8x128xf32>
    %cst_47 = arith.constant dense<0.000000e+00> : vector<128xf32>
    %87 = vector.multi_reduction <add>, %86, %cst_47 [0] : vector<8x128xf32> to vector<128xf32>
    %88 = vector.shape_cast %87 : vector<128xf32> to vector<1x128xf32>
    %cst_48 = arith.constant 8.000000e+00 : f32
    %89 = vector.broadcast %cst_48 : f32 to vector<1x128xf32>
    %90 = arith.divf %88, %89 : vector<1x128xf32>
    %c2_49 = arith.constant 2 : index
    %c0_50 = arith.constant 0 : index
    %c0_51 = arith.constant 0 : index
    %91 = vector.load %arg4[%c2_49, %c0_50, %c0_51] : memref<3x1x128xf32, #tpu.memory_space<vmem>>, vector<1x1x128xf32>
    %92 = vector.shape_cast %91 : vector<1x1x128xf32> to vector<1x128xf32>
    %cst_52 = arith.constant 9.99999974E-6 : f32
    %93 = vector.broadcast %cst_52 : f32 to vector<1x128xf32>
    %94 = arith.addf %90, %93 : vector<1x128xf32>
    %95 = math.rsqrt %94 : vector<1x128xf32>
    %96 = vector.broadcast %95 : vector<1x128xf32> to vector<8x128xf32>
    %97 = arith.mulf %85, %96 : vector<8x128xf32>
    %98 = vector.broadcast %92 : vector<1x128xf32> to vector<8x128xf32>
    %99 = arith.mulf %98, %97 : vector<8x128xf32>
    %c2_53 = arith.constant 2 : index
    %c0_54 = arith.constant 0 : index
    %c0_55 = arith.constant 0 : index
    %100 = vector.load %arg5[%c2_53, %c0_54, %c0_55] : memref<3x1x128xf32, #tpu.memory_space<vmem>>, vector<1x1x128xf32>
    %101 = vector.shape_cast %100 : vector<1x1x128xf32> to vector<1x128xf32>
    %102 = vector.broadcast %101 : vector<1x128xf32> to vector<8x128xf32>
    %103 = arith.addf %99, %102 : vector<8x128xf32>
    %cst_56 = arith.constant 0.000000e+00 : f32
    %104 = vector.broadcast %cst_56 : f32 to vector<8x128xf32>
    %105 = arith.cmpf oge, %103, %104 : vector<8x128xf32>
    %cst_57 = arith.constant 2.000000e-01 : f32
    %106 = vector.broadcast %cst_57 : f32 to vector<8x128xf32>
    %107 = arith.mulf %106, %103 : vector<8x128xf32>
    %108 = arith.select %105, %103, %107 : vector<8x128xi1>, vector<8x128xf32>
    %c3 = arith.constant 3 : index
    %c0_58 = arith.constant 0 : index
    %c0_59 = arith.constant 0 : index
    %109 = vector.load %arg2[%c3, %c0_58, %c0_59] : memref<4x128x128xf32, #tpu.memory_space<vmem>>, vector<1x128x128xf32>
    %110 = vector.shape_cast %109 : vector<1x128x128xf32> to vector<128x128xf32>
    %cst_60 = arith.constant dense<0.000000e+00> : vector<8x128xf32>
    %111 = tpu.matmul %108, %110, %cst_60 {dimension_numbers = #tpu.dot_dimension_numbers<[1], [0], [0], [1], [0, 0, 1, 1], [], []>} : vector<8x128xf32>, vector<128x128xf32>, vector<8x128xf32> -> vector<8x128xf32>
    %c3_61 = arith.constant 3 : index
    %c0_62 = arith.constant 0 : index
    %c0_63 = arith.constant 0 : index
    %112 = vector.load %arg3[%c3_61, %c0_62, %c0_63] : memref<4x1x128xf32, #tpu.memory_space<vmem>>, vector<1x1x128xf32>
    %113 = vector.shape_cast %112 : vector<1x1x128xf32> to vector<1x128xf32>
    %114 = vector.broadcast %113 : vector<1x128xf32> to vector<8x128xf32>
    %115 = arith.addf %111, %114 : vector<8x128xf32>
    %c0_64 = arith.constant 0 : index
    %c0_65 = arith.constant 0 : index
    %116 = vector.load %arg1[%c0_64, %c0_65] : memref<8x128xf32, #tpu.memory_space<vmem>>, vector<8x128xf32>
    %c0_66 = arith.constant 0 : index
    %c0_67 = arith.constant 0 : index
    %c0_68 = arith.constant 0 : index
    %117 = vector.load %arg6[%c0_66, %c0_67, %c0_68] : memref<4x128x128xf32, #tpu.memory_space<vmem>>, vector<1x128x128xf32>
    %118 = vector.shape_cast %117 : vector<1x128x128xf32> to vector<128x128xf32>
    %cst_69 = arith.constant dense<0.000000e+00> : vector<8x128xf32>
    %119 = tpu.matmul %116, %118, %cst_69 {dimension_numbers = #tpu.dot_dimension_numbers<[1], [0], [0], [1], [0, 0, 1, 1], [], []>} : vector<8x128xf32>, vector<128x128xf32>, vector<8x128xf32> -> vector<8x128xf32>
    %c0_70 = arith.constant 0 : index
    %c0_71 = arith.constant 0 : index
    %c0_72 = arith.constant 0 : index
    %120 = vector.load %arg7[%c0_70, %c0_71, %c0_72] : memref<4x1x128xf32, #tpu.memory_space<vmem>>, vector<1x1x128xf32>
    %121 = vector.shape_cast %120 : vector<1x1x128xf32> to vector<1x128xf32>
    %122 = vector.broadcast %121 : vector<1x128xf32> to vector<8x128xf32>
    %123 = arith.addf %119, %122 : vector<8x128xf32>
    %cst_73 = arith.constant dense<0.000000e+00> : vector<128xf32>
    %124 = vector.multi_reduction <add>, %123, %cst_73 [0] : vector<8x128xf32> to vector<128xf32>
    %125 = vector.shape_cast %124 : vector<128xf32> to vector<1x128xf32>
    %cst_74 = arith.constant 8.000000e+00 : f32
    %126 = vector.broadcast %cst_74 : f32 to vector<1x128xf32>
    %127 = arith.divf %125, %126 : vector<1x128xf32>
    %128 = vector.broadcast %127 : vector<1x128xf32> to vector<8x128xf32>
    %129 = arith.subf %123, %128 : vector<8x128xf32>
    %130 = arith.mulf %129, %129 : vector<8x128xf32>
    %cst_75 = arith.constant dense<0.000000e+00> : vector<128xf32>
    %131 = vector.multi_reduction <add>, %130, %cst_75 [0] : vector<8x128xf32> to vector<128xf32>
    %132 = vector.shape_cast %131 : vector<128xf32> to vector<1x128xf32>
    %cst_76 = arith.constant 8.000000e+00 : f32
    %133 = vector.broadcast %cst_76 : f32 to vector<1x128xf32>
    %134 = arith.divf %132, %133 : vector<1x128xf32>
    %c0_77 = arith.constant 0 : index
    %c0_78 = arith.constant 0 : index
    %c0_79 = arith.constant 0 : index
    %135 = vector.load %arg8[%c0_77, %c0_78, %c0_79] : memref<3x1x128xf32, #tpu.memory_space<vmem>>, vector<1x1x128xf32>
    %136 = vector.shape_cast %135 : vector<1x1x128xf32> to vector<1x128xf32>
    %cst_80 = arith.constant 9.99999974E-6 : f32
    %137 = vector.broadcast %cst_80 : f32 to vector<1x128xf32>
    %138 = arith.addf %134, %137 : vector<1x128xf32>
    %139 = math.rsqrt %138 : vector<1x128xf32>
    %140 = vector.broadcast %139 : vector<1x128xf32> to vector<8x128xf32>
    %141 = arith.mulf %129, %140 : vector<8x128xf32>
    %142 = vector.broadcast %136 : vector<1x128xf32> to vector<8x128xf32>
    %143 = arith.mulf %142, %141 : vector<8x128xf32>
    %c0_81 = arith.constant 0 : index
    %c0_82 = arith.constant 0 : index
    %c0_83 = arith.constant 0 : index
    %144 = vector.load %arg9[%c0_81, %c0_82, %c0_83] : memref<3x1x128xf32, #tpu.memory_space<vmem>>, vector<1x1x128xf32>
    %145 = vector.shape_cast %144 : vector<1x1x128xf32> to vector<1x128xf32>
    %146 = vector.broadcast %145 : vector<1x128xf32> to vector<8x128xf32>
    %147 = arith.addf %143, %146 : vector<8x128xf32>
    %cst_84 = arith.constant 0.000000e+00 : f32
    %148 = vector.broadcast %cst_84 : f32 to vector<8x128xf32>
    %149 = arith.cmpf oge, %147, %148 : vector<8x128xf32>
    %cst_85 = arith.constant 2.000000e-01 : f32
    %150 = vector.broadcast %cst_85 : f32 to vector<8x128xf32>
    %151 = arith.mulf %150, %147 : vector<8x128xf32>
    %152 = arith.select %149, %147, %151 : vector<8x128xi1>, vector<8x128xf32>
    %c1_86 = arith.constant 1 : index
    %c0_87 = arith.constant 0 : index
    %c0_88 = arith.constant 0 : index
    %153 = vector.load %arg6[%c1_86, %c0_87, %c0_88] : memref<4x128x128xf32, #tpu.memory_space<vmem>>, vector<1x128x128xf32>
    %154 = vector.shape_cast %153 : vector<1x128x128xf32> to vector<128x128xf32>
    %cst_89 = arith.constant dense<0.000000e+00> : vector<8x128xf32>
    %155 = tpu.matmul %152, %154, %cst_89 {dimension_numbers = #tpu.dot_dimension_numbers<[1], [0], [0], [1], [0, 0, 1, 1], [], []>} : vector<8x128xf32>, vector<128x128xf32>, vector<8x128xf32> -> vector<8x128xf32>
    %c1_90 = arith.constant 1 : index
    %c0_91 = arith.constant 0 : index
    %c0_92 = arith.constant 0 : index
    %156 = vector.load %arg7[%c1_90, %c0_91, %c0_92] : memref<4x1x128xf32, #tpu.memory_space<vmem>>, vector<1x1x128xf32>
    %157 = vector.shape_cast %156 : vector<1x1x128xf32> to vector<1x128xf32>
    %158 = vector.broadcast %157 : vector<1x128xf32> to vector<8x128xf32>
    %159 = arith.addf %155, %158 : vector<8x128xf32>
    %cst_93 = arith.constant dense<0.000000e+00> : vector<128xf32>
    %160 = vector.multi_reduction <add>, %159, %cst_93 [0] : vector<8x128xf32> to vector<128xf32>
    %161 = vector.shape_cast %160 : vector<128xf32> to vector<1x128xf32>
    %cst_94 = arith.constant 8.000000e+00 : f32
    %162 = vector.broadcast %cst_94 : f32 to vector<1x128xf32>
    %163 = arith.divf %161, %162 : vector<1x128xf32>
    %164 = vector.broadcast %163 : vector<1x128xf32> to vector<8x128xf32>
    %165 = arith.subf %159, %164 : vector<8x128xf32>
    %166 = arith.mulf %165, %165 : vector<8x128xf32>
    %cst_95 = arith.constant dense<0.000000e+00> : vector<128xf32>
    %167 = vector.multi_reduction <add>, %166, %cst_95 [0] : vector<8x128xf32> to vector<128xf32>
    %168 = vector.shape_cast %167 : vector<128xf32> to vector<1x128xf32>
    %cst_96 = arith.constant 8.000000e+00 : f32
    %169 = vector.broadcast %cst_96 : f32 to vector<1x128xf32>
    %170 = arith.divf %168, %169 : vector<1x128xf32>
    %c1_97 = arith.constant 1 : index
    %c0_98 = arith.constant 0 : index
    %c0_99 = arith.constant 0 : index
    %171 = vector.load %arg8[%c1_97, %c0_98, %c0_99] : memref<3x1x128xf32, #tpu.memory_space<vmem>>, vector<1x1x128xf32>
    %172 = vector.shape_cast %171 : vector<1x1x128xf32> to vector<1x128xf32>
    %cst_100 = arith.constant 9.99999974E-6 : f32
    %173 = vector.broadcast %cst_100 : f32 to vector<1x128xf32>
    %174 = arith.addf %170, %173 : vector<1x128xf32>
    %175 = math.rsqrt %174 : vector<1x128xf32>
    %176 = vector.broadcast %175 : vector<1x128xf32> to vector<8x128xf32>
    %177 = arith.mulf %165, %176 : vector<8x128xf32>
    %178 = vector.broadcast %172 : vector<1x128xf32> to vector<8x128xf32>
    %179 = arith.mulf %178, %177 : vector<8x128xf32>
    %c1_101 = arith.constant 1 : index
    %c0_102 = arith.constant 0 : index
    %c0_103 = arith.constant 0 : index
    %180 = vector.load %arg9[%c1_101, %c0_102, %c0_103] : memref<3x1x128xf32, #tpu.memory_space<vmem>>, vector<1x1x128xf32>
    %181 = vector.shape_cast %180 : vector<1x1x128xf32> to vector<1x128xf32>
    %182 = vector.broadcast %181 : vector<1x128xf32> to vector<8x128xf32>
    %183 = arith.addf %179, %182 : vector<8x128xf32>
    %cst_104 = arith.constant 0.000000e+00 : f32
    %184 = vector.broadcast %cst_104 : f32 to vector<8x128xf32>
    %185 = arith.cmpf oge, %183, %184 : vector<8x128xf32>
    %cst_105 = arith.constant 2.000000e-01 : f32
    %186 = vector.broadcast %cst_105 : f32 to vector<8x128xf32>
    %187 = arith.mulf %186, %183 : vector<8x128xf32>
    %188 = arith.select %185, %183, %187 : vector<8x128xi1>, vector<8x128xf32>
    %c2_106 = arith.constant 2 : index
    %c0_107 = arith.constant 0 : index
    %c0_108 = arith.constant 0 : index
    %189 = vector.load %arg6[%c2_106, %c0_107, %c0_108] : memref<4x128x128xf32, #tpu.memory_space<vmem>>, vector<1x128x128xf32>
    %190 = vector.shape_cast %189 : vector<1x128x128xf32> to vector<128x128xf32>
    %cst_109 = arith.constant dense<0.000000e+00> : vector<8x128xf32>
    %191 = tpu.matmul %188, %190, %cst_109 {dimension_numbers = #tpu.dot_dimension_numbers<[1], [0], [0], [1], [0, 0, 1, 1], [], []>} : vector<8x128xf32>, vector<128x128xf32>, vector<8x128xf32> -> vector<8x128xf32>
    %c2_110 = arith.constant 2 : index
    %c0_111 = arith.constant 0 : index
    %c0_112 = arith.constant 0 : index
    %192 = vector.load %arg7[%c2_110, %c0_111, %c0_112] : memref<4x1x128xf32, #tpu.memory_space<vmem>>, vector<1x1x128xf32>
    %193 = vector.shape_cast %192 : vector<1x1x128xf32> to vector<1x128xf32>
    %194 = vector.broadcast %193 : vector<1x128xf32> to vector<8x128xf32>
    %195 = arith.addf %191, %194 : vector<8x128xf32>
    %cst_113 = arith.constant dense<0.000000e+00> : vector<128xf32>
    %196 = vector.multi_reduction <add>, %195, %cst_113 [0] : vector<8x128xf32> to vector<128xf32>
    %197 = vector.shape_cast %196 : vector<128xf32> to vector<1x128xf32>
    %cst_114 = arith.constant 8.000000e+00 : f32
    %198 = vector.broadcast %cst_114 : f32 to vector<1x128xf32>
    %199 = arith.divf %197, %198 : vector<1x128xf32>
    %200 = vector.broadcast %199 : vector<1x128xf32> to vector<8x128xf32>
    %201 = arith.subf %195, %200 : vector<8x128xf32>
    %202 = arith.mulf %201, %201 : vector<8x128xf32>
    %cst_115 = arith.constant dense<0.000000e+00> : vector<128xf32>
    %203 = vector.multi_reduction <add>, %202, %cst_115 [0] : vector<8x128xf32> to vector<128xf32>
    %204 = vector.shape_cast %203 : vector<128xf32> to vector<1x128xf32>
    %cst_116 = arith.constant 8.000000e+00 : f32
    %205 = vector.broadcast %cst_116 : f32 to vector<1x128xf32>
    %206 = arith.divf %204, %205 : vector<1x128xf32>
    %c2_117 = arith.constant 2 : index
    %c0_118 = arith.constant 0 : index
    %c0_119 = arith.constant 0 : index
    %207 = vector.load %arg8[%c2_117, %c0_118, %c0_119] : memref<3x1x128xf32, #tpu.memory_space<vmem>>, vector<1x1x128xf32>
    %208 = vector.shape_cast %207 : vector<1x1x128xf32> to vector<1x128xf32>
    %cst_120 = arith.constant 9.99999974E-6 : f32
    %209 = vector.broadcast %cst_120 : f32 to vector<1x128xf32>
    %210 = arith.addf %206, %209 : vector<1x128xf32>
    %211 = math.rsqrt %210 : vector<1x128xf32>
    %212 = vector.broadcast %211 : vector<1x128xf32> to vector<8x128xf32>
    %213 = arith.mulf %201, %212 : vector<8x128xf32>
    %214 = vector.broadcast %208 : vector<1x128xf32> to vector<8x128xf32>
    %215 = arith.mulf %214, %213 : vector<8x128xf32>
    %c2_121 = arith.constant 2 : index
    %c0_122 = arith.constant 0 : index
    %c0_123 = arith.constant 0 : index
    %216 = vector.load %arg9[%c2_121, %c0_122, %c0_123] : memref<3x1x128xf32, #tpu.memory_space<vmem>>, vector<1x1x128xf32>
    %217 = vector.shape_cast %216 : vector<1x1x128xf32> to vector<1x128xf32>
    %218 = vector.broadcast %217 : vector<1x128xf32> to vector<8x128xf32>
    %219 = arith.addf %215, %218 : vector<8x128xf32>
    %cst_124 = arith.constant 0.000000e+00 : f32
    %220 = vector.broadcast %cst_124 : f32 to vector<8x128xf32>
    %221 = arith.cmpf oge, %219, %220 : vector<8x128xf32>
    %cst_125 = arith.constant 2.000000e-01 : f32
    %222 = vector.broadcast %cst_125 : f32 to vector<8x128xf32>
    %223 = arith.mulf %222, %219 : vector<8x128xf32>
    %224 = arith.select %221, %219, %223 : vector<8x128xi1>, vector<8x128xf32>
    %c3_126 = arith.constant 3 : index
    %c0_127 = arith.constant 0 : index
    %c0_128 = arith.constant 0 : index
    %225 = vector.load %arg6[%c3_126, %c0_127, %c0_128] : memref<4x128x128xf32, #tpu.memory_space<vmem>>, vector<1x128x128xf32>
    %226 = vector.shape_cast %225 : vector<1x128x128xf32> to vector<128x128xf32>
    %cst_129 = arith.constant dense<0.000000e+00> : vector<8x128xf32>
    %227 = tpu.matmul %224, %226, %cst_129 {dimension_numbers = #tpu.dot_dimension_numbers<[1], [0], [0], [1], [0, 0, 1, 1], [], []>} : vector<8x128xf32>, vector<128x128xf32>, vector<8x128xf32> -> vector<8x128xf32>
    %c3_130 = arith.constant 3 : index
    %c0_131 = arith.constant 0 : index
    %c0_132 = arith.constant 0 : index
    %228 = vector.load %arg7[%c3_130, %c0_131, %c0_132] : memref<4x1x128xf32, #tpu.memory_space<vmem>>, vector<1x1x128xf32>
    %229 = vector.shape_cast %228 : vector<1x1x128xf32> to vector<1x128xf32>
    %230 = vector.broadcast %229 : vector<1x128xf32> to vector<8x128xf32>
    %231 = arith.addf %227, %230 : vector<8x128xf32>
    %c0_133 = arith.constant 0 : index
    %c0_134 = arith.constant 0 : index
    %232 = vector.load %arg24[%c0_133, %c0_134] : memref<8x128xf32, #tpu.memory_space<vmem>>, vector<8x128xf32>
    tpu.vector_store %arg24[%c0_133, %c0_134], %115 {strides = array<i32>} : memref<8x128xf32, #tpu.memory_space<vmem>>, vector<8x128xf32>,
    %c0_135 = arith.constant 0 : index
    %c0_136 = arith.constant 0 : index
    %233 = vector.load %arg25[%c0_135, %c0_136] : memref<8x128xf32, #tpu.memory_space<vmem>>, vector<8x128xf32>
    tpu.vector_store %arg25[%c0_135, %c0_136], %231 {strides = array<i32>} : memref<8x128xf32, #tpu.memory_space<vmem>>, vector<8x128xf32>,
    %c0_137 = arith.constant 0 : index
    %c0_138 = arith.constant 0 : index
    %234 = vector.load %arg18[%c0_137, %c0_138] : memref<128x128xf32, #tpu.memory_space<vmem>>, vector<128x128xf32>
    %cst_139 = arith.constant dense<0.000000e+00> : vector<8x128xf32>
    %235 = tpu.matmul %115, %234, %cst_139 {dimension_numbers = #tpu.dot_dimension_numbers<[1], [0], [0], [1], [0, 0, 1, 1], [], []>} : vector<8x128xf32>, vector<128x128xf32>, vector<8x128xf32> -> vector<8x128xf32>
    %c0_140 = arith.constant 0 : index
    %c0_141 = arith.constant 0 : index
    %236 = vector.load %arg19[%c0_140, %c0_141] : memref<128x128xf32, #tpu.memory_space<vmem>>, vector<128x128xf32>
    %cst_142 = arith.constant dense<0.000000e+00> : vector<8x128xf32>
    %237 = tpu.matmul %231, %236, %cst_142 {dimension_numbers = #tpu.dot_dimension_numbers<[1], [0], [0], [1], [0, 0, 1, 1], [], []>} : vector<8x128xf32>, vector<128x128xf32>, vector<8x128xf32> -> vector<8x128xf32>
    %238 = arith.addf %235, %237 : vector<8x128xf32>
    %c0_143 = arith.constant 0 : index
    %c0_144 = arith.constant 0 : index
    %239 = vector.load %arg20[%c0_143, %c0_144] : memref<1x128xf32, #tpu.memory_space<vmem>>, vector<1x128xf32>
    %240 = vector.broadcast %239 : vector<1x128xf32> to vector<8x128xf32>
    %241 = arith.addf %238, %240 : vector<8x128xf32>
    %c0_145 = arith.constant 0 : index
    %c0_146 = arith.constant 0 : index
    %242 = vector.load %arg23[%c0_145, %c0_146] : memref<8x128xf32, #tpu.memory_space<vmem>>, vector<8x128xf32>
    tpu.vector_store %arg23[%c0_145, %c0_146], %241 {strides = array<i32>} : memref<8x128xf32, #tpu.memory_space<vmem>>, vector<8x128xf32>,
    %c0_147 = arith.constant 0 : index
    %c0_148 = arith.constant 0 : index
    %c0_149 = arith.constant 0 : index
    %243 = vector.load %arg10[%c0_147, %c0_148, %c0_149] : memref<4x128x128xf32, #tpu.memory_space<vmem>>, vector<1x128x128xf32>
    %244 = vector.shape_cast %243 : vector<1x128x128xf32> to vector<128x128xf32>
    %cst_150 = arith.constant dense<0.000000e+00> : vector<8x128xf32>
    %245 = tpu.matmul %115, %244, %cst_150 {dimension_numbers = #tpu.dot_dimension_numbers<[1], [0], [0], [1], [0, 0, 1, 1], [], []>} : vector<8x128xf32>, vector<128x128xf32>, vector<8x128xf32> -> vector<8x128xf32>
    %c0_151 = arith.constant 0 : index
    %c0_152 = arith.constant 0 : index
    %c0_153 = arith.constant 0 : index
    %246 = vector.load %arg11[%c0_151, %c0_152, %c0_153] : memref<4x1x128xf32, #tpu.memory_space<vmem>>, vector<1x1x128xf32>
    %247 = vector.shape_cast %246 : vector<1x1x128xf32> to vector<1x128xf32>
    %248 = vector.broadcast %247 : vector<1x128xf32> to vector<8x128xf32>
    %249 = arith.addf %245, %248 : vector<8x128xf32>
    %cst_154 = arith.constant dense<0.000000e+00> : vector<128xf32>
    %250 = vector.multi_reduction <add>, %249, %cst_154 [0] : vector<8x128xf32> to vector<128xf32>
    %251 = vector.shape_cast %250 : vector<128xf32> to vector<1x128xf32>
    %cst_155 = arith.constant 8.000000e+00 : f32
    %252 = vector.broadcast %cst_155 : f32 to vector<1x128xf32>
    %253 = arith.divf %251, %252 : vector<1x128xf32>
    %254 = vector.broadcast %253 : vector<1x128xf32> to vector<8x128xf32>
    %255 = arith.subf %249, %254 : vector<8x128xf32>
    %256 = arith.mulf %255, %255 : vector<8x128xf32>
    %cst_156 = arith.constant dense<0.000000e+00> : vector<128xf32>
    %257 = vector.multi_reduction <add>, %256, %cst_156 [0] : vector<8x128xf32> to vector<128xf32>
    %258 = vector.shape_cast %257 : vector<128xf32> to vector<1x128xf32>
    %cst_157 = arith.constant 8.000000e+00 : f32
    %259 = vector.broadcast %cst_157 : f32 to vector<1x128xf32>
    %260 = arith.divf %258, %259 : vector<1x128xf32>
    %c0_158 = arith.constant 0 : index
    %c0_159 = arith.constant 0 : index
    %c0_160 = arith.constant 0 : index
    %261 = vector.load %arg12[%c0_158, %c0_159, %c0_160] : memref<3x1x128xf32, #tpu.memory_space<vmem>>, vector<1x1x128xf32>
    %262 = vector.shape_cast %261 : vector<1x1x128xf32> to vector<1x128xf32>
    %cst_161 = arith.constant 9.99999974E-6 : f32
    %263 = vector.broadcast %cst_161 : f32 to vector<1x128xf32>
    %264 = arith.addf %260, %263 : vector<1x128xf32>
    %265 = math.rsqrt %264 : vector<1x128xf32>
    %266 = vector.broadcast %265 : vector<1x128xf32> to vector<8x128xf32>
    %267 = arith.mulf %255, %266 : vector<8x128xf32>
    %268 = vector.broadcast %262 : vector<1x128xf32> to vector<8x128xf32>
    %269 = arith.mulf %268, %267 : vector<8x128xf32>
    %c0_162 = arith.constant 0 : index
    %c0_163 = arith.constant 0 : index
    %c0_164 = arith.constant 0 : index
    %270 = vector.load %arg13[%c0_162, %c0_163, %c0_164] : memref<3x1x128xf32, #tpu.memory_space<vmem>>, vector<1x1x128xf32>
    %271 = vector.shape_cast %270 : vector<1x1x128xf32> to vector<1x128xf32>
    %272 = vector.broadcast %271 : vector<1x128xf32> to vector<8x128xf32>
    %273 = arith.addf %269, %272 : vector<8x128xf32>
    %cst_165 = arith.constant 0.000000e+00 : f32
    %274 = vector.broadcast %cst_165 : f32 to vector<8x128xf32>
    %275 = arith.cmpf oge, %273, %274 : vector<8x128xf32>
    %cst_166 = arith.constant 2.000000e-01 : f32
    %276 = vector.broadcast %cst_166 : f32 to vector<8x128xf32>
    %277 = arith.mulf %276, %273 : vector<8x128xf32>
    %278 = arith.select %275, %273, %277 : vector<8x128xi1>, vector<8x128xf32>
    %c1_167 = arith.constant 1 : index
    %c0_168 = arith.constant 0 : index
    %c0_169 = arith.constant 0 : index
    %279 = vector.load %arg10[%c1_167, %c0_168, %c0_169] : memref<4x128x128xf32, #tpu.memory_space<vmem>>, vector<1x128x128xf32>
    %280 = vector.shape_cast %279 : vector<1x128x128xf32> to vector<128x128xf32>
    %cst_170 = arith.constant dense<0.000000e+00> : vector<8x128xf32>
    %281 = tpu.matmul %278, %280, %cst_170 {dimension_numbers = #tpu.dot_dimension_numbers<[1], [0], [0], [1], [0, 0, 1, 1], [], []>} : vector<8x128xf32>, vector<128x128xf32>, vector<8x128xf32> -> vector<8x128xf32>
    %c1_171 = arith.constant 1 : index
    %c0_172 = arith.constant 0 : index
    %c0_173 = arith.constant 0 : index
    %282 = vector.load %arg11[%c1_171, %c0_172, %c0_173] : memref<4x1x128xf32, #tpu.memory_space<vmem>>, vector<1x1x128xf32>
    %283 = vector.shape_cast %282 : vector<1x1x128xf32> to vector<1x128xf32>
    %284 = vector.broadcast %283 : vector<1x128xf32> to vector<8x128xf32>
    %285 = arith.addf %281, %284 : vector<8x128xf32>
    %cst_174 = arith.constant dense<0.000000e+00> : vector<128xf32>
    %286 = vector.multi_reduction <add>, %285, %cst_174 [0] : vector<8x128xf32> to vector<128xf32>
    %287 = vector.shape_cast %286 : vector<128xf32> to vector<1x128xf32>
    %cst_175 = arith.constant 8.000000e+00 : f32
    %288 = vector.broadcast %cst_175 : f32 to vector<1x128xf32>
    %289 = arith.divf %287, %288 : vector<1x128xf32>
    %290 = vector.broadcast %289 : vector<1x128xf32> to vector<8x128xf32>
    %291 = arith.subf %285, %290 : vector<8x128xf32>
    %292 = arith.mulf %291, %291 : vector<8x128xf32>
    %cst_176 = arith.constant dense<0.000000e+00> : vector<128xf32>
    %293 = vector.multi_reduction <add>, %292, %cst_176 [0] : vector<8x128xf32> to vector<128xf32>
    %294 = vector.shape_cast %293 : vector<128xf32> to vector<1x128xf32>
    %cst_177 = arith.constant 8.000000e+00 : f32
    %295 = vector.broadcast %cst_177 : f32 to vector<1x128xf32>
    %296 = arith.divf %294, %295 : vector<1x128xf32>
    %c1_178 = arith.constant 1 : index
    %c0_179 = arith.constant 0 : index
    %c0_180 = arith.constant 0 : index
    %297 = vector.load %arg12[%c1_178, %c0_179, %c0_180] : memref<3x1x128xf32, #tpu.memory_space<vmem>>, vector<1x1x128xf32>
    %298 = vector.shape_cast %297 : vector<1x1x128xf32> to vector<1x128xf32>
    %cst_181 = arith.constant 9.99999974E-6 : f32
    %299 = vector.broadcast %cst_181 : f32 to vector<1x128xf32>
    %300 = arith.addf %296, %299 : vector<1x128xf32>
    %301 = math.rsqrt %300 : vector<1x128xf32>
    %302 = vector.broadcast %301 : vector<1x128xf32> to vector<8x128xf32>
    %303 = arith.mulf %291, %302 : vector<8x128xf32>
    %304 = vector.broadcast %298 : vector<1x128xf32> to vector<8x128xf32>
    %305 = arith.mulf %304, %303 : vector<8x128xf32>
    %c1_182 = arith.constant 1 : index
    %c0_183 = arith.constant 0 : index
    %c0_184 = arith.constant 0 : index
    %306 = vector.load %arg13[%c1_182, %c0_183, %c0_184] : memref<3x1x128xf32, #tpu.memory_space<vmem>>, vector<1x1x128xf32>
    %307 = vector.shape_cast %306 : vector<1x1x128xf32> to vector<1x128xf32>
    %308 = vector.broadcast %307 : vector<1x128xf32> to vector<8x128xf32>
    %309 = arith.addf %305, %308 : vector<8x128xf32>
    %cst_185 = arith.constant 0.000000e+00 : f32
    %310 = vector.broadcast %cst_185 : f32 to vector<8x128xf32>
    %311 = arith.cmpf oge, %309, %310 : vector<8x128xf32>
    %cst_186 = arith.constant 2.000000e-01 : f32
    %312 = vector.broadcast %cst_186 : f32 to vector<8x128xf32>
    %313 = arith.mulf %312, %309 : vector<8x128xf32>
    %314 = arith.select %311, %309, %313 : vector<8x128xi1>, vector<8x128xf32>
    %c2_187 = arith.constant 2 : index
    %c0_188 = arith.constant 0 : index
    %c0_189 = arith.constant 0 : index
    %315 = vector.load %arg10[%c2_187, %c0_188, %c0_189] : memref<4x128x128xf32, #tpu.memory_space<vmem>>, vector<1x128x128xf32>
    %316 = vector.shape_cast %315 : vector<1x128x128xf32> to vector<128x128xf32>
    %cst_190 = arith.constant dense<0.000000e+00> : vector<8x128xf32>
    %317 = tpu.matmul %314, %316, %cst_190 {dimension_numbers = #tpu.dot_dimension_numbers<[1], [0], [0], [1], [0, 0, 1, 1], [], []>} : vector<8x128xf32>, vector<128x128xf32>, vector<8x128xf32> -> vector<8x128xf32>
    %c2_191 = arith.constant 2 : index
    %c0_192 = arith.constant 0 : index
    %c0_193 = arith.constant 0 : index
    %318 = vector.load %arg11[%c2_191, %c0_192, %c0_193] : memref<4x1x128xf32, #tpu.memory_space<vmem>>, vector<1x1x128xf32>
    %319 = vector.shape_cast %318 : vector<1x1x128xf32> to vector<1x128xf32>
    %320 = vector.broadcast %319 : vector<1x128xf32> to vector<8x128xf32>
    %321 = arith.addf %317, %320 : vector<8x128xf32>
    %cst_194 = arith.constant dense<0.000000e+00> : vector<128xf32>
    %322 = vector.multi_reduction <add>, %321, %cst_194 [0] : vector<8x128xf32> to vector<128xf32>
    %323 = vector.shape_cast %322 : vector<128xf32> to vector<1x128xf32>
    %cst_195 = arith.constant 8.000000e+00 : f32
    %324 = vector.broadcast %cst_195 : f32 to vector<1x128xf32>
    %325 = arith.divf %323, %324 : vector<1x128xf32>
    %326 = vector.broadcast %325 : vector<1x128xf32> to vector<8x128xf32>
    %327 = arith.subf %321, %326 : vector<8x128xf32>
    %328 = arith.mulf %327, %327 : vector<8x128xf32>
    %cst_196 = arith.constant dense<0.000000e+00> : vector<128xf32>
    %329 = vector.multi_reduction <add>, %328, %cst_196 [0] : vector<8x128xf32> to vector<128xf32>
    %330 = vector.shape_cast %329 : vector<128xf32> to vector<1x128xf32>
    %cst_197 = arith.constant 8.000000e+00 : f32
    %331 = vector.broadcast %cst_197 : f32 to vector<1x128xf32>
    %332 = arith.divf %330, %331 : vector<1x128xf32>
    %c2_198 = arith.constant 2 : index
    %c0_199 = arith.constant 0 : index
    %c0_200 = arith.constant 0 : index
    %333 = vector.load %arg12[%c2_198, %c0_199, %c0_200] : memref<3x1x128xf32, #tpu.memory_space<vmem>>, vector<1x1x128xf32>
    %334 = vector.shape_cast %333 : vector<1x1x128xf32> to vector<1x128xf32>
    %cst_201 = arith.constant 9.99999974E-6 : f32
    %335 = vector.broadcast %cst_201 : f32 to vector<1x128xf32>
    %336 = arith.addf %332, %335 : vector<1x128xf32>
    %337 = math.rsqrt %336 : vector<1x128xf32>
    %338 = vector.broadcast %337 : vector<1x128xf32> to vector<8x128xf32>
    %339 = arith.mulf %327, %338 : vector<8x128xf32>
    %340 = vector.broadcast %334 : vector<1x128xf32> to vector<8x128xf32>
    %341 = arith.mulf %340, %339 : vector<8x128xf32>
    %c2_202 = arith.constant 2 : index
    %c0_203 = arith.constant 0 : index
    %c0_204 = arith.constant 0 : index
    %342 = vector.load %arg13[%c2_202, %c0_203, %c0_204] : memref<3x1x128xf32, #tpu.memory_space<vmem>>, vector<1x1x128xf32>
    %343 = vector.shape_cast %342 : vector<1x1x128xf32> to vector<1x128xf32>
    %344 = vector.broadcast %343 : vector<1x128xf32> to vector<8x128xf32>
    %345 = arith.addf %341, %344 : vector<8x128xf32>
    %cst_205 = arith.constant 0.000000e+00 : f32
    %346 = vector.broadcast %cst_205 : f32 to vector<8x128xf32>
    %347 = arith.cmpf oge, %345, %346 : vector<8x128xf32>
    %cst_206 = arith.constant 2.000000e-01 : f32
    %348 = vector.broadcast %cst_206 : f32 to vector<8x128xf32>
    %349 = arith.mulf %348, %345 : vector<8x128xf32>
    %350 = arith.select %347, %345, %349 : vector<8x128xi1>, vector<8x128xf32>
    %c3_207 = arith.constant 3 : index
    %c0_208 = arith.constant 0 : index
    %c0_209 = arith.constant 0 : index
    %351 = vector.load %arg10[%c3_207, %c0_208, %c0_209] : memref<4x128x128xf32, #tpu.memory_space<vmem>>, vector<1x128x128xf32>
    %352 = vector.shape_cast %351 : vector<1x128x128xf32> to vector<128x128xf32>
    %cst_210 = arith.constant dense<0.000000e+00> : vector<8x128xf32>
    %353 = tpu.matmul %350, %352, %cst_210 {dimension_numbers = #tpu.dot_dimension_numbers<[1], [0], [0], [1], [0, 0, 1, 1], [], []>} : vector<8x128xf32>, vector<128x128xf32>, vector<8x128xf32> -> vector<8x128xf32>
    %c3_211 = arith.constant 3 : index
    %c0_212 = arith.constant 0 : index
    %c0_213 = arith.constant 0 : index
    %354 = vector.load %arg11[%c3_211, %c0_212, %c0_213] : memref<4x1x128xf32, #tpu.memory_space<vmem>>, vector<1x1x128xf32>
    %355 = vector.shape_cast %354 : vector<1x1x128xf32> to vector<1x128xf32>
    %356 = vector.broadcast %355 : vector<1x128xf32> to vector<8x128xf32>
    %357 = arith.addf %353, %356 : vector<8x128xf32>
    %c0_214 = arith.constant 0 : index
    %c0_215 = arith.constant 0 : index
    %358 = vector.load %arg21[%c0_214, %c0_215] : memref<8x128xf32, #tpu.memory_space<vmem>>, vector<8x128xf32>
    tpu.vector_store %arg21[%c0_214, %c0_215], %357 {strides = array<i32>} : memref<8x128xf32, #tpu.memory_space<vmem>>, vector<8x128xf32>,
    %c0_216 = arith.constant 0 : index
    %c0_217 = arith.constant 0 : index
    %c0_218 = arith.constant 0 : index
    %359 = vector.load %arg14[%c0_216, %c0_217, %c0_218] : memref<4x128x128xf32, #tpu.memory_space<vmem>>, vector<1x128x128xf32>
    %360 = vector.shape_cast %359 : vector<1x128x128xf32> to vector<128x128xf32>
    %cst_219 = arith.constant dense<0.000000e+00> : vector<8x128xf32>
    %361 = tpu.matmul %231, %360, %cst_219 {dimension_numbers = #tpu.dot_dimension_numbers<[1], [0], [0], [1], [0, 0, 1, 1], [], []>} : vector<8x128xf32>, vector<128x128xf32>, vector<8x128xf32> -> vector<8x128xf32>
    %c0_220 = arith.constant 0 : index
    %c0_221 = arith.constant 0 : index
    %c0_222 = arith.constant 0 : index
    %362 = vector.load %arg15[%c0_220, %c0_221, %c0_222] : memref<4x1x128xf32, #tpu.memory_space<vmem>>, vector<1x1x128xf32>
    %363 = vector.shape_cast %362 : vector<1x1x128xf32> to vector<1x128xf32>
    %364 = vector.broadcast %363 : vector<1x128xf32> to vector<8x128xf32>
    %365 = arith.addf %361, %364 : vector<8x128xf32>
    %cst_223 = arith.constant dense<0.000000e+00> : vector<128xf32>
    %366 = vector.multi_reduction <add>, %365, %cst_223 [0] : vector<8x128xf32> to vector<128xf32>
    %367 = vector.shape_cast %366 : vector<128xf32> to vector<1x128xf32>
    %cst_224 = arith.constant 8.000000e+00 : f32
    %368 = vector.broadcast %cst_224 : f32 to vector<1x128xf32>
    %369 = arith.divf %367, %368 : vector<1x128xf32>
    %370 = vector.broadcast %369 : vector<1x128xf32> to vector<8x128xf32>
    %371 = arith.subf %365, %370 : vector<8x128xf32>
    %372 = arith.mulf %371, %371 : vector<8x128xf32>
    %cst_225 = arith.constant dense<0.000000e+00> : vector<128xf32>
    %373 = vector.multi_reduction <add>, %372, %cst_225 [0] : vector<8x128xf32> to vector<128xf32>
    %374 = vector.shape_cast %373 : vector<128xf32> to vector<1x128xf32>
    %cst_226 = arith.constant 8.000000e+00 : f32
    %375 = vector.broadcast %cst_226 : f32 to vector<1x128xf32>
    %376 = arith.divf %374, %375 : vector<1x128xf32>
    %c0_227 = arith.constant 0 : index
    %c0_228 = arith.constant 0 : index
    %c0_229 = arith.constant 0 : index
    %377 = vector.load %arg16[%c0_227, %c0_228, %c0_229] : memref<3x1x128xf32, #tpu.memory_space<vmem>>, vector<1x1x128xf32>
    %378 = vector.shape_cast %377 : vector<1x1x128xf32> to vector<1x128xf32>
    %cst_230 = arith.constant 9.99999974E-6 : f32
    %379 = vector.broadcast %cst_230 : f32 to vector<1x128xf32>
    %380 = arith.addf %376, %379 : vector<1x128xf32>
    %381 = math.rsqrt %380 : vector<1x128xf32>
    %382 = vector.broadcast %381 : vector<1x128xf32> to vector<8x128xf32>
    %383 = arith.mulf %371, %382 : vector<8x128xf32>
    %384 = vector.broadcast %378 : vector<1x128xf32> to vector<8x128xf32>
    %385 = arith.mulf %384, %383 : vector<8x128xf32>
    %c0_231 = arith.constant 0 : index
    %c0_232 = arith.constant 0 : index
    %c0_233 = arith.constant 0 : index
    %386 = vector.load %arg17[%c0_231, %c0_232, %c0_233] : memref<3x1x128xf32, #tpu.memory_space<vmem>>, vector<1x1x128xf32>
    %387 = vector.shape_cast %386 : vector<1x1x128xf32> to vector<1x128xf32>
    %388 = vector.broadcast %387 : vector<1x128xf32> to vector<8x128xf32>
    %389 = arith.addf %385, %388 : vector<8x128xf32>
    %cst_234 = arith.constant 0.000000e+00 : f32
    %390 = vector.broadcast %cst_234 : f32 to vector<8x128xf32>
    %391 = arith.cmpf oge, %389, %390 : vector<8x128xf32>
    %cst_235 = arith.constant 2.000000e-01 : f32
    %392 = vector.broadcast %cst_235 : f32 to vector<8x128xf32>
    %393 = arith.mulf %392, %389 : vector<8x128xf32>
    %394 = arith.select %391, %389, %393 : vector<8x128xi1>, vector<8x128xf32>
    %c1_236 = arith.constant 1 : index
    %c0_237 = arith.constant 0 : index
    %c0_238 = arith.constant 0 : index
    %395 = vector.load %arg14[%c1_236, %c0_237, %c0_238] : memref<4x128x128xf32, #tpu.memory_space<vmem>>, vector<1x128x128xf32>
    %396 = vector.shape_cast %395 : vector<1x128x128xf32> to vector<128x128xf32>
    %cst_239 = arith.constant dense<0.000000e+00> : vector<8x128xf32>
    %397 = tpu.matmul %394, %396, %cst_239 {dimension_numbers = #tpu.dot_dimension_numbers<[1], [0], [0], [1], [0, 0, 1, 1], [], []>} : vector<8x128xf32>, vector<128x128xf32>, vector<8x128xf32> -> vector<8x128xf32>
    %c1_240 = arith.constant 1 : index
    %c0_241 = arith.constant 0 : index
    %c0_242 = arith.constant 0 : index
    %398 = vector.load %arg15[%c1_240, %c0_241, %c0_242] : memref<4x1x128xf32, #tpu.memory_space<vmem>>, vector<1x1x128xf32>
    %399 = vector.shape_cast %398 : vector<1x1x128xf32> to vector<1x128xf32>
    %400 = vector.broadcast %399 : vector<1x128xf32> to vector<8x128xf32>
    %401 = arith.addf %397, %400 : vector<8x128xf32>
    %cst_243 = arith.constant dense<0.000000e+00> : vector<128xf32>
    %402 = vector.multi_reduction <add>, %401, %cst_243 [0] : vector<8x128xf32> to vector<128xf32>
    %403 = vector.shape_cast %402 : vector<128xf32> to vector<1x128xf32>
    %cst_244 = arith.constant 8.000000e+00 : f32
    %404 = vector.broadcast %cst_244 : f32 to vector<1x128xf32>
    %405 = arith.divf %403, %404 : vector<1x128xf32>
    %406 = vector.broadcast %405 : vector<1x128xf32> to vector<8x128xf32>
    %407 = arith.subf %401, %406 : vector<8x128xf32>
    %408 = arith.mulf %407, %407 : vector<8x128xf32>
    %cst_245 = arith.constant dense<0.000000e+00> : vector<128xf32>
    %409 = vector.multi_reduction <add>, %408, %cst_245 [0] : vector<8x128xf32> to vector<128xf32>
    %410 = vector.shape_cast %409 : vector<128xf32> to vector<1x128xf32>
    %cst_246 = arith.constant 8.000000e+00 : f32
    %411 = vector.broadcast %cst_246 : f32 to vector<1x128xf32>
    %412 = arith.divf %410, %411 : vector<1x128xf32>
    %c1_247 = arith.constant 1 : index
    %c0_248 = arith.constant 0 : index
    %c0_249 = arith.constant 0 : index
    %413 = vector.load %arg16[%c1_247, %c0_248, %c0_249] : memref<3x1x128xf32, #tpu.memory_space<vmem>>, vector<1x1x128xf32>
    %414 = vector.shape_cast %413 : vector<1x1x128xf32> to vector<1x128xf32>
    %cst_250 = arith.constant 9.99999974E-6 : f32
    %415 = vector.broadcast %cst_250 : f32 to vector<1x128xf32>
    %416 = arith.addf %412, %415 : vector<1x128xf32>
    %417 = math.rsqrt %416 : vector<1x128xf32>
    %418 = vector.broadcast %417 : vector<1x128xf32> to vector<8x128xf32>
    %419 = arith.mulf %407, %418 : vector<8x128xf32>
    %420 = vector.broadcast %414 : vector<1x128xf32> to vector<8x128xf32>
    %421 = arith.mulf %420, %419 : vector<8x128xf32>
    %c1_251 = arith.constant 1 : index
    %c0_252 = arith.constant 0 : index
    %c0_253 = arith.constant 0 : index
    %422 = vector.load %arg17[%c1_251, %c0_252, %c0_253] : memref<3x1x128xf32, #tpu.memory_space<vmem>>, vector<1x1x128xf32>
    %423 = vector.shape_cast %422 : vector<1x1x128xf32> to vector<1x128xf32>
    %424 = vector.broadcast %423 : vector<1x128xf32> to vector<8x128xf32>
    %425 = arith.addf %421, %424 : vector<8x128xf32>
    %cst_254 = arith.constant 0.000000e+00 : f32
    %426 = vector.broadcast %cst_254 : f32 to vector<8x128xf32>
    %427 = arith.cmpf oge, %425, %426 : vector<8x128xf32>
    %cst_255 = arith.constant 2.000000e-01 : f32
    %428 = vector.broadcast %cst_255 : f32 to vector<8x128xf32>
    %429 = arith.mulf %428, %425 : vector<8x128xf32>
    %430 = arith.select %427, %425, %429 : vector<8x128xi1>, vector<8x128xf32>
    %c2_256 = arith.constant 2 : index
    %c0_257 = arith.constant 0 : index
    %c0_258 = arith.constant 0 : index
    %431 = vector.load %arg14[%c2_256, %c0_257, %c0_258] : memref<4x128x128xf32, #tpu.memory_space<vmem>>, vector<1x128x128xf32>
    %432 = vector.shape_cast %431 : vector<1x128x128xf32> to vector<128x128xf32>
    %cst_259 = arith.constant dense<0.000000e+00> : vector<8x128xf32>
    %433 = tpu.matmul %430, %432, %cst_259 {dimension_numbers = #tpu.dot_dimension_numbers<[1], [0], [0], [1], [0, 0, 1, 1], [], []>} : vector<8x128xf32>, vector<128x128xf32>, vector<8x128xf32> -> vector<8x128xf32>
    %c2_260 = arith.constant 2 : index
    %c0_261 = arith.constant 0 : index
    %c0_262 = arith.constant 0 : index
    %434 = vector.load %arg15[%c2_260, %c0_261, %c0_262] : memref<4x1x128xf32, #tpu.memory_space<vmem>>, vector<1x1x128xf32>
    %435 = vector.shape_cast %434 : vector<1x1x128xf32> to vector<1x128xf32>
    %436 = vector.broadcast %435 : vector<1x128xf32> to vector<8x128xf32>
    %437 = arith.addf %433, %436 : vector<8x128xf32>
    %cst_263 = arith.constant dense<0.000000e+00> : vector<128xf32>
    %438 = vector.multi_reduction <add>, %437, %cst_263 [0] : vector<8x128xf32> to vector<128xf32>
    %439 = vector.shape_cast %438 : vector<128xf32> to vector<1x128xf32>
    %cst_264 = arith.constant 8.000000e+00 : f32
    %440 = vector.broadcast %cst_264 : f32 to vector<1x128xf32>
    %441 = arith.divf %439, %440 : vector<1x128xf32>
    %442 = vector.broadcast %441 : vector<1x128xf32> to vector<8x128xf32>
    %443 = arith.subf %437, %442 : vector<8x128xf32>
    %444 = arith.mulf %443, %443 : vector<8x128xf32>
    %cst_265 = arith.constant dense<0.000000e+00> : vector<128xf32>
    %445 = vector.multi_reduction <add>, %444, %cst_265 [0] : vector<8x128xf32> to vector<128xf32>
    %446 = vector.shape_cast %445 : vector<128xf32> to vector<1x128xf32>
    %cst_266 = arith.constant 8.000000e+00 : f32
    %447 = vector.broadcast %cst_266 : f32 to vector<1x128xf32>
    %448 = arith.divf %446, %447 : vector<1x128xf32>
    %c2_267 = arith.constant 2 : index
    %c0_268 = arith.constant 0 : index
    %c0_269 = arith.constant 0 : index
    %449 = vector.load %arg16[%c2_267, %c0_268, %c0_269] : memref<3x1x128xf32, #tpu.memory_space<vmem>>, vector<1x1x128xf32>
    %450 = vector.shape_cast %449 : vector<1x1x128xf32> to vector<1x128xf32>
    %cst_270 = arith.constant 9.99999974E-6 : f32
    %451 = vector.broadcast %cst_270 : f32 to vector<1x128xf32>
    %452 = arith.addf %448, %451 : vector<1x128xf32>
    %453 = math.rsqrt %452 : vector<1x128xf32>
    %454 = vector.broadcast %453 : vector<1x128xf32> to vector<8x128xf32>
    %455 = arith.mulf %443, %454 : vector<8x128xf32>
    %456 = vector.broadcast %450 : vector<1x128xf32> to vector<8x128xf32>
    %457 = arith.mulf %456, %455 : vector<8x128xf32>
    %c2_271 = arith.constant 2 : index
    %c0_272 = arith.constant 0 : index
    %c0_273 = arith.constant 0 : index
    %458 = vector.load %arg17[%c2_271, %c0_272, %c0_273] : memref<3x1x128xf32, #tpu.memory_space<vmem>>, vector<1x1x128xf32>
    %459 = vector.shape_cast %458 : vector<1x1x128xf32> to vector<1x128xf32>
    %460 = vector.broadcast %459 : vector<1x128xf32> to vector<8x128xf32>
    %461 = arith.addf %457, %460 : vector<8x128xf32>
    %cst_274 = arith.constant 0.000000e+00 : f32
    %462 = vector.broadcast %cst_274 : f32 to vector<8x128xf32>
    %463 = arith.cmpf oge, %461, %462 : vector<8x128xf32>
    %cst_275 = arith.constant 2.000000e-01 : f32
    %464 = vector.broadcast %cst_275 : f32 to vector<8x128xf32>
    %465 = arith.mulf %464, %461 : vector<8x128xf32>
    %466 = arith.select %463, %461, %465 : vector<8x128xi1>, vector<8x128xf32>
    %c3_276 = arith.constant 3 : index
    %c0_277 = arith.constant 0 : index
    %c0_278 = arith.constant 0 : index
    %467 = vector.load %arg14[%c3_276, %c0_277, %c0_278] : memref<4x128x128xf32, #tpu.memory_space<vmem>>, vector<1x128x128xf32>
    %468 = vector.shape_cast %467 : vector<1x128x128xf32> to vector<128x128xf32>
    %cst_279 = arith.constant dense<0.000000e+00> : vector<8x128xf32>
    %469 = tpu.matmul %466, %468, %cst_279 {dimension_numbers = #tpu.dot_dimension_numbers<[1], [0], [0], [1], [0, 0, 1, 1], [], []>} : vector<8x128xf32>, vector<128x128xf32>, vector<8x128xf32> -> vector<8x128xf32>
    %c3_280 = arith.constant 3 : index
    %c0_281 = arith.constant 0 : index
    %c0_282 = arith.constant 0 : index
    %470 = vector.load %arg15[%c3_280, %c0_281, %c0_282] : memref<4x1x128xf32, #tpu.memory_space<vmem>>, vector<1x1x128xf32>
    %471 = vector.shape_cast %470 : vector<1x1x128xf32> to vector<1x128xf32>
    %472 = vector.broadcast %471 : vector<1x128xf32> to vector<8x128xf32>
    %473 = arith.addf %469, %472 : vector<8x128xf32>
    %c0_283 = arith.constant 0 : index
    %c0_284 = arith.constant 0 : index
    %474 = vector.load %arg22[%c0_283, %c0_284] : memref<8x128xf32, #tpu.memory_space<vmem>>, vector<8x128xf32>
    tpu.vector_store %arg22[%c0_283, %c0_284], %473 {strides = array<i32>} : memref<8x128xf32, #tpu.memory_space<vmem>>, vector<8x128xf32>,
    return
  }
}

</mosaic_0001>

<llo_original>
// kernel: autoencoder_forward.1
$region0: #{autoencoder_forward.1}
  #allocation0 [shape = 'u32[]', space=smem, size = 0x4, offset = 0x4, fixed_abs, tag = 'smem constant byte address 0x4 - core index']
  #allocation1 [shape = 'u32[144,128]{1,0:T(1,128)}', space=vmem, size = 0x12000, scoped, tag = 'internal scratch']
  %s0 = inlined_call_operand.vmem [shape: f32[8,128], index: 0, kind: input, shape index: {}]
  %s1 = inlined_call_operand.vmem [shape: f32[8,128], index: 1, kind: input, shape index: {}]
  %s2 = inlined_call_operand.hbm [shape: f32[4,128,128], index: 2, kind: input, shape index: {}]
  %s3 = inlined_call_operand.vmem [shape: f32[4,1,128], index: 3, kind: input, shape index: {}]
  %s4 = inlined_call_operand.vmem [shape: f32[3,1,128], index: 4, kind: input, shape index: {}]
  %s5 = inlined_call_operand.vmem [shape: f32[3,1,128], index: 5, kind: input, shape index: {}]
  %s6 = inlined_call_operand.hbm [shape: f32[4,128,128], index: 6, kind: input, shape index: {}]
  %s7 = inlined_call_operand.vmem [shape: f32[4,1,128], index: 7, kind: input, shape index: {}]
  %s8 = inlined_call_operand.vmem [shape: f32[3,1,128], index: 8, kind: input, shape index: {}]
  %s9 = inlined_call_operand.vmem [shape: f32[3,1,128], index: 9, kind: input, shape index: {}]
  %s10 = inlined_call_operand.hbm [shape: f32[4,128,128], index: 10, kind: input, shape index: {}]
  %s11 = inlined_call_operand.vmem [shape: f32[4,1,128], index: 11, kind: input, shape index: {}]
  %s12 = inlined_call_operand.vmem [shape: f32[3,1,128], index: 12, kind: input, shape index: {}]
  %s13 = inlined_call_operand.vmem [shape: f32[3,1,128], index: 13, kind: input, shape index: {}]
  %s14 = inlined_call_operand.hbm [shape: f32[4,128,128], index: 14, kind: input, shape index: {}]
  %s15 = inlined_call_operand.vmem [shape: f32[4,1,128], index: 15, kind: input, shape index: {}]
  %s16 = inlined_call_operand.vmem [shape: f32[3,1,128], index: 16, kind: input, shape index: {}]
  %s17 = inlined_call_operand.vmem [shape: f32[3,1,128], index: 17, kind: input, shape index: {}]
  %s18 = inlined_call_operand.hbm [shape: f32[128,128], index: 18, kind: input, shape index: {}]
  %s19 = inlined_call_operand.hbm [shape: f32[128,128], index: 19, kind: input, shape index: {}]
  %s20 = inlined_call_operand.vmem [shape: f32[1,128], index: 20, kind: input, shape index: {}]
  %s21 = inlined_call_operand.hbm [shape: f32[8,128], index: 21, kind: output, shape index: {0}]
  %s22 = inlined_call_operand.hbm [shape: f32[8,128], index: 22, kind: output, shape index: {1}]
  %s23 = inlined_call_operand.vmem [shape: f32[8,128], index: 23, kind: output, shape index: {2}]
  %s24 = inlined_call_operand.vmem [shape: f32[8,128], index: 24, kind: output, shape index: {3}]
  %s25 = inlined_call_operand.vmem [shape: f32[8,128], index: 25, kind: output, shape index: {4}]
  %26 = xla_tuple %s21, %s22, %s23, %s24, %s25
  %s27 = sld [smem:[#allocation0]]
  $region150: #{autoencoder_forward.1} parent=0
    _
  %s29 = ssub.s32 1, %s27
  %s30 = scalar_select 0, %s29, %s27
  $region1: #{autoencoder_forward.1} parent=0
    #allocation2 [shape = 'u8[262144]{0}', space=vmem, size = 0x40000, scoped, tag = 'input window, operand 2, single buffered']
    #allocation3 [shape = 's32[1]{0}', space=sflag, size = 0x4, scoped, tag = 'scoped memory for autoencoder_forward.1']
    #allocation4 [shape = 's32[1]{0}', space=sflag, size = 0x4, scoped, tag = 'scoped memory for autoencoder_forward.1']
    #allocation5 [shape = 'u8[262144]{0}', space=vmem, size = 0x40000, scoped, tag = 'input window, operand 6, single buffered']
    #allocation6 [shape = 's32[1]{0}', space=sflag, size = 0x4, scoped, tag = 'scoped memory for autoencoder_forward.1']
    #allocation7 [shape = 'u8[262144]{0}', space=vmem, size = 0x40000, scoped, tag = 'input window, operand 10, single buffered']
    #allocation8 [shape = 'u8[262144]{0}', space=vmem, size = 0x40000, scoped, tag = 'input window, operand 14, single buffered']
    #allocation9 [shape = 's32[1]{0}', space=sflag, size = 0x4, scoped, tag = 'scoped memory for autoencoder_forward.1']
    #allocation10 [shape = 'u8[65536]{0}', space=vmem, size = 0x10000, scoped, tag = 'input window, operand 18, single buffered']
    #allocation11 [shape = 'u8[65536]{0}', space=vmem, size = 0x10000, scoped, tag = 'input window, operand 19, single buffered']
    #allocation12 [shape = 's32[1]{0}', space=sflag, size = 0x4, scoped, tag = 'scoped memory for autoencoder_forward.1']
    #allocation13 [shape = 'u8[4096]{0}', space=vmem, size = 0x1000, scoped, tag = 'output window, operand 0, single buffered']
    #allocation14 [shape = 'u8[4096]{0}', space=vmem, size = 0x1000, scoped, tag = 'output window, operand 1, single buffered']
    #allocation15 [shape = 's32[1]{0}', space=sflag, size = 0x4, scoped, tag = 'scoped memory for autoencoder_forward.1']
    %31 = vsyncpa [#allocation3], 0
    %32 = vsyncpa [#allocation6], 0
    %33 = vsyncpa [#allocation9], 0
    %34 = vsyncpa [#allocation12], 0
    %35 = vsyncpa [#allocation4], 0
    %36 = vsyncpa [#allocation15], 0
    // Predicated region
    $region2: #{autoencoder_forward.1} parent=1 // pred_check
      _
    $region3: #{autoencoder_forward.1} parent=1 // pred_check_branch
      %38 = sbr.rel (0) target = $region5
    $region4: #{autoencoder_forward.1} parent=1 // pred_region
      _
    $region5: #{autoencoder_forward.1} parent=1 // pred_fallthru
      _
    // Predicated region
    $region6: #{autoencoder_forward.1} parent=1 // pred_check
      _
    $region7: #{autoencoder_forward.1} parent=1 // pred_check_branch
      %40 = sbr.rel (0) target = $region9
    $region8: #{autoencoder_forward.1} parent=1 // pred_region
      _
    $region9: #{autoencoder_forward.1} parent=1 // pred_fallthru
      _
    // Predicated region
    $region10: #{autoencoder_forward.1} parent=1 // pred_check
      _
    $region11: #{autoencoder_forward.1} parent=1 // pred_check_branch
      %42 = sbr.rel (0) target = $region13
    $region12: #{autoencoder_forward.1} parent=1 // pred_region
      %s44 = ssub.s32 8192, 8192
      %45 = vsyncadd [#allocation3], %s44
      %s46 = sshll.u32 [#allocation2], 4
      %s47 = int_to_ptr.vmem [resolvable:$true] %s46
      %52 = dma.hbm_to_vmem [thread:$0]  %s2, 8192, %s47, [#allocation3], 128, 128, 8
    $region13: #{autoencoder_forward.1} parent=1 // pred_fallthru
      _
    // Predicated region
    $region14: #{autoencoder_forward.1} parent=1 // pred_check
      _
    $region15: #{autoencoder_forward.1} parent=1 // pred_check_branch
      %54 = sbr.rel (0) target = $region17
    $region16: #{autoencoder_forward.1} parent=1 // pred_region
      _
    $region17: #{autoencoder_forward.1} parent=1 // pred_fallthru
      _
    // Predicated region
    $region18: #{autoencoder_forward.1} parent=1 // pred_check
      _
    $region19: #{autoencoder_forward.1} parent=1 // pred_check_branch
      %56 = sbr.rel (0) target = $region21
    $region20: #{autoencoder_forward.1} parent=1 // pred_region
      _
    $region21: #{autoencoder_forward.1} parent=1 // pred_fallthru
      _
    // Predicated region
    $region22: #{autoencoder_forward.1} parent=1 // pred_check
      _
    $region23: #{autoencoder_forward.1} parent=1 // pred_check_branch
      %58 = sbr.rel (0) target = $region25
    $region24: #{autoencoder_forward.1} parent=1 // pred_region
      _
    $region25: #{autoencoder_forward.1} parent=1 // pred_fallthru
      _
    // Predicated region
    $region26: #{autoencoder_forward.1} parent=1 // pred_check
      _
    $region27: #{autoencoder_forward.1} parent=1 // pred_check_branch
      %60 = sbr.rel (0) target = $region29
    $region28: #{autoencoder_forward.1} parent=1 // pred_region
      %s62 = ssub.s32 8192, 8192
      %63 = vsyncadd [#allocation6], %s62
      %s64 = sshll.u32 [#allocation5], 4
      %s65 = int_to_ptr.vmem [resolvable:$true] %s64
      %70 = dma.hbm_to_vmem [thread:$0]  %s6, 8192, %s65, [#allocation6], 128, 128, 8
    $region29: #{autoencoder_forward.1} parent=1 // pred_fallthru
      _
    // Predicated region
    $region30: #{autoencoder_forward.1} parent=1 // pred_check
      _
    $region31: #{autoencoder_forward.1} parent=1 // pred_check_branch
      %72 = sbr.rel (0) target = $region33
    $region32: #{autoencoder_forward.1} parent=1 // pred_region
      _
    $region33: #{autoencoder_forward.1} parent=1 // pred_fallthru
      _
    // Predicated region
    $region34: #{autoencoder_forward.1} parent=1 // pred_check
      _
    $region35: #{autoencoder_forward.1} parent=1 // pred_check_branch
      %74 = sbr.rel (0) target = $region37
    $region36: #{autoencoder_forward.1} parent=1 // pred_region
      _
    $region37: #{autoencoder_forward.1} parent=1 // pred_fallthru
      _
    // Predicated region
    $region38: #{autoencoder_forward.1} parent=1 // pred_check
      _
    $region39: #{autoencoder_forward.1} parent=1 // pred_check_branch
      %76 = sbr.rel (0) target = $region41
    $region40: #{autoencoder_forward.1} parent=1 // pred_region
      _
    $region41: #{autoencoder_forward.1} parent=1 // pred_fallthru
      _
    // Predicated region
    $region42: #{autoencoder_forward.1} parent=1 // pred_check
      _
    $region43: #{autoencoder_forward.1} parent=1 // pred_check_branch
      %78 = sbr.rel (0) target = $region45
    $region44: #{autoencoder_forward.1} parent=1 // pred_region
      %s80 = ssub.s32 8192, 8192
      %81 = vsyncadd [#allocation6], %s80
      %s82 = sshll.u32 [#allocation7], 4
      %s83 = int_to_ptr.vmem [resolvable:$true] %s82
      %88 = dma.hbm_to_vmem [thread:$0]  %s10, 8192, %s83, [#allocation6], 128, 128, 8
    $region45: #{autoencoder_forward.1} parent=1 // pred_fallthru
      _
    // Predicated region
    $region46: #{autoencoder_forward.1} parent=1 // pred_check
      _
    $region47: #{autoencoder_forward.1} parent=1 // pred_check_branch
      %90 = sbr.rel (0) target = $region49
    $region48: #{autoencoder_forward.1} parent=1 // pred_region
      _
    $region49: #{autoencoder_forward.1} parent=1 // pred_fallthru
      _
    // Predicated region
    $region50: #{autoencoder_forward.1} parent=1 // pred_check
      _
    $region51: #{autoencoder_forward.1} parent=1 // pred_check_branch
      %92 = sbr.rel (0) target = $region53
    $region52: #{autoencoder_forward.1} parent=1 // pred_region
      _
    $region53: #{autoencoder_forward.1} parent=1 // pred_fallthru
      _
    // Predicated region
    $region54: #{autoencoder_forward.1} parent=1 // pred_check
      _
    $region55: #{autoencoder_forward.1} parent=1 // pred_check_branch
      %94 = sbr.rel (0) target = $region57
    $region56: #{autoencoder_forward.1} parent=1 // pred_region
      _
    $region57: #{autoencoder_forward.1} parent=1 // pred_fallthru
      _
    // Predicated region
    $region58: #{autoencoder_forward.1} parent=1 // pred_check
      _
    $region59: #{autoencoder_forward.1} parent=1 // pred_check_branch
      %96 = sbr.rel (0) target = $region61
    $region60: #{autoencoder_forward.1} parent=1 // pred_region
      %s98 = ssub.s32 8192, 8192
      %99 = vsyncadd [#allocation9], %s98
      %s100 = sshll.u32 [#allocation8], 4
      %s101 = int_to_ptr.vmem [resolvable:$true] %s100
      %106 = dma.hbm_to_vmem [thread:$0]  %s14, 8192, %s101, [#allocation9], 128, 128, 8
    $region61: #{autoencoder_forward.1} parent=1 // pred_fallthru
      _
    // Predicated region
    $region62: #{autoencoder_forward.1} parent=1 // pred_check
      _
    $region63: #{autoencoder_forward.1} parent=1 // pred_check_branch
      %108 = sbr.rel (0) target = $region65
    $region64: #{autoencoder_forward.1} parent=1 // pred_region
      _
    $region65: #{autoencoder_forward.1} parent=1 // pred_fallthru
      _
    // Predicated region
    $region66: #{autoencoder_forward.1} parent=1 // pred_check
      _
    $region67: #{autoencoder_forward.1} parent=1 // pred_check_branch
      %110 = sbr.rel (0) target = $region69
    $region68: #{autoencoder_forward.1} parent=1 // pred_region
      _
    $region69: #{autoencoder_forward.1} parent=1 // pred_fallthru
      _
    // Predicated region
    $region70: #{autoencoder_forward.1} parent=1 // pred_check
      _
    $region71: #{autoencoder_forward.1} parent=1 // pred_check_branch
      %112 = sbr.rel (0) target = $region73
    $region72: #{autoencoder_forward.1} parent=1 // pred_region
      _
    $region73: #{autoencoder_forward.1} parent=1 // pred_fallthru
      _
    // Predicated region
    $region74: #{autoencoder_forward.1} parent=1 // pred_check
      _
    $region75: #{autoencoder_forward.1} parent=1 // pred_check_branch
      %114 = sbr.rel (0) target = $region77
    $region76: #{autoencoder_forward.1} parent=1 // pred_region
      %s116 = ssub.s32 2048, 2048
      %117 = vsyncadd [#allocation9], %s116
      %s118 = sshll.u32 [#allocation10], 4
      %s119 = int_to_ptr.vmem [resolvable:$true] %s118
      %124 = dma.hbm_to_vmem [thread:$0]  %s18, 2048, %s119, [#allocation9], 128, 128, 8
    $region77: #{autoencoder_forward.1} parent=1 // pred_fallthru
      _
    // Predicated region
    $region78: #{autoencoder_forward.1} parent=1 // pred_check
      _
    $region79: #{autoencoder_forward.1} parent=1 // pred_check_branch
      %126 = sbr.rel (0) target = $region81
    $region80: #{autoencoder_forward.1} parent=1 // pred_region
      %s128 = ssub.s32 2048, 2048
      %129 = vsyncadd [#allocation12], %s128
      %s130 = sshll.u32 [#allocation11], 4
      %s131 = int_to_ptr.vmem [resolvable:$true] %s130
      %136 = dma.hbm_to_vmem [thread:$0]  %s19, 2048, %s131, [#allocation12], 128, 128, 8
    $region81: #{autoencoder_forward.1} parent=1 // pred_fallthru
      _
    // Predicated region
    $region82: #{autoencoder_forward.1} parent=1 // pred_check
      _
    $region83: #{autoencoder_forward.1} parent=1 // pred_check_branch
      %138 = sbr.rel (0) target = $region85
    $region84: #{autoencoder_forward.1} parent=1 // pred_region
      _
    $region85: #{autoencoder_forward.1} parent=1 // pred_fallthru
      _
    // Predicated region
    $region86: #{autoencoder_forward.1} parent=1 // pred_check
      _
    $region87: #{autoencoder_forward.1} parent=1 // pred_check_branch
      %140 = sbr.rel (0) target = $region89
    $region88: #{autoencoder_forward.1} parent=1 // pred_region
      %141 = dma.done [#allocation3], 8192
    $region89: #{autoencoder_forward.1} parent=1 // pred_fallthru
      _
    // Predicated region
    $region90: #{autoencoder_forward.1} parent=1 // pred_check
      _
    $region91: #{autoencoder_forward.1} parent=1 // pred_check_branch
      %143 = sbr.rel (0) target = $region93
    $region92: #{autoencoder_forward.1} parent=1 // pred_region
      %144 = dma.done [#allocation6], 8192
    $region93: #{autoencoder_forward.1} parent=1 // pred_fallthru
      _
    // Predicated region
    $region94: #{autoencoder_forward.1} parent=1 // pred_check
      _
    $region95: #{autoencoder_forward.1} parent=1 // pred_check_branch
      %146 = sbr.rel (0) target = $region97
    $region96: #{autoencoder_forward.1} parent=1 // pred_region
      %147 = dma.done [#allocation6], 8192
    $region97: #{autoencoder_forward.1} parent=1 // pred_fallthru
      _
    // Predicated region
    $region98: #{autoencoder_forward.1} parent=1 // pred_check
      _
    $region99: #{autoencoder_forward.1} parent=1 // pred_check_branch
      %149 = sbr.rel (0) target = $region101
    $region100: #{autoencoder_forward.1} parent=1 // pred_region
      %150 = dma.done [#allocation9], 8192
    $region101: #{autoencoder_forward.1} parent=1 // pred_fallthru
      _
    // Predicated region
    $region102: #{autoencoder_forward.1} parent=1 // pred_check
      _
    $region103: #{autoencoder_forward.1} parent=1 // pred_check_branch
      %152 = sbr.rel (0) target = $region105
    $region104: #{autoencoder_forward.1} parent=1 // pred_region
      %153 = dma.done [#allocation9], 2048
    $region105: #{autoencoder_forward.1} parent=1 // pred_fallthru
      _
    // Predicated region
    $region106: #{autoencoder_forward.1} parent=1 // pred_check
      _
    $region107: #{autoencoder_forward.1} parent=1 // pred_check_branch
      %155 = sbr.rel (0) target = $region109
    $region108: #{autoencoder_forward.1} parent=1 // pred_region
      %156 = dma.done [#allocation12], 2048
    $region109: #{autoencoder_forward.1} parent=1 // pred_fallthru
      _
    %v157 = vld [vmem:[%s0] sm:$0xff]
    %v158 = vld [vmem:[#allocation2] sm:$0xff]
    %v159 = vld [vmem:[#allocation2 + $0x8] sm:$0xff]
    %v160 = vld [vmem:[#allocation2 + $0x10] sm:$0xff]
    %v161 = vld [vmem:[#allocation2 + $0x18] sm:$0xff]
    %v162 = vld [vmem:[#allocation2 + $0x20] sm:$0xff]
    %v163 = vld [vmem:[#allocation2 + $0x28] sm:$0xff]
    %v164 = vld [vmem:[#allocation2 + $0x30] sm:$0xff]
    %v165 = vld [vmem:[#allocation2 + $0x38] sm:$0xff]
    %v166 = vld [vmem:[#allocation2 + $0x40] sm:$0xff]
    %v167 = vld [vmem:[#allocation2 + $0x48] sm:$0xff]
    %v168 = vld [vmem:[#allocation2 + $0x50] sm:$0xff]
    %v169 = vld [vmem:[#allocation2 + $0x58] sm:$0xff]
    %v170 = vld [vmem:[#allocation2 + $0x60] sm:$0xff]
    %v171 = vld [vmem:[#allocation2 + $0x68] sm:$0xff]
    %v172 = vld [vmem:[#allocation2 + $0x70] sm:$0xff]
    %v173 = vld [vmem:[#allocation2 + $0x78] sm:$0xff]
    %v174 = vld [vmem:[%s3] sm:$0x1]
    %v176 = vlaneseq
    %v177 = vshrl.u32 %v176, 7
    %v178 = vsub.s32 0, %v177
    %v179 = vrot.slane %v174, %v178
    %181 = vmatprep.subr.mxu0 0.0
    %182 = vmatpush1.msra.mxu0 %v158
    %183 = vmatprep.subr.mxu0 0.0
    %184 = vmatpush1.msra.mxu0 %v159
    %185 = vmatprep.subr.mxu0 0.0
    %186 = vmatpush1.msra.mxu0 %v160
    %187 = vmatprep.subr.mxu0 0.0
    %188 = vmatpush1.msra.mxu0 %v161
    %189 = vmatprep.subr.mxu0 0.0
    %190 = vmatpush1.msra.mxu0 %v162
    %191 = vmatprep.subr.mxu0 0.0
    %192 = vmatpush1.msra.mxu0 %v163
    %193 = vmatprep.subr.mxu0 0.0
    %194 = vmatpush1.msra.mxu0 %v164
    %195 = vmatprep.subr.mxu0 0.0
    %196 = vmatpush1.msra.mxu0 %v165
    %197 = vmatprep.subr.mxu0 0.0
    %198 = vmatpush1.msra.mxu0 %v166
    %199 = vmatprep.subr.mxu0 0.0
    %200 = vmatpush1.msra.mxu0 %v167
    %201 = vmatprep.subr.mxu0 0.0
    %202 = vmatpush1.msra.mxu0 %v168
    %203 = vmatprep.subr.mxu0 0.0
    %204 = vmatpush1.msra.mxu0 %v169
    %205 = vmatprep.subr.mxu0 0.0
    %206 = vmatpush1.msra.mxu0 %v170
    %207 = vmatprep.subr.mxu0 0.0
    %208 = vmatpush1.msra.mxu0 %v171
    %209 = vmatprep.subr.mxu0 0.0
    %210 = vmatpush1.msra.mxu0 %v172
    %211 = vmatprep.subr.mxu0 0.0
    %212 = vmatpush1.msra.mxu0 %v173
    %213 = vmatprep.subr.mxu0 0.0
    %214 = vmatpush1.msra.mxu0 0.0
    %215 = vmatprep.subr.mxu0 0.0
    %216 = vmatpush1.msra.mxu0 0.0
    %217 = vmatprep.subr.mxu0 0.0
    %218 = vmatpush1.msra.mxu0 0.0
    %219 = vmatprep.subr.mxu0 0.0
    %220 = vmatpush1.msra.mxu0 0.0
    %221 = vmatprep.subr.mxu0 0.0
    %222 = vmatpush1.msra.mxu0 0.0
    %223 = vmatprep.subr.mxu0 0.0
    %224 = vmatpush1.msra.mxu0 0.0
    %225 = vmatprep.subr.mxu0 0.0
    %226 = vmatpush1.msra.mxu0 0.0
    %227 = vmatprep.subr.mxu0 0.0
    %228 = vmatpush1.msra.mxu0 0.0
    %229 = vmatprep.subr.mxu0 0.0
    %230 = vmatpush1.msra.mxu0 0.0
    %231 = vmatprep.subr.mxu0 0.0
    %232 = vmatpush1.msra.mxu0 0.0
    %233 = vmatprep.subr.mxu0 0.0
    %234 = vmatpush1.msra.mxu0 0.0
    %235 = vmatprep.subr.mxu0 0.0
    %236 = vmatpush1.msra.mxu0 0.0
    %237 = vmatprep.subr.mxu0 0.0
    %238 = vmatpush1.msra.mxu0 0.0
    %239 = vmatprep.subr.mxu0 0.0
    %240 = vmatpush1.msra.mxu0 0.0
    %241 = vmatprep.subr.mxu0 0.0
    %242 = vmatpush1.msra.mxu0 0.0
    %243 = vmatprep.subr.mxu0 0.0
    %244 = vmatpush1.msra.mxu0 0.0
    %245 = vmatprep.mubr.f32.mxu0 0.0
    %246 = vmatmul.mubr.f32.gmra.mrb[0].mxu0 %v157
    %v247 = vpop.f32.mrb[0].mxu0
    %v248 = vadd.f32 %v179, %v247
    %v249 = vpop.f32.mrb[0].mxu0
    %250 = vdwg.mxu0
    %v251 = vrot.slane %v248, 4
    %v252 = vadd.f32 %v248, %v251
    %v253 = vrot.slane %v252, 2
    %v254 = vadd.f32 %v252, %v253
    %v255 = vrot.slane %v254, 1
    %v256 = vadd.f32 %v254, %v255
    %v257 = vrcp.pop 8.0
    %v258 = vmul.f32 %v256, %v257
    %v259 = vsub.f32 %v248, %v258
    %v260 = vmul.f32 %v259, %v259
    %v261 = vrot.slane %v260, 4
    %v262 = vadd.f32 %v260, %v261
    %v263 = vrot.slane %v262, 2
    %v264 = vadd.f32 %v262, %v263
    %v265 = vrot.slane %v264, 1
    %v266 = vadd.f32 %v264, %v265
    %v267 = vmul.f32 %v266, %v257
    %v268 = vld [vmem:[%s4] sm:$0x1]
    %v269 = vadd.f32 %v267, 1e-05
    %v270 = vrsqrt.pop %v269
    %v271 = vmul.f32 %v259, %v270
    %v273 = vlaneseq
    %v274 = vshrl.u32 %v273, 7
    %v275 = vsub.s32 0, %v274
    %v276 = vrot.slane %v268, %v275
    %v278 = vmul.f32 %v276, %v271
    %v279 = vld [vmem:[%s5] sm:$0x1]
    %v281 = vlaneseq
    %v282 = vshrl.u32 %v281, 7
    %v283 = vsub.s32 0, %v282
    %v284 = vrot.slane %v279, %v283
    %v286 = vadd.f32 %v278, %v284
    %vm287 = vcmp.ge.f32.partialorder %v286, 0.0
    %v288 = vmul.f32 %v286, 0.2
    %v289 = vsel %vm287, %v286, %v288
    %s290 = scalar_lea.vmem [#allocation2], 128
    %v291 = vld [vmem:[%s290] sm:$0xff]
    %v292 = vld [vmem:[%s290 + $0x8] sm:$0xff]
    %v293 = vld [vmem:[%s290 + $0x10] sm:$0xff]
    %v294 = vld [vmem:[%s290 + $0x18] sm:$0xff]
    %v295 = vld [vmem:[%s290 + $0x20] sm:$0xff]
    %v296 = vld [vmem:[%s290 + $0x28] sm:$0xff]
    %v297 = vld [vmem:[%s290 + $0x30] sm:$0xff]
    %v298 = vld [vmem:[%s290 + $0x38] sm:$0xff]
    %v299 = vld [vmem:[%s290 + $0x40] sm:$0xff]
    %v300 = vld [vmem:[%s290 + $0x48] sm:$0xff]
    %v301 = vld [vmem:[%s290 + $0x50] sm:$0xff]
    %v302 = vld [vmem:[%s290 + $0x58] sm:$0xff]
    %v303 = vld [vmem:[%s290 + $0x60] sm:$0xff]
    %v304 = vld [vmem:[%s290 + $0x68] sm:$0xff]
    %v305 = vld [vmem:[%s290 + $0x70] sm:$0xff]
    %v306 = vld [vmem:[%s290 + $0x78] sm:$0xff]
    %s307 = scalar_lea.vmem %s3, 1
    %v308 = vld [vmem:[%s307] sm:$0x1]
    %v310 = vlaneseq
    %v311 = vshrl.u32 %v310, 7
    %v312 = vsub.s32 0, %v311
    %v313 = vrot.slane %v308, %v312
    %315 = vmatprep.subr.mxu0 0.0
    %316 = vmatpush1.msra.mxu0 %v291
    %317 = vmatprep.subr.mxu0 0.0
    %318 = vmatpush1.msra.mxu0 %v292
    %319 = vmatprep.subr.mxu0 0.0
    %320 = vmatpush1.msra.mxu0 %v293
    %321 = vmatprep.subr.mxu0 0.0
    %322 = vmatpush1.msra.mxu0 %v294
    %323 = vmatprep.subr.mxu0 0.0
    %324 = vmatpush1.msra.mxu0 %v295
    %325 = vmatprep.subr.mxu0 0.0
    %326 = vmatpush1.msra.mxu0 %v296
    %327 = vmatprep.subr.mxu0 0.0
    %328 = vmatpush1.msra.mxu0 %v297
    %329 = vmatprep.subr.mxu0 0.0
    %330 = vmatpush1.msra.mxu0 %v298
    %331 = vmatprep.subr.mxu0 0.0
    %332 = vmatpush1.msra.mxu0 %v299
    %333 = vmatprep.subr.mxu0 0.0
    %334 = vmatpush1.msra.mxu0 %v300
    %335 = vmatprep.subr.mxu0 0.0
    %336 = vmatpush1.msra.mxu0 %v301
    %337 = vmatprep.subr.mxu0 0.0
    %338 = vmatpush1.msra.mxu0 %v302
    %339 = vmatprep.subr.mxu0 0.0
    %340 = vmatpush1.msra.mxu0 %v303
    %341 = vmatprep.subr.mxu0 0.0
    %342 = vmatpush1.msra.mxu0 %v304
    %343 = vmatprep.subr.mxu0 0.0
    %344 = vmatpush1.msra.mxu0 %v305
    %345 = vmatprep.subr.mxu0 0.0
    %346 = vmatpush1.msra.mxu0 %v306
    %347 = vmatprep.subr.mxu0 0.0
    %348 = vmatpush1.msra.mxu0 0.0
    %349 = vmatprep.subr.mxu0 0.0
    %350 = vmatpush1.msra.mxu0 0.0
    %351 = vmatprep.subr.mxu0 0.0
    %352 = vmatpush1.msra.mxu0 0.0
    %353 = vmatprep.subr.mxu0 0.0
    %354 = vmatpush1.msra.mxu0 0.0
    %355 = vmatprep.subr.mxu0 0.0
    %356 = vmatpush1.msra.mxu0 0.0
    %357 = vmatprep.subr.mxu0 0.0
    %358 = vmatpush1.msra.mxu0 0.0
    %359 = vmatprep.subr.mxu0 0.0
    %360 = vmatpush1.msra.mxu0 0.0
    %361 = vmatprep.subr.mxu0 0.0
    %362 = vmatpush1.msra.mxu0 0.0
    %363 = vmatprep.subr.mxu0 0.0
    %364 = vmatpush1.msra.mxu0 0.0
    %365 = vmatprep.subr.mxu0 0.0
    %366 = vmatpush1.msra.mxu0 0.0
    %367 = vmatprep.subr.mxu0 0.0
    %368 = vmatpush1.msra.mxu0 0.0
    %369 = vmatprep.subr.mxu0 0.0
    %370 = vmatpush1.msra.mxu0 0.0
    %371 = vmatprep.subr.mxu0 0.0
    %372 = vmatpush1.msra.mxu0 0.0
    %373 = vmatprep.subr.mxu0 0.0
    %374 = vmatpush1.msra.mxu0 0.0
    %375 = vmatprep.subr.mxu0 0.0
    %376 = vmatpush1.msra.mxu0 0.0
    %377 = vmatprep.subr.mxu0 0.0
    %378 = vmatpush1.msra.mxu0 0.0
    %379 = vmatprep.mubr.f32.mxu0 0.0
    %380 = vmatmul.mubr.f32.gmra.mrb[0].mxu0 %v289
    %v381 = vpop.f32.mrb[0].mxu0
    %v382 = vadd.f32 %v313, %v381
    %v383 = vpop.f32.mrb[0].mxu0
    %384 = vdwg.mxu0
    %v385 = vrot.slane %v382, 4
    %v386 = vadd.f32 %v382, %v385
    %v387 = vrot.slane %v386, 2
    %v388 = vadd.f32 %v386, %v387
    %v389 = vrot.slane %v388, 1
    %v390 = vadd.f32 %v388, %v389
    %v391 = vmul.f32 %v390, %v257
    %v392 = vsub.f32 %v382, %v391
    %v393 = vmul.f32 %v392, %v392
    %v394 = vrot.slane %v393, 4
    %v395 = vadd.f32 %v393, %v394
    %v396 = vrot.slane %v395, 2
    %v397 = vadd.f32 %v395, %v396
    %v398 = vrot.slane %v397, 1
    %v399 = vadd.f32 %v397, %v398
    %v400 = vmul.f32 %v399, %v257
    %s401 = scalar_lea.vmem %s4, 1
    %v402 = vld [vmem:[%s401] sm:$0x1]
    %v403 = vadd.f32 %v400, 1e-05
    %v404 = vrsqrt.pop %v403
    %v405 = vmul.f32 %v392, %v404
    %v407 = vlaneseq
    %v408 = vshrl.u32 %v407, 7
    %v409 = vsub.s32 0, %v408
    %v410 = vrot.slane %v402, %v409
    %v412 = vmul.f32 %v410, %v405
    %s413 = scalar_lea.vmem %s5, 1
    %v414 = vld [vmem:[%s413] sm:$0x1]
    %v416 = vlaneseq
    %v417 = vshrl.u32 %v416, 7
    %v418 = vsub.s32 0, %v417
    %v419 = vrot.slane %v414, %v418
    %v421 = vadd.f32 %v412, %v419
    %vm422 = vcmp.ge.f32.partialorder %v421, 0.0
    %v423 = vmul.f32 %v421, 0.2
    %v424 = vsel %vm422, %v421, %v423
    %s425 = scalar_lea.vmem [#allocation2], 256
    %v426 = vld [vmem:[%s425] sm:$0xff]
    %v427 = vld [vmem:[%s425 + $0x8] sm:$0xff]
    %v428 = vld [vmem:[%s425 + $0x10] sm:$0xff]
    %v429 = vld [vmem:[%s425 + $0x18] sm:$0xff]
    %v430 = vld [vmem:[%s425 + $0x20] sm:$0xff]
    %v431 = vld [vmem:[%s425 + $0x28] sm:$0xff]
    %v432 = vld [vmem:[%s425 + $0x30] sm:$0xff]
    %v433 = vld [vmem:[%s425 + $0x38] sm:$0xff]
    %v434 = vld [vmem:[%s425 + $0x40] sm:$0xff]
    %v435 = vld [vmem:[%s425 + $0x48] sm:$0xff]
    %v436 = vld [vmem:[%s425 + $0x50] sm:$0xff]
    %v437 = vld [vmem:[%s425 + $0x58] sm:$0xff]
    %v438 = vld [vmem:[%s425 + $0x60] sm:$0xff]
    %v439 = vld [vmem:[%s425 + $0x68] sm:$0xff]
    %v440 = vld [vmem:[%s425 + $0x70] sm:$0xff]
    %v441 = vld [vmem:[%s425 + $0x78] sm:$0xff]
    %s442 = scalar_lea.vmem %s3, 2
    %v443 = vld [vmem:[%s442] sm:$0x1]
    %v445 = vlaneseq
    %v446 = vshrl.u32 %v445, 7
    %v447 = vsub.s32 0, %v446
    %v448 = vrot.slane %v443, %v447
    %450 = vmatprep.subr.mxu0 0.0
    %451 = vmatpush1.msra.mxu0 %v426
    %452 = vmatprep.subr.mxu0 0.0
    %453 = vmatpush1.msra.mxu0 %v427
    %454 = vmatprep.subr.mxu0 0.0
    %455 = vmatpush1.msra.mxu0 %v428
    %456 = vmatprep.subr.mxu0 0.0
    %457 = vmatpush1.msra.mxu0 %v429
    %458 = vmatprep.subr.mxu0 0.0
    %459 = vmatpush1.msra.mxu0 %v430
    %460 = vmatprep.subr.mxu0 0.0
    %461 = vmatpush1.msra.mxu0 %v431
    %462 = vmatprep.subr.mxu0 0.0
    %463 = vmatpush1.msra.mxu0 %v432
    %464 = vmatprep.subr.mxu0 0.0
    %465 = vmatpush1.msra.mxu0 %v433
    %466 = vmatprep.subr.mxu0 0.0
    %467 = vmatpush1.msra.mxu0 %v434
    %468 = vmatprep.subr.mxu0 0.0
    %469 = vmatpush1.msra.mxu0 %v435
    %470 = vmatprep.subr.mxu0 0.0
    %471 = vmatpush1.msra.mxu0 %v436
    %472 = vmatprep.subr.mxu0 0.0
    %473 = vmatpush1.msra.mxu0 %v437
    %474 = vmatprep.subr.mxu0 0.0
    %475 = vmatpush1.msra.mxu0 %v438
    %476 = vmatprep.subr.mxu0 0.0
    %477 = vmatpush1.msra.mxu0 %v439
    %478 = vmatprep.subr.mxu0 0.0
    %479 = vmatpush1.msra.mxu0 %v440
    %480 = vmatprep.subr.mxu0 0.0
    %481 = vmatpush1.msra.mxu0 %v441
    %482 = vmatprep.subr.mxu0 0.0
    %483 = vmatpush1.msra.mxu0 0.0
    %484 = vmatprep.subr.mxu0 0.0
    %485 = vmatpush1.msra.mxu0 0.0
    %486 = vmatprep.subr.mxu0 0.0
    %487 = vmatpush1.msra.mxu0 0.0
    %488 = vmatprep.subr.mxu0 0.0
    %489 = vmatpush1.msra.mxu0 0.0
    %490 = vmatprep.subr.mxu0 0.0
    %491 = vmatpush1.msra.mxu0 0.0
    %492 = vmatprep.subr.mxu0 0.0
    %493 = vmatpush1.msra.mxu0 0.0
    %494 = vmatprep.subr.mxu0 0.0
    %495 = vmatpush1.msra.mxu0 0.0
    %496 = vmatprep.subr.mxu0 0.0
    %497 = vmatpush1.msra.mxu0 0.0
    %498 = vmatprep.subr.mxu0 0.0
    %499 = vmatpush1.msra.mxu0 0.0
    %500 = vmatprep.subr.mxu0 0.0
    %501 = vmatpush1.msra.mxu0 0.0
    %502 = vmatprep.subr.mxu0 0.0
    %503 = vmatpush1.msra.mxu0 0.0
    %504 = vmatprep.subr.mxu0 0.0
    %505 = vmatpush1.msra.mxu0 0.0
    %506 = vmatprep.subr.mxu0 0.0
    %507 = vmatpush1.msra.mxu0 0.0
    %508 = vmatprep.subr.mxu0 0.0
    %509 = vmatpush1.msra.mxu0 0.0
    %510 = vmatprep.subr.mxu0 0.0
    %511 = vmatpush1.msra.mxu0 0.0
    %512 = vmatprep.subr.mxu0 0.0
    %513 = vmatpush1.msra.mxu0 0.0
    %514 = vmatprep.mubr.f32.mxu0 0.0
    %515 = vmatmul.mubr.f32.gmra.mrb[0].mxu0 %v424
    %v516 = vpop.f32.mrb[0].mxu0
    %v517 = vadd.f32 %v448, %v516
    %v518 = vpop.f32.mrb[0].mxu0
    %519 = vdwg.mxu0
    %v520 = vrot.slane %v517, 4
    %v521 = vadd.f32 %v517, %v520
    %v522 = vrot.slane %v521, 2
    %v523 = vadd.f32 %v521, %v522
    %v524 = vrot.slane %v523, 1
    %v525 = vadd.f32 %v523, %v524
    %v526 = vmul.f32 %v525, %v257
    %v527 = vsub.f32 %v517, %v526
    %v528 = vmul.f32 %v527, %v527
    %v529 = vrot.slane %v528, 4
    %v530 = vadd.f32 %v528, %v529
    %v531 = vrot.slane %v530, 2
    %v532 = vadd.f32 %v530, %v531
    %v533 = vrot.slane %v532, 1
    %v534 = vadd.f32 %v532, %v533
    %v535 = vmul.f32 %v534, %v257
    %s536 = scalar_lea.vmem %s4, 2
    %v537 = vld [vmem:[%s536] sm:$0x1]
    %v538 = vadd.f32 %v535, 1e-05
    %v539 = vrsqrt.pop %v538
    %v540 = vmul.f32 %v527, %v539
    %v542 = vlaneseq
    %v543 = vshrl.u32 %v542, 7
    %v544 = vsub.s32 0, %v543
    %v545 = vrot.slane %v537, %v544
    %v547 = vmul.f32 %v545, %v540
    %s548 = scalar_lea.vmem %s5, 2
    %v549 = vld [vmem:[%s548] sm:$0x1]
    %v551 = vlaneseq
    %v552 = vshrl.u32 %v551, 7
    %v553 = vsub.s32 0, %v552
    %v554 = vrot.slane %v549, %v553
    %v556 = vadd.f32 %v547, %v554
    %vm557 = vcmp.ge.f32.partialorder %v556, 0.0
    %v558 = vmul.f32 %v556, 0.2
    %v559 = vsel %vm557, %v556, %v558
    %s560 = scalar_lea.vmem [#allocation2], 384
    %v561 = vld [vmem:[%s560] sm:$0xff]
    %v562 = vld [vmem:[%s560 + $0x8] sm:$0xff]
    %v563 = vld [vmem:[%s560 + $0x10] sm:$0xff]
    %v564 = vld [vmem:[%s560 + $0x18] sm:$0xff]
    %v565 = vld [vmem:[%s560 + $0x20] sm:$0xff]
    %v566 = vld [vmem:[%s560 + $0x28] sm:$0xff]
    %v567 = vld [vmem:[%s560 + $0x30] sm:$0xff]
    %v568 = vld [vmem:[%s560 + $0x38] sm:$0xff]
    %v569 = vld [vmem:[%s560 + $0x40] sm:$0xff]
    %v570 = vld [vmem:[%s560 + $0x48] sm:$0xff]
    %v571 = vld [vmem:[%s560 + $0x50] sm:$0xff]
    %v572 = vld [vmem:[%s560 + $0x58] sm:$0xff]
    %v573 = vld [vmem:[%s560 + $0x60] sm:$0xff]
    %v574 = vld [vmem:[%s560 + $0x68] sm:$0xff]
    %v575 = vld [vmem:[%s560 + $0x70] sm:$0xff]
    %v576 = vld [vmem:[%s560 + $0x78] sm:$0xff]
    %s577 = scalar_lea.vmem %s3, 3
    %v578 = vld [vmem:[%s577] sm:$0x1]
    %v580 = vlaneseq
    %v581 = vshrl.u32 %v580, 7
    %v582 = vsub.s32 0, %v581
    %v583 = vrot.slane %v578, %v582
    %585 = vmatprep.subr.mxu0 0.0
    %586 = vmatpush1.msra.mxu0 %v561
    %587 = vmatprep.subr.mxu0 0.0
    %588 = vmatpush1.msra.mxu0 %v562
    %589 = vmatprep.subr.mxu0 0.0
    %590 = vmatpush1.msra.mxu0 %v563
    %591 = vmatprep.subr.mxu0 0.0
    %592 = vmatpush1.msra.mxu0 %v564
    %593 = vmatprep.subr.mxu0 0.0
    %594 = vmatpush1.msra.mxu0 %v565
    %595 = vmatprep.subr.mxu0 0.0
    %596 = vmatpush1.msra.mxu0 %v566
    %597 = vmatprep.subr.mxu0 0.0
    %598 = vmatpush1.msra.mxu0 %v567
    %599 = vmatprep.subr.mxu0 0.0
    %600 = vmatpush1.msra.mxu0 %v568
    %601 = vmatprep.subr.mxu0 0.0
    %602 = vmatpush1.msra.mxu0 %v569
    %603 = vmatprep.subr.mxu0 0.0
    %604 = vmatpush1.msra.mxu0 %v570
    %605 = vmatprep.subr.mxu0 0.0
    %606 = vmatpush1.msra.mxu0 %v571
    %607 = vmatprep.subr.mxu0 0.0
    %608 = vmatpush1.msra.mxu0 %v572
    %609 = vmatprep.subr.mxu0 0.0
    %610 = vmatpush1.msra.mxu0 %v573
    %611 = vmatprep.subr.mxu0 0.0
    %612 = vmatpush1.msra.mxu0 %v574
    %613 = vmatprep.subr.mxu0 0.0
    %614 = vmatpush1.msra.mxu0 %v575
    %615 = vmatprep.subr.mxu0 0.0
    %616 = vmatpush1.msra.mxu0 %v576
    %617 = vmatprep.subr.mxu0 0.0
    %618 = vmatpush1.msra.mxu0 0.0
    %619 = vmatprep.subr.mxu0 0.0
    %620 = vmatpush1.msra.mxu0 0.0
    %621 = vmatprep.subr.mxu0 0.0
    %622 = vmatpush1.msra.mxu0 0.0
    %623 = vmatprep.subr.mxu0 0.0
    %624 = vmatpush1.msra.mxu0 0.0
    %625 = vmatprep.subr.mxu0 0.0
    %626 = vmatpush1.msra.mxu0 0.0
    %627 = vmatprep.subr.mxu0 0.0
    %628 = vmatpush1.msra.mxu0 0.0
    %629 = vmatprep.subr.mxu0 0.0
    %630 = vmatpush1.msra.mxu0 0.0
    %631 = vmatprep.subr.mxu0 0.0
    %632 = vmatpush1.msra.mxu0 0.0
    %633 = vmatprep.subr.mxu0 0.0
    %634 = vmatpush1.msra.mxu0 0.0
    %635 = vmatprep.subr.mxu0 0.0
    %636 = vmatpush1.msra.mxu0 0.0
    %637 = vmatprep.subr.mxu0 0.0
    %638 = vmatpush1.msra.mxu0 0.0
    %639 = vmatprep.subr.mxu0 0.0
    %640 = vmatpush1.msra.mxu0 0.0
    %641 = vmatprep.subr.mxu0 0.0
    %642 = vmatpush1.msra.mxu0 0.0
    %643 = vmatprep.subr.mxu0 0.0
    %644 = vmatpush1.msra.mxu0 0.0
    %645 = vmatprep.subr.mxu0 0.0
    %646 = vmatpush1.msra.mxu0 0.0
    %647 = vmatprep.subr.mxu0 0.0
    %648 = vmatpush1.msra.mxu0 0.0
    %649 = vmatprep.mubr.f32.mxu0 0.0
    %650 = vmatmul.mubr.f32.gmra.mrb[0].mxu0 %v559
    %v651 = vpop.f32.mrb[0].mxu0
    %v652 = vadd.f32 %v583, %v651
    %v653 = vpop.f32.mrb[0].mxu0
    %654 = vdwg.mxu0
    %v655 = vld [vmem:[%s1] sm:$0xff]
    %v656 = vld [vmem:[#allocation5] sm:$0xff]
    %v657 = vld [vmem:[#allocation5 + $0x8] sm:$0xff]
    %v658 = vld [vmem:[#allocation5 + $0x10] sm:$0xff]
    %v659 = vld [vmem:[#allocation5 + $0x18] sm:$0xff]
    %v660 = vld [vmem:[#allocation5 + $0x20] sm:$0xff]
    %v661 = vld [vmem:[#allocation5 + $0x28] sm:$0xff]
    %v662 = vld [vmem:[#allocation5 + $0x30] sm:$0xff]
    %v663 = vld [vmem:[#allocation5 + $0x38] sm:$0xff]
    %v664 = vld [vmem:[#allocation5 + $0x40] sm:$0xff]
    %v665 = vld [vmem:[#allocation5 + $0x48] sm:$0xff]
    %v666 = vld [vmem:[#allocation5 + $0x50] sm:$0xff]
    %v667 = vld [vmem:[#allocation5 + $0x58] sm:$0xff]
    %v668 = vld [vmem:[#allocation5 + $0x60] sm:$0xff]
    %v669 = vld [vmem:[#allocation5 + $0x68] sm:$0xff]
    %v670 = vld [vmem:[#allocation5 + $0x70] sm:$0xff]
    %v671 = vld [vmem:[#allocation5 + $0x78] sm:$0xff]
    %v672 = vld [vmem:[%s7] sm:$0x1]
    %v674 = vlaneseq
    %v675 = vshrl.u32 %v674, 7
    %v676 = vsub.s32 0, %v675
    %v677 = vrot.slane %v672, %v676
    %679 = vmatprep.subr.mxu0 0.0
    %680 = vmatpush1.msra.mxu0 %v656
    %681 = vmatprep.subr.mxu0 0.0
    %682 = vmatpush1.msra.mxu0 %v657
    %683 = vmatprep.subr.mxu0 0.0
    %684 = vmatpush1.msra.mxu0 %v658
    %685 = vmatprep.subr.mxu0 0.0
    %686 = vmatpush1.msra.mxu0 %v659
    %687 = vmatprep.subr.mxu0 0.0
    %688 = vmatpush1.msra.mxu0 %v660
    %689 = vmatprep.subr.mxu0 0.0
    %690 = vmatpush1.msra.mxu0 %v661
    %691 = vmatprep.subr.mxu0 0.0
    %692 = vmatpush1.msra.mxu0 %v662
    %693 = vmatprep.subr.mxu0 0.0
    %694 = vmatpush1.msra.mxu0 %v663
    %695 = vmatprep.subr.mxu0 0.0
    %696 = vmatpush1.msra.mxu0 %v664
    %697 = vmatprep.subr.mxu0 0.0
    %698 = vmatpush1.msra.mxu0 %v665
    %699 = vmatprep.subr.mxu0 0.0
    %700 = vmatpush1.msra.mxu0 %v666
    %701 = vmatprep.subr.mxu0 0.0
    %702 = vmatpush1.msra.mxu0 %v667
    %703 = vmatprep.subr.mxu0 0.0
    %704 = vmatpush1.msra.mxu0 %v668
    %705 = vmatprep.subr.mxu0 0.0
    %706 = vmatpush1.msra.mxu0 %v669
    %707 = vmatprep.subr.mxu0 0.0
    %708 = vmatpush1.msra.mxu0 %v670
    %709 = vmatprep.subr.mxu0 0.0
    %710 = vmatpush1.msra.mxu0 %v671
    %711 = vmatprep.subr.mxu0 0.0
    %712 = vmatpush1.msra.mxu0 0.0
    %713 = vmatprep.subr.mxu0 0.0
    %714 = vmatpush1.msra.mxu0 0.0
    %715 = vmatprep.subr.mxu0 0.0
    %716 = vmatpush1.msra.mxu0 0.0
    %717 = vmatprep.subr.mxu0 0.0
    %718 = vmatpush1.msra.mxu0 0.0
    %719 = vmatprep.subr.mxu0 0.0
    %720 = vmatpush1.msra.mxu0 0.0
    %721 = vmatprep.subr.mxu0 0.0
    %722 = vmatpush1.msra.mxu0 0.0
    %723 = vmatprep.subr.mxu0 0.0
    %724 = vmatpush1.msra.mxu0 0.0
    %725 = vmatprep.subr.mxu0 0.0
    %726 = vmatpush1.msra.mxu0 0.0
    %727 = vmatprep.subr.mxu0 0.0
    %728 = vmatpush1.msra.mxu0 0.0
    %729 = vmatprep.subr.mxu0 0.0
    %730 = vmatpush1.msra.mxu0 0.0
    %731 = vmatprep.subr.mxu0 0.0
    %732 = vmatpush1.msra.mxu0 0.0
    %733 = vmatprep.subr.mxu0 0.0
    %734 = vmatpush1.msra.mxu0 0.0
    %735 = vmatprep.subr.mxu0 0.0
    %736 = vmatpush1.msra.mxu0 0.0
    %737 = vmatprep.subr.mxu0 0.0
    %738 = vmatpush1.msra.mxu0 0.0
    %739 = vmatprep.subr.mxu0 0.0
    %740 = vmatpush1.msra.mxu0 0.0
    %741 = vmatprep.subr.mxu0 0.0
    %742 = vmatpush1.msra.mxu0 0.0
    %743 = vmatprep.mubr.f32.mxu0 0.0
    %744 = vmatmul.mubr.f32.gmra.mrb[0].mxu0 %v655
    %v745 = vpop.f32.mrb[0].mxu0
    %v746 = vadd.f32 %v677, %v745
    %v747 = vpop.f32.mrb[0].mxu0
    %748 = vdwg.mxu0
    %v749 = vrot.slane %v746, 4
    %v750 = vadd.f32 %v746, %v749
    %v751 = vrot.slane %v750, 2
    %v752 = vadd.f32 %v750, %v751
    %v753 = vrot.slane %v752, 1
    %v754 = vadd.f32 %v752, %v753
    %v755 = vmul.f32 %v754, %v257
    %v756 = vsub.f32 %v746, %v755
    %v757 = vmul.f32 %v756, %v756
    %v758 = vrot.slane %v757, 4
    %v759 = vadd.f32 %v757, %v758
    %v760 = vrot.slane %v759, 2
    %v761 = vadd.f32 %v759, %v760
    %v762 = vrot.slane %v761, 1
    %v763 = vadd.f32 %v761, %v762
    %v764 = vmul.f32 %v763, %v257
    %v765 = vld [vmem:[%s8] sm:$0x1]
    %v766 = vadd.f32 %v764, 1e-05
    %v767 = vrsqrt.pop %v766
    %v768 = vmul.f32 %v756, %v767
    %v770 = vlaneseq
    %v771 = vshrl.u32 %v770, 7
    %v772 = vsub.s32 0, %v771
    %v773 = vrot.slane %v765, %v772
    %v775 = vmul.f32 %v773, %v768
    %v776 = vld [vmem:[%s9] sm:$0x1]
    %v778 = vlaneseq
    %v779 = vshrl.u32 %v778, 7
    %v780 = vsub.s32 0, %v779
    %v781 = vrot.slane %v776, %v780
    %v783 = vadd.f32 %v775, %v781
    %vm784 = vcmp.ge.f32.partialorder %v783, 0.0
    %v785 = vmul.f32 %v783, 0.2
    %v786 = vsel %vm784, %v783, %v785
    %s787 = scalar_lea.vmem [#allocation5], 128
    %v788 = vld [vmem:[%s787] sm:$0xff]
    %v789 = vld [vmem:[%s787 + $0x8] sm:$0xff]
    %v790 = vld [vmem:[%s787 + $0x10] sm:$0xff]
    %v791 = vld [vmem:[%s787 + $0x18] sm:$0xff]
    %v792 = vld [vmem:[%s787 + $0x20] sm:$0xff]
    %v793 = vld [vmem:[%s787 + $0x28] sm:$0xff]
    %v794 = vld [vmem:[%s787 + $0x30] sm:$0xff]
    %v795 = vld [vmem:[%s787 + $0x38] sm:$0xff]
    %v796 = vld [vmem:[%s787 + $0x40] sm:$0xff]
    %v797 = vld [vmem:[%s787 + $0x48] sm:$0xff]
    %v798 = vld [vmem:[%s787 + $0x50] sm:$0xff]
    %v799 = vld [vmem:[%s787 + $0x58] sm:$0xff]
    %v800 = vld [vmem:[%s787 + $0x60] sm:$0xff]
    %v801 = vld [vmem:[%s787 + $0x68] sm:$0xff]
    %v802 = vld [vmem:[%s787 + $0x70] sm:$0xff]
    %v803 = vld [vmem:[%s787 + $0x78] sm:$0xff]
    %s804 = scalar_lea.vmem %s7, 1
    %v805 = vld [vmem:[%s804] sm:$0x1]
    %v807 = vlaneseq
    %v808 = vshrl.u32 %v807, 7
    %v809 = vsub.s32 0, %v808
    %v810 = vrot.slane %v805, %v809
    %812 = vmatprep.subr.mxu0 0.0
    %813 = vmatpush1.msra.mxu0 %v788
    %814 = vmatprep.subr.mxu0 0.0
    %815 = vmatpush1.msra.mxu0 %v789
    %816 = vmatprep.subr.mxu0 0.0
    %817 = vmatpush1.msra.mxu0 %v790
    %818 = vmatprep.subr.mxu0 0.0
    %819 = vmatpush1.msra.mxu0 %v791
    %820 = vmatprep.subr.mxu0 0.0
    %821 = vmatpush1.msra.mxu0 %v792
    %822 = vmatprep.subr.mxu0 0.0
    %823 = vmatpush1.msra.mxu0 %v793
    %824 = vmatprep.subr.mxu0 0.0
    %825 = vmatpush1.msra.mxu0 %v794
    %826 = vmatprep.subr.mxu0 0.0
    %827 = vmatpush1.msra.mxu0 %v795
    %828 = vmatprep.subr.mxu0 0.0
    %829 = vmatpush1.msra.mxu0 %v796
    %830 = vmatprep.subr.mxu0 0.0
    %831 = vmatpush1.msra.mxu0 %v797
    %832 = vmatprep.subr.mxu0 0.0
    %833 = vmatpush1.msra.mxu0 %v798
    %834 = vmatprep.subr.mxu0 0.0
    %835 = vmatpush1.msra.mxu0 %v799
    %836 = vmatprep.subr.mxu0 0.0
    %837 = vmatpush1.msra.mxu0 %v800
    %838 = vmatprep.subr.mxu0 0.0
    %839 = vmatpush1.msra.mxu0 %v801
    %840 = vmatprep.subr.mxu0 0.0
    %841 = vmatpush1.msra.mxu0 %v802
    %842 = vmatprep.subr.mxu0 0.0
    %843 = vmatpush1.msra.mxu0 %v803
    %844 = vmatprep.subr.mxu0 0.0
    %845 = vmatpush1.msra.mxu0 0.0
    %846 = vmatprep.subr.mxu0 0.0
    %847 = vmatpush1.msra.mxu0 0.0
    %848 = vmatprep.subr.mxu0 0.0
    %849 = vmatpush1.msra.mxu0 0.0
    %850 = vmatprep.subr.mxu0 0.0
    %851 = vmatpush1.msra.mxu0 0.0
    %852 = vmatprep.subr.mxu0 0.0
    %853 = vmatpush1.msra.mxu0 0.0
    %854 = vmatprep.subr.mxu0 0.0
    %855 = vmatpush1.msra.mxu0 0.0
    %856 = vmatprep.subr.mxu0 0.0
    %857 = vmatpush1.msra.mxu0 0.0
    %858 = vmatprep.subr.mxu0 0.0
    %859 = vmatpush1.msra.mxu0 0.0
    %860 = vmatprep.subr.mxu0 0.0
    %861 = vmatpush1.msra.mxu0 0.0
    %862 = vmatprep.subr.mxu0 0.0
    %863 = vmatpush1.msra.mxu0 0.0
    %864 = vmatprep.subr.mxu0 0.0
    %865 = vmatpush1.msra.mxu0 0.0
    %866 = vmatprep.subr.mxu0 0.0
    %867 = vmatpush1.msra.mxu0 0.0
    %868 = vmatprep.subr.mxu0 0.0
    %869 = vmatpush1.msra.mxu0 0.0
    %870 = vmatprep.subr.mxu0 0.0
    %871 = vmatpush1.msra.mxu0 0.0
    %872 = vmatprep.subr.mxu0 0.0
    %873 = vmatpush1.msra.mxu0 0.0
    %874 = vmatprep.subr.mxu0 0.0
    %875 = vmatpush1.msra.mxu0 0.0
    %876 = vmatprep.mubr.f32.mxu0 0.0
    %877 = vmatmul.mubr.f32.gmra.mrb[0].mxu0 %v786
    %v878 = vpop.f32.mrb[0].mxu0
    %v879 = vadd.f32 %v810, %v878
    %v880 = vpop.f32.mrb[0].mxu0
    %881 = vdwg.mxu0
    %v882 = vrot.slane %v879, 4
    %v883 = vadd.f32 %v879, %v882
    %v884 = vrot.slane %v883, 2
    %v885 = vadd.f32 %v883, %v884
    %v886 = vrot.slane %v885, 1
    %v887 = vadd.f32 %v885, %v886
    %v888 = vmul.f32 %v887, %v257
    %v889 = vsub.f32 %v879, %v888
    %v890 = vmul.f32 %v889, %v889
    %v891 = vrot.slane %v890, 4
    %v892 = vadd.f32 %v890, %v891
    %v893 = vrot.slane %v892, 2
    %v894 = vadd.f32 %v892, %v893
    %v895 = vrot.slane %v894, 1
    %v896 = vadd.f32 %v894, %v895
    %v897 = vmul.f32 %v896, %v257
    %s898 = scalar_lea.vmem %s8, 1
    %v899 = vld [vmem:[%s898] sm:$0x1]
    %v900 = vadd.f32 %v897, 1e-05
    %v901 = vrsqrt.pop %v900
    %v902 = vmul.f32 %v889, %v901
    %v904 = vlaneseq
    %v905 = vshrl.u32 %v904, 7
    %v906 = vsub.s32 0, %v905
    %v907 = vrot.slane %v899, %v906
    %v909 = vmul.f32 %v907, %v902
    %s910 = scalar_lea.vmem %s9, 1
    %v911 = vld [vmem:[%s910] sm:$0x1]
    %v913 = vlaneseq
    %v914 = vshrl.u32 %v913, 7
    %v915 = vsub.s32 0, %v914
    %v916 = vrot.slane %v911, %v915
    %v918 = vadd.f32 %v909, %v916
    %vm919 = vcmp.ge.f32.partialorder %v918, 0.0
    %v920 = vmul.f32 %v918, 0.2
    %v921 = vsel %vm919, %v918, %v920
    %s922 = scalar_lea.vmem [#allocation5], 256
    %v923 = vld [vmem:[%s922] sm:$0xff]
    %v924 = vld [vmem:[%s922 + $0x8] sm:$0xff]
    %v925 = vld [vmem:[%s922 + $0x10] sm:$0xff]
    %v926 = vld [vmem:[%s922 + $0x18] sm:$0xff]
    %v927 = vld [vmem:[%s922 + $0x20] sm:$0xff]
    %v928 = vld [vmem:[%s922 + $0x28] sm:$0xff]
    %v929 = vld [vmem:[%s922 + $0x30] sm:$0xff]
    %v930 = vld [vmem:[%s922 + $0x38] sm:$0xff]
    %v931 = vld [vmem:[%s922 + $0x40] sm:$0xff]
    %v932 = vld [vmem:[%s922 + $0x48] sm:$0xff]
    %v933 = vld [vmem:[%s922 + $0x50] sm:$0xff]
    %v934 = vld [vmem:[%s922 + $0x58] sm:$0xff]
    %v935 = vld [vmem:[%s922 + $0x60] sm:$0xff]
    %v936 = vld [vmem:[%s922 + $0x68] sm:$0xff]
    %v937 = vld [vmem:[%s922 + $0x70] sm:$0xff]
    %v938 = vld [vmem:[%s922 + $0x78] sm:$0xff]
    %s939 = scalar_lea.vmem %s7, 2
    %v940 = vld [vmem:[%s939] sm:$0x1]
    %v942 = vlaneseq
    %v943 = vshrl.u32 %v942, 7
    %v944 = vsub.s32 0, %v943
    %v945 = vrot.slane %v940, %v944
    %947 = vmatprep.subr.mxu0 0.0
    %948 = vmatpush1.msra.mxu0 %v923
    %949 = vmatprep.subr.mxu0 0.0
    %950 = vmatpush1.msra.mxu0 %v924
    %951 = vmatprep.subr.mxu0 0.0
    %952 = vmatpush1.msra.mxu0 %v925
    %953 = vmatprep.subr.mxu0 0.0
    %954 = vmatpush1.msra.mxu0 %v926
    %955 = vmatprep.subr.mxu0 0.0
    %956 = vmatpush1.msra.mxu0 %v927
    %957 = vmatprep.subr.mxu0 0.0
    %958 = vmatpush1.msra.mxu0 %v928
    %959 = vmatprep.subr.mxu0 0.0
    %960 = vmatpush1.msra.mxu0 %v929
    %961 = vmatprep.subr.mxu0 0.0
    %962 = vmatpush1.msra.mxu0 %v930
    %963 = vmatprep.subr.mxu0 0.0
    %964 = vmatpush1.msra.mxu0 %v931
    %965 = vmatprep.subr.mxu0 0.0
    %966 = vmatpush1.msra.mxu0 %v932
    %967 = vmatprep.subr.mxu0 0.0
    %968 = vmatpush1.msra.mxu0 %v933
    %969 = vmatprep.subr.mxu0 0.0
    %970 = vmatpush1.msra.mxu0 %v934
    %971 = vmatprep.subr.mxu0 0.0
    %972 = vmatpush1.msra.mxu0 %v935
    %973 = vmatprep.subr.mxu0 0.0
    %974 = vmatpush1.msra.mxu0 %v936
    %975 = vmatprep.subr.mxu0 0.0
    %976 = vmatpush1.msra.mxu0 %v937
    %977 = vmatprep.subr.mxu0 0.0
    %978 = vmatpush1.msra.mxu0 %v938
    %979 = vmatprep.subr.mxu0 0.0
    %980 = vmatpush1.msra.mxu0 0.0
    %981 = vmatprep.subr.mxu0 0.0
    %982 = vmatpush1.msra.mxu0 0.0
    %983 = vmatprep.subr.mxu0 0.0
    %984 = vmatpush1.msra.mxu0 0.0
    %985 = vmatprep.subr.mxu0 0.0
    %986 = vmatpush1.msra.mxu0 0.0
    %987 = vmatprep.subr.mxu0 0.0
    %988 = vmatpush1.msra.mxu0 0.0
    %989 = vmatprep.subr.mxu0 0.0
    %990 = vmatpush1.msra.mxu0 0.0
    %991 = vmatprep.subr.mxu0 0.0
    %992 = vmatpush1.msra.mxu0 0.0
    %993 = vmatprep.subr.mxu0 0.0
    %994 = vmatpush1.msra.mxu0 0.0
    %995 = vmatprep.subr.mxu0 0.0
    %996 = vmatpush1.msra.mxu0 0.0
    %997 = vmatprep.subr.mxu0 0.0
    %998 = vmatpush1.msra.mxu0 0.0
    %999 = vmatprep.subr.mxu0 0.0
    %1000 = vmatpush1.msra.mxu0 0.0
    %1001 = vmatprep.subr.mxu0 0.0
    %1002 = vmatpush1.msra.mxu0 0.0
    %1003 = vmatprep.subr.mxu0 0.0
    %1004 = vmatpush1.msra.mxu0 0.0
    %1005 = vmatprep.subr.mxu0 0.0
    %1006 = vmatpush1.msra.mxu0 0.0
    %1007 = vmatprep.subr.mxu0 0.0
    %1008 = vmatpush1.msra.mxu0 0.0
    %1009 = vmatprep.subr.mxu0 0.0
    %1010 = vmatpush1.msra.mxu0 0.0
    %1011 = vmatprep.mubr.f32.mxu0 0.0
    %1012 = vmatmul.mubr.f32.gmra.mrb[0].mxu0 %v921
    %v1013 = vpop.f32.mrb[0].mxu0
    %v1014 = vadd.f32 %v945, %v1013
    %v1015 = vpop.f32.mrb[0].mxu0
    %1016 = vdwg.mxu0
    %v1017 = vrot.slane %v1014, 4
    %v1018 = vadd.f32 %v1014, %v1017
    %v1019 = vrot.slane %v1018, 2
    %v1020 = vadd.f32 %v1018, %v1019
    %v1021 = vrot.slane %v1020, 1
    %v1022 = vadd.f32 %v1020, %v1021
    %v1023 = vmul.f32 %v1022, %v257
    %v1024 = vsub.f32 %v1014, %v1023
    %v1025 = vmul.f32 %v1024, %v1024
    %v1026 = vrot.slane %v1025, 4
    %v1027 = vadd.f32 %v1025, %v1026
    %v1028 = vrot.slane %v1027, 2
    %v1029 = vadd.f32 %v1027, %v1028
    %v1030 = vrot.slane %v1029, 1
    %v1031 = vadd.f32 %v1029, %v1030
    %v1032 = vmul.f32 %v1031, %v257
    %s1033 = scalar_lea.vmem %s8, 2
    %v1034 = vld [vmem:[%s1033] sm:$0x1]
    %v1035 = vadd.f32 %v1032, 1e-05
    %v1036 = vrsqrt.pop %v1035
    %v1037 = vmul.f32 %v1024, %v1036
    %v1039 = vlaneseq
    %v1040 = vshrl.u32 %v1039, 7
    %v1041 = vsub.s32 0, %v1040
    %v1042 = vrot.slane %v1034, %v1041
    %v1044 = vmul.f32 %v1042, %v1037
    %s1045 = scalar_lea.vmem %s9, 2
    %v1046 = vld [vmem:[%s1045] sm:$0x1]
    %v1048 = vlaneseq
    %v1049 = vshrl.u32 %v1048, 7
    %v1050 = vsub.s32 0, %v1049
    %v1051 = vrot.slane %v1046, %v1050
    %v1053 = vadd.f32 %v1044, %v1051
    %vm1054 = vcmp.ge.f32.partialorder %v1053, 0.0
    %v1055 = vmul.f32 %v1053, 0.2
    %v1056 = vsel %vm1054, %v1053, %v1055
    %s1057 = scalar_lea.vmem [#allocation5], 384
    %v1058 = vld [vmem:[%s1057] sm:$0xff]
    %v1059 = vld [vmem:[%s1057 + $0x8] sm:$0xff]
    %v1060 = vld [vmem:[%s1057 + $0x10] sm:$0xff]
    %v1061 = vld [vmem:[%s1057 + $0x18] sm:$0xff]
    %v1062 = vld [vmem:[%s1057 + $0x20] sm:$0xff]
    %v1063 = vld [vmem:[%s1057 + $0x28] sm:$0xff]
    %v1064 = vld [vmem:[%s1057 + $0x30] sm:$0xff]
    %v1065 = vld [vmem:[%s1057 + $0x38] sm:$0xff]
    %v1066 = vld [vmem:[%s1057 + $0x40] sm:$0xff]
    %v1067 = vld [vmem:[%s1057 + $0x48] sm:$0xff]
    %v1068 = vld [vmem:[%s1057 + $0x50] sm:$0xff]
    %v1069 = vld [vmem:[%s1057 + $0x58] sm:$0xff]
    %v1070 = vld [vmem:[%s1057 + $0x60] sm:$0xff]
    %v1071 = vld [vmem:[%s1057 + $0x68] sm:$0xff]
    %v1072 = vld [vmem:[%s1057 + $0x70] sm:$0xff]
    %v1073 = vld [vmem:[%s1057 + $0x78] sm:$0xff]
    %s1074 = scalar_lea.vmem %s7, 3
    %v1075 = vld [vmem:[%s1074] sm:$0x1]
    %v1077 = vlaneseq
    %v1078 = vshrl.u32 %v1077, 7
    %v1079 = vsub.s32 0, %v1078
    %v1080 = vrot.slane %v1075, %v1079
    %1082 = vmatprep.subr.mxu0 0.0
    %1083 = vmatpush1.msra.mxu0 %v1058
    %1084 = vmatprep.subr.mxu0 0.0
    %1085 = vmatpush1.msra.mxu0 %v1059
    %1086 = vmatprep.subr.mxu0 0.0
    %1087 = vmatpush1.msra.mxu0 %v1060
    %1088 = vmatprep.subr.mxu0 0.0
    %1089 = vmatpush1.msra.mxu0 %v1061
    %1090 = vmatprep.subr.mxu0 0.0
    %1091 = vmatpush1.msra.mxu0 %v1062
    %1092 = vmatprep.subr.mxu0 0.0
    %1093 = vmatpush1.msra.mxu0 %v1063
    %1094 = vmatprep.subr.mxu0 0.0
    %1095 = vmatpush1.msra.mxu0 %v1064
    %1096 = vmatprep.subr.mxu0 0.0
    %1097 = vmatpush1.msra.mxu0 %v1065
    %1098 = vmatprep.subr.mxu0 0.0
    %1099 = vmatpush1.msra.mxu0 %v1066
    %1100 = vmatprep.subr.mxu0 0.0
    %1101 = vmatpush1.msra.mxu0 %v1067
    %1102 = vmatprep.subr.mxu0 0.0
    %1103 = vmatpush1.msra.mxu0 %v1068
    %1104 = vmatprep.subr.mxu0 0.0
    %1105 = vmatpush1.msra.mxu0 %v1069
    %1106 = vmatprep.subr.mxu0 0.0
    %1107 = vmatpush1.msra.mxu0 %v1070
    %1108 = vmatprep.subr.mxu0 0.0
    %1109 = vmatpush1.msra.mxu0 %v1071
    %1110 = vmatprep.subr.mxu0 0.0
    %1111 = vmatpush1.msra.mxu0 %v1072
    %1112 = vmatprep.subr.mxu0 0.0
    %1113 = vmatpush1.msra.mxu0 %v1073
    %1114 = vmatprep.subr.mxu0 0.0
    %1115 = vmatpush1.msra.mxu0 0.0
    %1116 = vmatprep.subr.mxu0 0.0
    %1117 = vmatpush1.msra.mxu0 0.0
    %1118 = vmatprep.subr.mxu0 0.0
    %1119 = vmatpush1.msra.mxu0 0.0
    %1120 = vmatprep.subr.mxu0 0.0
    %1121 = vmatpush1.msra.mxu0 0.0
    %1122 = vmatprep.subr.mxu0 0.0
    %1123 = vmatpush1.msra.mxu0 0.0
    %1124 = vmatprep.subr.mxu0 0.0
    %1125 = vmatpush1.msra.mxu0 0.0
    %1126 = vmatprep.subr.mxu0 0.0
    %1127 = vmatpush1.msra.mxu0 0.0
    %1128 = vmatprep.subr.mxu0 0.0
    %1129 = vmatpush1.msra.mxu0 0.0
    %1130 = vmatprep.subr.mxu0 0.0
    %1131 = vmatpush1.msra.mxu0 0.0
    %1132 = vmatprep.subr.mxu0 0.0
    %1133 = vmatpush1.msra.mxu0 0.0
    %1134 = vmatprep.subr.mxu0 0.0
    %1135 = vmatpush1.msra.mxu0 0.0
    %1136 = vmatprep.subr.mxu0 0.0
    %1137 = vmatpush1.msra.mxu0 0.0
    %1138 = vmatprep.subr.mxu0 0.0
    %1139 = vmatpush1.msra.mxu0 0.0
    %1140 = vmatprep.subr.mxu0 0.0
    %1141 = vmatpush1.msra.mxu0 0.0
    %1142 = vmatprep.subr.mxu0 0.0
    %1143 = vmatpush1.msra.mxu0 0.0
    %1144 = vmatprep.subr.mxu0 0.0
    %1145 = vmatpush1.msra.mxu0 0.0
    %1146 = vmatprep.mubr.f32.mxu0 0.0
    %1147 = vmatmul.mubr.f32.gmra.mrb[0].mxu0 %v1056
    %v1148 = vpop.f32.mrb[0].mxu0
    %v1149 = vadd.f32 %v1080, %v1148
    %v1150 = vpop.f32.mrb[0].mxu0
    %1151 = vdwg.mxu0
    %1152 = vst [vmem:[%s24] sm:$0xff] %v652
    %1153 = vst [vmem:[%s25] sm:$0xff] %v1149
    %v1154 = vld [vmem:[#allocation10] sm:$0xff]
    %v1155 = vld [vmem:[#allocation10 + $0x8] sm:$0xff]
    %v1156 = vld [vmem:[#allocation10 + $0x10] sm:$0xff]
    %v1157 = vld [vmem:[#allocation10 + $0x18] sm:$0xff]
    %v1158 = vld [vmem:[#allocation10 + $0x20] sm:$0xff]
    %v1159 = vld [vmem:[#allocation10 + $0x28] sm:$0xff]
    %v1160 = vld [vmem:[#allocation10 + $0x30] sm:$0xff]
    %v1161 = vld [vmem:[#allocation10 + $0x38] sm:$0xff]
    %v1162 = vld [vmem:[#allocation10 + $0x40] sm:$0xff]
    %v1163 = vld [vmem:[#allocation10 + $0x48] sm:$0xff]
    %v1164 = vld [vmem:[#allocation10 + $0x50] sm:$0xff]
    %v1165 = vld [vmem:[#allocation10 + $0x58] sm:$0xff]
    %v1166 = vld [vmem:[#allocation10 + $0x60] sm:$0xff]
    %v1167 = vld [vmem:[#allocation10 + $0x68] sm:$0xff]
    %v1168 = vld [vmem:[#allocation10 + $0x70] sm:$0xff]
    %v1169 = vld [vmem:[#allocation10 + $0x78] sm:$0xff]
    %v1170 = vld [vmem:[#allocation11] sm:$0xff]
    %v1171 = vld [vmem:[#allocation11 + $0x8] sm:$0xff]
    %v1172 = vld [vmem:[#allocation11 + $0x10] sm:$0xff]
    %v1173 = vld [vmem:[#allocation11 + $0x18] sm:$0xff]
    %v1174 = vld [vmem:[#allocation11 + $0x20] sm:$0xff]
    %v1175 = vld [vmem:[#allocation11 + $0x28] sm:$0xff]
    %v1176 = vld [vmem:[#allocation11 + $0x30] sm:$0xff]
    %v1177 = vld [vmem:[#allocation11 + $0x38] sm:$0xff]
    %v1178 = vld [vmem:[#allocation11 + $0x40] sm:$0xff]
    %v1179 = vld [vmem:[#allocation11 + $0x48] sm:$0xff]
    %v1180 = vld [vmem:[#allocation11 + $0x50] sm:$0xff]
    %v1181 = vld [vmem:[#allocation11 + $0x58] sm:$0xff]
    %v1182 = vld [vmem:[#allocation11 + $0x60] sm:$0xff]
    %v1183 = vld [vmem:[#allocation11 + $0x68] sm:$0xff]
    %v1184 = vld [vmem:[#allocation11 + $0x70] sm:$0xff]
    %v1185 = vld [vmem:[#allocation11 + $0x78] sm:$0xff]
    %1186 = vmatprep.subr.mxu0 0.0
    %1187 = vmatpush1.msra.mxu0 %v1170
    %1188 = vmatprep.subr.mxu0 0.0
    %1189 = vmatpush1.msra.mxu0 %v1171
    %1190 = vmatprep.subr.mxu0 0.0
    %1191 = vmatpush1.msra.mxu0 %v1172
    %1192 = vmatprep.subr.mxu0 0.0
    %1193 = vmatpush1.msra.mxu0 %v1173
    %1194 = vmatprep.subr.mxu0 0.0
    %1195 = vmatpush1.msra.mxu0 %v1174
    %1196 = vmatprep.subr.mxu0 0.0
    %1197 = vmatpush1.msra.mxu0 %v1175
    %1198 = vmatprep.subr.mxu0 0.0
    %1199 = vmatpush1.msra.mxu0 %v1176
    %1200 = vmatprep.subr.mxu0 0.0
    %1201 = vmatpush1.msra.mxu0 %v1177
    %1202 = vmatprep.subr.mxu0 0.0
    %1203 = vmatpush1.msra.mxu0 %v1178
    %1204 = vmatprep.subr.mxu0 0.0
    %1205 = vmatpush1.msra.mxu0 %v1179
    %1206 = vmatprep.subr.mxu0 0.0
    %1207 = vmatpush1.msra.mxu0 %v1180
    %1208 = vmatprep.subr.mxu0 0.0
    %1209 = vmatpush1.msra.mxu0 %v1181
    %1210 = vmatprep.subr.mxu0 0.0
    %1211 = vmatpush1.msra.mxu0 %v1182
    %1212 = vmatprep.subr.mxu0 0.0
    %1213 = vmatpush1.msra.mxu0 %v1183
    %1214 = vmatprep.subr.mxu0 0.0
    %1215 = vmatpush1.msra.mxu0 %v1184
    %1216 = vmatprep.subr.mxu0 0.0
    %1217 = vmatpush1.msra.mxu0 %v1185
    %1218 = vmatprep.subr.mxu0 0.0
    %1219 = vmatpush1.msra.mxu0 0.0
    %1220 = vmatprep.subr.mxu0 0.0
    %1221 = vmatpush1.msra.mxu0 0.0
    %1222 = vmatprep.subr.mxu0 0.0
    %1223 = vmatpush1.msra.mxu0 0.0
    %1224 = vmatprep.subr.mxu0 0.0
    %1225 = vmatpush1.msra.mxu0 0.0
    %1226 = vmatprep.subr.mxu0 0.0
    %1227 = vmatpush1.msra.mxu0 0.0
    %1228 = vmatprep.subr.mxu0 0.0
    %1229 = vmatpush1.msra.mxu0 0.0
    %1230 = vmatprep.subr.mxu0 0.0
    %1231 = vmatpush1.msra.mxu0 0.0
    %1232 = vmatprep.subr.mxu0 0.0
    %1233 = vmatpush1.msra.mxu0 0.0
    %1234 = vmatprep.subr.mxu0 0.0
    %1235 = vmatpush1.msra.mxu0 0.0
    %1236 = vmatprep.subr.mxu0 0.0
    %1237 = vmatpush1.msra.mxu0 0.0
    %1238 = vmatprep.subr.mxu0 0.0
    %1239 = vmatpush1.msra.mxu0 0.0
    %1240 = vmatprep.subr.mxu0 0.0
    %1241 = vmatpush1.msra.mxu0 0.0
    %1242 = vmatprep.subr.mxu0 0.0
    %1243 = vmatpush1.msra.mxu0 0.0
    %1244 = vmatprep.subr.mxu0 0.0
    %1245 = vmatpush1.msra.mxu0 0.0
    %1246 = vmatprep.subr.mxu0 0.0
    %1247 = vmatpush1.msra.mxu0 0.0
    %1248 = vmatprep.subr.mxu0 0.0
    %1249 = vmatpush1.msra.mxu0 0.0
    %1250 = vmatprep.mubr.f32.mxu0 0.0
    %1251 = vmatmul.mubr.f32.gmra.mrb[0].mxu0 %v1149
    %v1252 = vpop.f32.mrb[0].mxu0
    %v1253 = vadd.f32 0.0, %v1252
    %v1254 = vpop.f32.mrb[0].mxu0
    %1255 = vdwg.mxu0
    %1256 = vmatprep.subr.mxu0 0.0
    %1257 = vmatpush1.msra.mxu0 %v1154
    %1258 = vmatprep.subr.mxu0 0.0
    %1259 = vmatpush1.msra.mxu0 %v1155
    %1260 = vmatprep.subr.mxu0 0.0
    %1261 = vmatpush1.msra.mxu0 %v1156
    %1262 = vmatprep.subr.mxu0 0.0
    %1263 = vmatpush1.msra.mxu0 %v1157
    %1264 = vmatprep.subr.mxu0 0.0
    %1265 = vmatpush1.msra.mxu0 %v1158
    %1266 = vmatprep.subr.mxu0 0.0
    %1267 = vmatpush1.msra.mxu0 %v1159
    %1268 = vmatprep.subr.mxu0 0.0
    %1269 = vmatpush1.msra.mxu0 %v1160
    %1270 = vmatprep.subr.mxu0 0.0
    %1271 = vmatpush1.msra.mxu0 %v1161
    %1272 = vmatprep.subr.mxu0 0.0
    %1273 = vmatpush1.msra.mxu0 %v1162
    %1274 = vmatprep.subr.mxu0 0.0
    %1275 = vmatpush1.msra.mxu0 %v1163
    %1276 = vmatprep.subr.mxu0 0.0
    %1277 = vmatpush1.msra.mxu0 %v1164
    %1278 = vmatprep.subr.mxu0 0.0
    %1279 = vmatpush1.msra.mxu0 %v1165
    %1280 = vmatprep.subr.mxu0 0.0
    %1281 = vmatpush1.msra.mxu0 %v1166
    %1282 = vmatprep.subr.mxu0 0.0
    %1283 = vmatpush1.msra.mxu0 %v1167
    %1284 = vmatprep.subr.mxu0 0.0
    %1285 = vmatpush1.msra.mxu0 %v1168
    %1286 = vmatprep.subr.mxu0 0.0
    %1287 = vmatpush1.msra.mxu0 %v1169
    %1288 = vmatprep.subr.mxu0 0.0
    %1289 = vmatpush1.msra.mxu0 0.0
    %1290 = vmatprep.subr.mxu0 0.0
    %1291 = vmatpush1.msra.mxu0 0.0
    %1292 = vmatprep.subr.mxu0 0.0
    %1293 = vmatpush1.msra.mxu0 0.0
    %1294 = vmatprep.subr.mxu0 0.0
    %1295 = vmatpush1.msra.mxu0 0.0
    %1296 = vmatprep.subr.mxu0 0.0
    %1297 = vmatpush1.msra.mxu0 0.0
    %1298 = vmatprep.subr.mxu0 0.0
    %1299 = vmatpush1.msra.mxu0 0.0
    %1300 = vmatprep.subr.mxu0 0.0
    %1301 = vmatpush1.msra.mxu0 0.0
    %1302 = vmatprep.subr.mxu0 0.0
    %1303 = vmatpush1.msra.mxu0 0.0
    %1304 = vmatprep.subr.mxu0 0.0
    %1305 = vmatpush1.msra.mxu0 0.0
    %1306 = vmatprep.subr.mxu0 0.0
    %1307 = vmatpush1.msra.mxu0 0.0
    %1308 = vmatprep.subr.mxu0 0.0
    %1309 = vmatpush1.msra.mxu0 0.0
    %1310 = vmatprep.subr.mxu0 0.0
    %1311 = vmatpush1.msra.mxu0 0.0
    %1312 = vmatprep.subr.mxu0 0.0
    %1313 = vmatpush1.msra.mxu0 0.0
    %1314 = vmatprep.subr.mxu0 0.0
    %1315 = vmatpush1.msra.mxu0 0.0
    %1316 = vmatprep.subr.mxu0 0.0
    %1317 = vmatpush1.msra.mxu0 0.0
    %1318 = vmatprep.subr.mxu0 0.0
    %1319 = vmatpush1.msra.mxu0 0.0
    %1320 = vmatprep.mubr.f32.mxu0 0.0
    %1321 = vmatmul.mubr.f32.gmra.mrb[0].mxu0 %v652
    %v1322 = vpop.f32.mrb[0].mxu0
    %v1323 = vadd.f32 %v1253, %v1322
    %v1324 = vpop.f32.mrb[0].mxu0
    %1325 = vdwg.mxu0
    %v1326 = vld [vmem:[%s20] sm:$0x1]
    %v1328 = vlaneseq
    %v1329 = vshrl.u32 %v1328, 7
    %v1330 = vsub.s32 0, %v1329
    %v1331 = vrot.slane %v1326, %v1330
    %v1333 = vadd.f32 %v1323, %v1331
    %1334 = vst [vmem:[%s23] sm:$0xff] %v1333
    %v1335 = vld [vmem:[#allocation7] sm:$0xff]
    %v1336 = vld [vmem:[#allocation7 + $0x8] sm:$0xff]
    %v1337 = vld [vmem:[#allocation7 + $0x10] sm:$0xff]
    %v1338 = vld [vmem:[#allocation7 + $0x18] sm:$0xff]
    %v1339 = vld [vmem:[#allocation7 + $0x20] sm:$0xff]
    %v1340 = vld [vmem:[#allocation7 + $0x28] sm:$0xff]
    %v1341 = vld [vmem:[#allocation7 + $0x30] sm:$0xff]
    %v1342 = vld [vmem:[#allocation7 + $0x38] sm:$0xff]
    %v1343 = vld [vmem:[#allocation7 + $0x40] sm:$0xff]
    %v1344 = vld [vmem:[#allocation7 + $0x48] sm:$0xff]
    %v1345 = vld [vmem:[#allocation7 + $0x50] sm:$0xff]
    %v1346 = vld [vmem:[#allocation7 + $0x58] sm:$0xff]
    %v1347 = vld [vmem:[#allocation7 + $0x60] sm:$0xff]
    %v1348 = vld [vmem:[#allocation7 + $0x68] sm:$0xff]
    %v1349 = vld [vmem:[#allocation7 + $0x70] sm:$0xff]
    %v1350 = vld [vmem:[#allocation7 + $0x78] sm:$0xff]
    %v1351 = vld [vmem:[%s11] sm:$0x1]
    %v1353 = vlaneseq
    %v1354 = vshrl.u32 %v1353, 7
    %v1355 = vsub.s32 0, %v1354
    %v1356 = vrot.slane %v1351, %v1355
    %1358 = vmatprep.subr.mxu0 0.0
    %1359 = vmatpush1.msra.mxu0 %v1335
    %1360 = vmatprep.subr.mxu0 0.0
    %1361 = vmatpush1.msra.mxu0 %v1336
    %1362 = vmatprep.subr.mxu0 0.0
    %1363 = vmatpush1.msra.mxu0 %v1337
    %1364 = vmatprep.subr.mxu0 0.0
    %1365 = vmatpush1.msra.mxu0 %v1338
    %1366 = vmatprep.subr.mxu0 0.0
    %1367 = vmatpush1.msra.mxu0 %v1339
    %1368 = vmatprep.subr.mxu0 0.0
    %1369 = vmatpush1.msra.mxu0 %v1340
    %1370 = vmatprep.subr.mxu0 0.0
    %1371 = vmatpush1.msra.mxu0 %v1341
    %1372 = vmatprep.subr.mxu0 0.0
    %1373 = vmatpush1.msra.mxu0 %v1342
    %1374 = vmatprep.subr.mxu0 0.0
    %1375 = vmatpush1.msra.mxu0 %v1343
    %1376 = vmatprep.subr.mxu0 0.0
    %1377 = vmatpush1.msra.mxu0 %v1344
    %1378 = vmatprep.subr.mxu0 0.0
    %1379 = vmatpush1.msra.mxu0 %v1345
    %1380 = vmatprep.subr.mxu0 0.0
    %1381 = vmatpush1.msra.mxu0 %v1346
    %1382 = vmatprep.subr.mxu0 0.0
    %1383 = vmatpush1.msra.mxu0 %v1347
    %1384 = vmatprep.subr.mxu0 0.0
    %1385 = vmatpush1.msra.mxu0 %v1348
    %1386 = vmatprep.subr.mxu0 0.0
    %1387 = vmatpush1.msra.mxu0 %v1349
    %1388 = vmatprep.subr.mxu0 0.0
    %1389 = vmatpush1.msra.mxu0 %v1350
    %1390 = vmatprep.subr.mxu0 0.0
    %1391 = vmatpush1.msra.mxu0 0.0
    %1392 = vmatprep.subr.mxu0 0.0
    %1393 = vmatpush1.msra.mxu0 0.0
    %1394 = vmatprep.subr.mxu0 0.0
    %1395 = vmatpush1.msra.mxu0 0.0
    %1396 = vmatprep.subr.mxu0 0.0
    %1397 = vmatpush1.msra.mxu0 0.0
    %1398 = vmatprep.subr.mxu0 0.0
    %1399 = vmatpush1.msra.mxu0 0.0
    %1400 = vmatprep.subr.mxu0 0.0
    %1401 = vmatpush1.msra.mxu0 0.0
    %1402 = vmatprep.subr.mxu0 0.0
    %1403 = vmatpush1.msra.mxu0 0.0
    %1404 = vmatprep.subr.mxu0 0.0
    %1405 = vmatpush1.msra.mxu0 0.0
    %1406 = vmatprep.subr.mxu0 0.0
    %1407 = vmatpush1.msra.mxu0 0.0
    %1408 = vmatprep.subr.mxu0 0.0
    %1409 = vmatpush1.msra.mxu0 0.0
    %1410 = vmatprep.subr.mxu0 0.0
    %1411 = vmatpush1.msra.mxu0 0.0
    %1412 = vmatprep.subr.mxu0 0.0
    %1413 = vmatpush1.msra.mxu0 0.0
    %1414 = vmatprep.subr.mxu0 0.0
    %1415 = vmatpush1.msra.mxu0 0.0
    %1416 = vmatprep.subr.mxu0 0.0
    %1417 = vmatpush1.msra.mxu0 0.0
    %1418 = vmatprep.subr.mxu0 0.0
    %1419 = vmatpush1.msra.mxu0 0.0
    %1420 = vmatprep.subr.mxu0 0.0
    %1421 = vmatpush1.msra.mxu0 0.0
    %1422 = vmatprep.mubr.f32.mxu0 0.0
    %1423 = vmatmul.mubr.f32.gmra.mrb[0].mxu0 %v652
    %v1424 = vpop.f32.mrb[0].mxu0
    %v1425 = vadd.f32 %v1356, %v1424
    %v1426 = vpop.f32.mrb[0].mxu0
    %1427 = vdwg.mxu0
    %v1428 = vrot.slane %v1425, 4
    %v1429 = vadd.f32 %v1425, %v1428
    %v1430 = vrot.slane %v1429, 2
    %v1431 = vadd.f32 %v1429, %v1430
    %v1432 = vrot.slane %v1431, 1
    %v1433 = vadd.f32 %v1431, %v1432
    %v1434 = vmul.f32 %v1433, %v257
    %v1435 = vsub.f32 %v1425, %v1434
    %v1436 = vmul.f32 %v1435, %v1435
    %v1437 = vrot.slane %v1436, 4
    %v1438 = vadd.f32 %v1436, %v1437
    %v1439 = vrot.slane %v1438, 2
    %v1440 = vadd.f32 %v1438, %v1439
    %v1441 = vrot.slane %v1440, 1
    %v1442 = vadd.f32 %v1440, %v1441
    %v1443 = vmul.f32 %v1442, %v257
    %v1444 = vld [vmem:[%s12] sm:$0x1]
    %v1445 = vadd.f32 %v1443, 1e-05
    %v1446 = vrsqrt.pop %v1445
    %v1447 = vmul.f32 %v1435, %v1446
    %v1449 = vlaneseq
    %v1450 = vshrl.u32 %v1449, 7
    %v1451 = vsub.s32 0, %v1450
    %v1452 = vrot.slane %v1444, %v1451
    %v1454 = vmul.f32 %v1452, %v1447
    %v1455 = vld [vmem:[%s13] sm:$0x1]
    %v1457 = vlaneseq
    %v1458 = vshrl.u32 %v1457, 7
    %v1459 = vsub.s32 0, %v1458
    %v1460 = vrot.slane %v1455, %v1459
    %v1462 = vadd.f32 %v1454, %v1460
    %vm1463 = vcmp.ge.f32.partialorder %v1462, 0.0
    %v1464 = vmul.f32 %v1462, 0.2
    %v1465 = vsel %vm1463, %v1462, %v1464
    %s1466 = scalar_lea.vmem [#allocation7], 128
    %v1467 = vld [vmem:[%s1466] sm:$0xff]
    %v1468 = vld [vmem:[%s1466 + $0x8] sm:$0xff]
    %v1469 = vld [vmem:[%s1466 + $0x10] sm:$0xff]
    %v1470 = vld [vmem:[%s1466 + $0x18] sm:$0xff]
    %v1471 = vld [vmem:[%s1466 + $0x20] sm:$0xff]
    %v1472 = vld [vmem:[%s1466 + $0x28] sm:$0xff]
    %v1473 = vld [vmem:[%s1466 + $0x30] sm:$0xff]
    %v1474 = vld [vmem:[%s1466 + $0x38] sm:$0xff]
    %v1475 = vld [vmem:[%s1466 + $0x40] sm:$0xff]
    %v1476 = vld [vmem:[%s1466 + $0x48] sm:$0xff]
    %v1477 = vld [vmem:[%s1466 + $0x50] sm:$0xff]
    %v1478 = vld [vmem:[%s1466 + $0x58] sm:$0xff]
    %v1479 = vld [vmem:[%s1466 + $0x60] sm:$0xff]
    %v1480 = vld [vmem:[%s1466 + $0x68] sm:$0xff]
    %v1481 = vld [vmem:[%s1466 + $0x70] sm:$0xff]
    %v1482 = vld [vmem:[%s1466 + $0x78] sm:$0xff]
    %s1483 = scalar_lea.vmem %s11, 1
    %v1484 = vld [vmem:[%s1483] sm:$0x1]
    %v1486 = vlaneseq
    %v1487 = vshrl.u32 %v1486, 7
    %v1488 = vsub.s32 0, %v1487
    %v1489 = vrot.slane %v1484, %v1488
    %1491 = vmatprep.subr.mxu0 0.0
    %1492 = vmatpush1.msra.mxu0 %v1467
    %1493 = vmatprep.subr.mxu0 0.0
    %1494 = vmatpush1.msra.mxu0 %v1468
    %1495 = vmatprep.subr.mxu0 0.0
    %1496 = vmatpush1.msra.mxu0 %v1469
    %1497 = vmatprep.subr.mxu0 0.0
    %1498 = vmatpush1.msra.mxu0 %v1470
    %1499 = vmatprep.subr.mxu0 0.0
    %1500 = vmatpush1.msra.mxu0 %v1471
    %1501 = vmatprep.subr.mxu0 0.0
    %1502 = vmatpush1.msra.mxu0 %v1472
    %1503 = vmatprep.subr.mxu0 0.0
    %1504 = vmatpush1.msra.mxu0 %v1473
    %1505 = vmatprep.subr.mxu0 0.0
    %1506 = vmatpush1.msra.mxu0 %v1474
    %1507 = vmatprep.subr.mxu0 0.0
    %1508 = vmatpush1.msra.mxu0 %v1475
    %1509 = vmatprep.subr.mxu0 0.0
    %1510 = vmatpush1.msra.mxu0 %v1476
    %1511 = vmatprep.subr.mxu0 0.0
    %1512 = vmatpush1.msra.mxu0 %v1477
    %1513 = vmatprep.subr.mxu0 0.0
    %1514 = vmatpush1.msra.mxu0 %v1478
    %1515 = vmatprep.subr.mxu0 0.0
    %1516 = vmatpush1.msra.mxu0 %v1479
    %1517 = vmatprep.subr.mxu0 0.0
    %1518 = vmatpush1.msra.mxu0 %v1480
    %1519 = vmatprep.subr.mxu0 0.0
    %1520 = vmatpush1.msra.mxu0 %v1481
    %1521 = vmatprep.subr.mxu0 0.0
    %1522 = vmatpush1.msra.mxu0 %v1482
    %1523 = vmatprep.subr.mxu0 0.0
    %1524 = vmatpush1.msra.mxu0 0.0
    %1525 = vmatprep.subr.mxu0 0.0
    %1526 = vmatpush1.msra.mxu0 0.0
    %1527 = vmatprep.subr.mxu0 0.0
    %1528 = vmatpush1.msra.mxu0 0.0
    %1529 = vmatprep.subr.mxu0 0.0
    %1530 = vmatpush1.msra.mxu0 0.0
    %1531 = vmatprep.subr.mxu0 0.0
    %1532 = vmatpush1.msra.mxu0 0.0
    %1533 = vmatprep.subr.mxu0 0.0
    %1534 = vmatpush1.msra.mxu0 0.0
    %1535 = vmatprep.subr.mxu0 0.0
    %1536 = vmatpush1.msra.mxu0 0.0
    %1537 = vmatprep.subr.mxu0 0.0
    %1538 = vmatpush1.msra.mxu0 0.0
    %1539 = vmatprep.subr.mxu0 0.0
    %1540 = vmatpush1.msra.mxu0 0.0
    %1541 = vmatprep.subr.mxu0 0.0
    %1542 = vmatpush1.msra.mxu0 0.0
    %1543 = vmatprep.subr.mxu0 0.0
    %1544 = vmatpush1.msra.mxu0 0.0
    %1545 = vmatprep.subr.mxu0 0.0
    %1546 = vmatpush1.msra.mxu0 0.0
    %1547 = vmatprep.subr.mxu0 0.0
    %1548 = vmatpush1.msra.mxu0 0.0
    %1549 = vmatprep.subr.mxu0 0.0
    %1550 = vmatpush1.msra.mxu0 0.0
    %1551 = vmatprep.subr.mxu0 0.0
    %1552 = vmatpush1.msra.mxu0 0.0
    %1553 = vmatprep.subr.mxu0 0.0
    %1554 = vmatpush1.msra.mxu0 0.0
    %1555 = vmatprep.mubr.f32.mxu0 0.0
    %1556 = vmatmul.mubr.f32.gmra.mrb[0].mxu0 %v1465
    %v1557 = vpop.f32.mrb[0].mxu0
    %v1558 = vadd.f32 %v1489, %v1557
    %v1559 = vpop.f32.mrb[0].mxu0
    %1560 = vdwg.mxu0
    %v1561 = vrot.slane %v1558, 4
    %v1562 = vadd.f32 %v1558, %v1561
    %v1563 = vrot.slane %v1562, 2
    %v1564 = vadd.f32 %v1562, %v1563
    %v1565 = vrot.slane %v1564, 1
    %v1566 = vadd.f32 %v1564, %v1565
    %v1567 = vmul.f32 %v1566, %v257
    %v1568 = vsub.f32 %v1558, %v1567
    %v1569 = vmul.f32 %v1568, %v1568
    %v1570 = vrot.slane %v1569, 4
    %v1571 = vadd.f32 %v1569, %v1570
    %v1572 = vrot.slane %v1571, 2
    %v1573 = vadd.f32 %v1571, %v1572
    %v1574 = vrot.slane %v1573, 1
    %v1575 = vadd.f32 %v1573, %v1574
    %v1576 = vmul.f32 %v1575, %v257
    %s1577 = scalar_lea.vmem %s12, 1
    %v1578 = vld [vmem:[%s1577] sm:$0x1]
    %v1579 = vadd.f32 %v1576, 1e-05
    %v1580 = vrsqrt.pop %v1579
    %v1581 = vmul.f32 %v1568, %v1580
    %v1583 = vlaneseq
    %v1584 = vshrl.u32 %v1583, 7
    %v1585 = vsub.s32 0, %v1584
    %v1586 = vrot.slane %v1578, %v1585
    %v1588 = vmul.f32 %v1586, %v1581
    %s1589 = scalar_lea.vmem %s13, 1
    %v1590 = vld [vmem:[%s1589] sm:$0x1]
    %v1592 = vlaneseq
    %v1593 = vshrl.u32 %v1592, 7
    %v1594 = vsub.s32 0, %v1593
    %v1595 = vrot.slane %v1590, %v1594
    %v1597 = vadd.f32 %v1588, %v1595
    %vm1598 = vcmp.ge.f32.partialorder %v1597, 0.0
    %v1599 = vmul.f32 %v1597, 0.2
    %v1600 = vsel %vm1598, %v1597, %v1599
    %s1601 = scalar_lea.vmem [#allocation7], 256
    %v1602 = vld [vmem:[%s1601] sm:$0xff]
    %v1603 = vld [vmem:[%s1601 + $0x8] sm:$0xff]
    %v1604 = vld [vmem:[%s1601 + $0x10] sm:$0xff]
    %v1605 = vld [vmem:[%s1601 + $0x18] sm:$0xff]
    %v1606 = vld [vmem:[%s1601 + $0x20] sm:$0xff]
    %v1607 = vld [vmem:[%s1601 + $0x28] sm:$0xff]
    %v1608 = vld [vmem:[%s1601 + $0x30] sm:$0xff]
    %v1609 = vld [vmem:[%s1601 + $0x38] sm:$0xff]
    %v1610 = vld [vmem:[%s1601 + $0x40] sm:$0xff]
    %v1611 = vld [vmem:[%s1601 + $0x48] sm:$0xff]
    %v1612 = vld [vmem:[%s1601 + $0x50] sm:$0xff]
    %v1613 = vld [vmem:[%s1601 + $0x58] sm:$0xff]
    %v1614 = vld [vmem:[%s1601 + $0x60] sm:$0xff]
    %v1615 = vld [vmem:[%s1601 + $0x68] sm:$0xff]
    %v1616 = vld [vmem:[%s1601 + $0x70] sm:$0xff]
    %v1617 = vld [vmem:[%s1601 + $0x78] sm:$0xff]
    %s1618 = scalar_lea.vmem %s11, 2
    %v1619 = vld [vmem:[%s1618] sm:$0x1]
    %v1621 = vlaneseq
    %v1622 = vshrl.u32 %v1621, 7
    %v1623 = vsub.s32 0, %v1622
    %v1624 = vrot.slane %v1619, %v1623
    %1626 = vmatprep.subr.mxu0 0.0
    %1627 = vmatpush1.msra.mxu0 %v1602
    %1628 = vmatprep.subr.mxu0 0.0
    %1629 = vmatpush1.msra.mxu0 %v1603
    %1630 = vmatprep.subr.mxu0 0.0
    %1631 = vmatpush1.msra.mxu0 %v1604
    %1632 = vmatprep.subr.mxu0 0.0
    %1633 = vmatpush1.msra.mxu0 %v1605
    %1634 = vmatprep.subr.mxu0 0.0
    %1635 = vmatpush1.msra.mxu0 %v1606
    %1636 = vmatprep.subr.mxu0 0.0
    %1637 = vmatpush1.msra.mxu0 %v1607
    %1638 = vmatprep.subr.mxu0 0.0
    %1639 = vmatpush1.msra.mxu0 %v1608
    %1640 = vmatprep.subr.mxu0 0.0
    %1641 = vmatpush1.msra.mxu0 %v1609
    %1642 = vmatprep.subr.mxu0 0.0
    %1643 = vmatpush1.msra.mxu0 %v1610
    %1644 = vmatprep.subr.mxu0 0.0
    %1645 = vmatpush1.msra.mxu0 %v1611
    %1646 = vmatprep.subr.mxu0 0.0
    %1647 = vmatpush1.msra.mxu0 %v1612
    %1648 = vmatprep.subr.mxu0 0.0
    %1649 = vmatpush1.msra.mxu0 %v1613
    %1650 = vmatprep.subr.mxu0 0.0
    %1651 = vmatpush1.msra.mxu0 %v1614
    %1652 = vmatprep.subr.mxu0 0.0
    %1653 = vmatpush1.msra.mxu0 %v1615
    %1654 = vmatprep.subr.mxu0 0.0
    %1655 = vmatpush1.msra.mxu0 %v1616
    %1656 = vmatprep.subr.mxu0 0.0
    %1657 = vmatpush1.msra.mxu0 %v1617
    %1658 = vmatprep.subr.mxu0 0.0
    %1659 = vmatpush1.msra.mxu0 0.0
    %1660 = vmatprep.subr.mxu0 0.0
    %1661 = vmatpush1.msra.mxu0 0.0
    %1662 = vmatprep.subr.mxu0 0.0
    %1663 = vmatpush1.msra.mxu0 0.0
    %1664 = vmatprep.subr.mxu0 0.0
    %1665 = vmatpush1.msra.mxu0 0.0
    %1666 = vmatprep.subr.mxu0 0.0
    %1667 = vmatpush1.msra.mxu0 0.0
    %1668 = vmatprep.subr.mxu0 0.0
    %1669 = vmatpush1.msra.mxu0 0.0
    %1670 = vmatprep.subr.mxu0 0.0
    %1671 = vmatpush1.msra.mxu0 0.0
    %1672 = vmatprep.subr.mxu0 0.0
    %1673 = vmatpush1.msra.mxu0 0.0
    %1674 = vmatprep.subr.mxu0 0.0
    %1675 = vmatpush1.msra.mxu0 0.0
    %1676 = vmatprep.subr.mxu0 0.0
    %1677 = vmatpush1.msra.mxu0 0.0
    %1678 = vmatprep.subr.mxu0 0.0
    %1679 = vmatpush1.msra.mxu0 0.0
    %1680 = vmatprep.subr.mxu0 0.0
    %1681 = vmatpush1.msra.mxu0 0.0
    %1682 = vmatprep.subr.mxu0 0.0
    %1683 = vmatpush1.msra.mxu0 0.0
    %1684 = vmatprep.subr.mxu0 0.0
    %1685 = vmatpush1.msra.mxu0 0.0
    %1686 = vmatprep.subr.mxu0 0.0
    %1687 = vmatpush1.msra.mxu0 0.0
    %1688 = vmatprep.subr.mxu0 0.0
    %1689 = vmatpush1.msra.mxu0 0.0
    %1690 = vmatprep.mubr.f32.mxu0 0.0
    %1691 = vmatmul.mubr.f32.gmra.mrb[0].mxu0 %v1600
    %v1692 = vpop.f32.mrb[0].mxu0
    %v1693 = vadd.f32 %v1624, %v1692
    %v1694 = vpop.f32.mrb[0].mxu0
    %1695 = vdwg.mxu0
    %v1696 = vrot.slane %v1693, 4
    %v1697 = vadd.f32 %v1693, %v1696
    %v1698 = vrot.slane %v1697, 2
    %v1699 = vadd.f32 %v1697, %v1698
    %v1700 = vrot.slane %v1699, 1
    %v1701 = vadd.f32 %v1699, %v1700
    %v1702 = vmul.f32 %v1701, %v257
    %v1703 = vsub.f32 %v1693, %v1702
    %v1704 = vmul.f32 %v1703, %v1703
    %v1705 = vrot.slane %v1704, 4
    %v1706 = vadd.f32 %v1704, %v1705
    %v1707 = vrot.slane %v1706, 2
    %v1708 = vadd.f32 %v1706, %v1707
    %v1709 = vrot.slane %v1708, 1
    %v1710 = vadd.f32 %v1708, %v1709
    %v1711 = vmul.f32 %v1710, %v257
    %s1712 = scalar_lea.vmem %s12, 2
    %v1713 = vld [vmem:[%s1712] sm:$0x1]
    %v1714 = vadd.f32 %v1711, 1e-05
    %v1715 = vrsqrt.pop %v1714
    %v1716 = vmul.f32 %v1703, %v1715
    %v1718 = vlaneseq
    %v1719 = vshrl.u32 %v1718, 7
    %v1720 = vsub.s32 0, %v1719
    %v1721 = vrot.slane %v1713, %v1720
    %v1723 = vmul.f32 %v1721, %v1716
    %s1724 = scalar_lea.vmem %s13, 2
    %v1725 = vld [vmem:[%s1724] sm:$0x1]
    %v1727 = vlaneseq
    %v1728 = vshrl.u32 %v1727, 7
    %v1729 = vsub.s32 0, %v1728
    %v1730 = vrot.slane %v1725, %v1729
    %v1732 = vadd.f32 %v1723, %v1730
    %vm1733 = vcmp.ge.f32.partialorder %v1732, 0.0
    %v1734 = vmul.f32 %v1732, 0.2
    %v1735 = vsel %vm1733, %v1732, %v1734
    %s1736 = scalar_lea.vmem [#allocation7], 384
    %v1737 = vld [vmem:[%s1736] sm:$0xff]
    %v1738 = vld [vmem:[%s1736 + $0x8] sm:$0xff]
    %v1739 = vld [vmem:[%s1736 + $0x10] sm:$0xff]
    %v1740 = vld [vmem:[%s1736 + $0x18] sm:$0xff]
    %v1741 = vld [vmem:[%s1736 + $0x20] sm:$0xff]
    %v1742 = vld [vmem:[%s1736 + $0x28] sm:$0xff]
    %v1743 = vld [vmem:[%s1736 + $0x30] sm:$0xff]
    %v1744 = vld [vmem:[%s1736 + $0x38] sm:$0xff]
    %v1745 = vld [vmem:[%s1736 + $0x40] sm:$0xff]
    %v1746 = vld [vmem:[%s1736 + $0x48] sm:$0xff]
    %v1747 = vld [vmem:[%s1736 + $0x50] sm:$0xff]
    %v1748 = vld [vmem:[%s1736 + $0x58] sm:$0xff]
    %v1749 = vld [vmem:[%s1736 + $0x60] sm:$0xff]
    %v1750 = vld [vmem:[%s1736 + $0x68] sm:$0xff]
    %v1751 = vld [vmem:[%s1736 + $0x70] sm:$0xff]
    %v1752 = vld [vmem:[%s1736 + $0x78] sm:$0xff]
    %s1753 = scalar_lea.vmem %s11, 3
    %v1754 = vld [vmem:[%s1753] sm:$0x1]
    %v1756 = vlaneseq
    %v1757 = vshrl.u32 %v1756, 7
    %v1758 = vsub.s32 0, %v1757
    %v1759 = vrot.slane %v1754, %v1758
    %1761 = vmatprep.subr.mxu0 0.0
    %1762 = vmatpush1.msra.mxu0 %v1737
    %1763 = vmatprep.subr.mxu0 0.0
    %1764 = vmatpush1.msra.mxu0 %v1738
    %1765 = vmatprep.subr.mxu0 0.0
    %1766 = vmatpush1.msra.mxu0 %v1739
    %1767 = vmatprep.subr.mxu0 0.0
    %1768 = vmatpush1.msra.mxu0 %v1740
    %1769 = vmatprep.subr.mxu0 0.0
    %1770 = vmatpush1.msra.mxu0 %v1741
    %1771 = vmatprep.subr.mxu0 0.0
    %1772 = vmatpush1.msra.mxu0 %v1742
    %1773 = vmatprep.subr.mxu0 0.0
    %1774 = vmatpush1.msra.mxu0 %v1743
    %1775 = vmatprep.subr.mxu0 0.0
    %1776 = vmatpush1.msra.mxu0 %v1744
    %1777 = vmatprep.subr.mxu0 0.0
    %1778 = vmatpush1.msra.mxu0 %v1745
    %1779 = vmatprep.subr.mxu0 0.0
    %1780 = vmatpush1.msra.mxu0 %v1746
    %1781 = vmatprep.subr.mxu0 0.0
    %1782 = vmatpush1.msra.mxu0 %v1747
    %1783 = vmatprep.subr.mxu0 0.0
    %1784 = vmatpush1.msra.mxu0 %v1748
    %1785 = vmatprep.subr.mxu0 0.0
    %1786 = vmatpush1.msra.mxu0 %v1749
    %1787 = vmatprep.subr.mxu0 0.0
    %1788 = vmatpush1.msra.mxu0 %v1750
    %1789 = vmatprep.subr.mxu0 0.0
    %1790 = vmatpush1.msra.mxu0 %v1751
    %1791 = vmatprep.subr.mxu0 0.0
    %1792 = vmatpush1.msra.mxu0 %v1752
    %1793 = vmatprep.subr.mxu0 0.0
    %1794 = vmatpush1.msra.mxu0 0.0
    %1795 = vmatprep.subr.mxu0 0.0
    %1796 = vmatpush1.msra.mxu0 0.0
    %1797 = vmatprep.subr.mxu0 0.0
    %1798 = vmatpush1.msra.mxu0 0.0
    %1799 = vmatprep.subr.mxu0 0.0
    %1800 = vmatpush1.msra.mxu0 0.0
    %1801 = vmatprep.subr.mxu0 0.0
    %1802 = vmatpush1.msra.mxu0 0.0
    %1803 = vmatprep.subr.mxu0 0.0
    %1804 = vmatpush1.msra.mxu0 0.0
    %1805 = vmatprep.subr.mxu0 0.0
    %1806 = vmatpush1.msra.mxu0 0.0
    %1807 = vmatprep.subr.mxu0 0.0
    %1808 = vmatpush1.msra.mxu0 0.0
    %1809 = vmatprep.subr.mxu0 0.0
    %1810 = vmatpush1.msra.mxu0 0.0
    %1811 = vmatprep.subr.mxu0 0.0
    %1812 = vmatpush1.msra.mxu0 0.0
    %1813 = vmatprep.subr.mxu0 0.0
    %1814 = vmatpush1.msra.mxu0 0.0
    %1815 = vmatprep.subr.mxu0 0.0
    %1816 = vmatpush1.msra.mxu0 0.0
    %1817 = vmatprep.subr.mxu0 0.0
    %1818 = vmatpush1.msra.mxu0 0.0
    %1819 = vmatprep.subr.mxu0 0.0
    %1820 = vmatpush1.msra.mxu0 0.0
    %1821 = vmatprep.subr.mxu0 0.0
    %1822 = vmatpush1.msra.mxu0 0.0
    %1823 = vmatprep.subr.mxu0 0.0
    %1824 = vmatpush1.msra.mxu0 0.0
    %1825 = vmatprep.mubr.f32.mxu0 0.0
    %1826 = vmatmul.mubr.f32.gmra.mrb[0].mxu0 %v1735
    %v1827 = vpop.f32.mrb[0].mxu0
    %v1828 = vadd.f32 %v1759, %v1827
    %v1829 = vpop.f32.mrb[0].mxu0
    %1830 = vdwg.mxu0
    %1831 = vst [vmem:[#allocation13] sm:$0xff] %v1828
    %v1832 = vld [vmem:[#allocation8] sm:$0xff]
    %v1833 = vld [vmem:[#allocation8 + $0x8] sm:$0xff]
    %v1834 = vld [vmem:[#allocation8 + $0x10] sm:$0xff]
    %v1835 = vld [vmem:[#allocation8 + $0x18] sm:$0xff]
    %v1836 = vld [vmem:[#allocation8 + $0x20] sm:$0xff]
    %v1837 = vld [vmem:[#allocation8 + $0x28] sm:$0xff]
    %v1838 = vld [vmem:[#allocation8 + $0x30] sm:$0xff]
    %v1839 = vld [vmem:[#allocation8 + $0x38] sm:$0xff]
    %v1840 = vld [vmem:[#allocation8 + $0x40] sm:$0xff]
    %v1841 = vld [vmem:[#allocation8 + $0x48] sm:$0xff]
    %v1842 = vld [vmem:[#allocation8 + $0x50] sm:$0xff]
    %v1843 = vld [vmem:[#allocation8 + $0x58] sm:$0xff]
    %v1844 = vld [vmem:[#allocation8 + $0x60] sm:$0xff]
    %v1845 = vld [vmem:[#allocation8 + $0x68] sm:$0xff]
    %v1846 = vld [vmem:[#allocation8 + $0x70] sm:$0xff]
    %v1847 = vld [vmem:[#allocation8 + $0x78] sm:$0xff]
    %v1848 = vld [vmem:[%s15] sm:$0x1]
    %v1850 = vlaneseq
    %v1851 = vshrl.u32 %v1850, 7
    %v1852 = vsub.s32 0, %v1851
    %v1853 = vrot.slane %v1848, %v1852
    %1855 = vmatprep.subr.mxu0 0.0
    %1856 = vmatpush1.msra.mxu0 %v1832
    %1857 = vmatprep.subr.mxu0 0.0
    %1858 = vmatpush1.msra.mxu0 %v1833
    %1859 = vmatprep.subr.mxu0 0.0
    %1860 = vmatpush1.msra.mxu0 %v1834
    %1861 = vmatprep.subr.mxu0 0.0
    %1862 = vmatpush1.msra.mxu0 %v1835
    %1863 = vmatprep.subr.mxu0 0.0
    %1864 = vmatpush1.msra.mxu0 %v1836
    %1865 = vmatprep.subr.mxu0 0.0
    %1866 = vmatpush1.msra.mxu0 %v1837
    %1867 = vmatprep.subr.mxu0 0.0
    %1868 = vmatpush1.msra.mxu0 %v1838
    %1869 = vmatprep.subr.mxu0 0.0
    %1870 = vmatpush1.msra.mxu0 %v1839
    %1871 = vmatprep.subr.mxu0 0.0
    %1872 = vmatpush1.msra.mxu0 %v1840
    %1873 = vmatprep.subr.mxu0 0.0
    %1874 = vmatpush1.msra.mxu0 %v1841
    %1875 = vmatprep.subr.mxu0 0.0
    %1876 = vmatpush1.msra.mxu0 %v1842
    %1877 = vmatprep.subr.mxu0 0.0
    %1878 = vmatpush1.msra.mxu0 %v1843
    %1879 = vmatprep.subr.mxu0 0.0
    %1880 = vmatpush1.msra.mxu0 %v1844
    %1881 = vmatprep.subr.mxu0 0.0
    %1882 = vmatpush1.msra.mxu0 %v1845
    %1883 = vmatprep.subr.mxu0 0.0
    %1884 = vmatpush1.msra.mxu0 %v1846
    %1885 = vmatprep.subr.mxu0 0.0
    %1886 = vmatpush1.msra.mxu0 %v1847
    %1887 = vmatprep.subr.mxu0 0.0
    %1888 = vmatpush1.msra.mxu0 0.0
    %1889 = vmatprep.subr.mxu0 0.0
    %1890 = vmatpush1.msra.mxu0 0.0
    %1891 = vmatprep.subr.mxu0 0.0
    %1892 = vmatpush1.msra.mxu0 0.0
    %1893 = vmatprep.subr.mxu0 0.0
    %1894 = vmatpush1.msra.mxu0 0.0
    %1895 = vmatprep.subr.mxu0 0.0
    %1896 = vmatpush1.msra.mxu0 0.0
    %1897 = vmatprep.subr.mxu0 0.0
    %1898 = vmatpush1.msra.mxu0 0.0
    %1899 = vmatprep.subr.mxu0 0.0
    %1900 = vmatpush1.msra.mxu0 0.0
    %1901 = vmatprep.subr.mxu0 0.0
    %1902 = vmatpush1.msra.mxu0 0.0
    %1903 = vmatprep.subr.mxu0 0.0
    %1904 = vmatpush1.msra.mxu0 0.0
    %1905 = vmatprep.subr.mxu0 0.0
    %1906 = vmatpush1.msra.mxu0 0.0
    %1907 = vmatprep.subr.mxu0 0.0
    %1908 = vmatpush1.msra.mxu0 0.0
    %1909 = vmatprep.subr.mxu0 0.0
    %1910 = vmatpush1.msra.mxu0 0.0
    %1911 = vmatprep.subr.mxu0 0.0
    %1912 = vmatpush1.msra.mxu0 0.0
    %1913 = vmatprep.subr.mxu0 0.0
    %1914 = vmatpush1.msra.mxu0 0.0
    %1915 = vmatprep.subr.mxu0 0.0
    %1916 = vmatpush1.msra.mxu0 0.0
    %1917 = vmatprep.subr.mxu0 0.0
    %1918 = vmatpush1.msra.mxu0 0.0
    %1919 = vmatprep.mubr.f32.mxu0 0.0
    %1920 = vmatmul.mubr.f32.gmra.mrb[0].mxu0 %v1149
    %v1921 = vpop.f32.mrb[0].mxu0
    %v1922 = vadd.f32 %v1853, %v1921
    %v1923 = vpop.f32.mrb[0].mxu0
    %1924 = vdwg.mxu0
    %v1925 = vrot.slane %v1922, 4
    %v1926 = vadd.f32 %v1922, %v1925
    %v1927 = vrot.slane %v1926, 2
    %v1928 = vadd.f32 %v1926, %v1927
    %v1929 = vrot.slane %v1928, 1
    %v1930 = vadd.f32 %v1928, %v1929
    %v1931 = vmul.f32 %v1930, %v257
    %v1932 = vsub.f32 %v1922, %v1931
    %v1933 = vmul.f32 %v1932, %v1932
    %v1934 = vrot.slane %v1933, 4
    %v1935 = vadd.f32 %v1933, %v1934
    %v1936 = vrot.slane %v1935, 2
    %v1937 = vadd.f32 %v1935, %v1936
    %v1938 = vrot.slane %v1937, 1
    %v1939 = vadd.f32 %v1937, %v1938
    %v1940 = vmul.f32 %v1939, %v257
    %v1941 = vld [vmem:[%s16] sm:$0x1]
    %v1942 = vadd.f32 %v1940, 1e-05
    %v1943 = vrsqrt.pop %v1942
    %v1944 = vmul.f32 %v1932, %v1943
    %v1946 = vlaneseq
    %v1947 = vshrl.u32 %v1946, 7
    %v1948 = vsub.s32 0, %v1947
    %v1949 = vrot.slane %v1941, %v1948
    %v1951 = vmul.f32 %v1949, %v1944
    %v1952 = vld [vmem:[%s17] sm:$0x1]
    %v1954 = vlaneseq
    %v1955 = vshrl.u32 %v1954, 7
    %v1956 = vsub.s32 0, %v1955
    %v1957 = vrot.slane %v1952, %v1956
    %v1959 = vadd.f32 %v1951, %v1957
    %vm1960 = vcmp.ge.f32.partialorder %v1959, 0.0
    %v1961 = vmul.f32 %v1959, 0.2
    %v1962 = vsel %vm1960, %v1959, %v1961
    %s1963 = scalar_lea.vmem [#allocation8], 128
    %v1964 = vld [vmem:[%s1963] sm:$0xff]
    %v1965 = vld [vmem:[%s1963 + $0x8] sm:$0xff]
    %v1966 = vld [vmem:[%s1963 + $0x10] sm:$0xff]
    %v1967 = vld [vmem:[%s1963 + $0x18] sm:$0xff]
    %v1968 = vld [vmem:[%s1963 + $0x20] sm:$0xff]
    %v1969 = vld [vmem:[%s1963 + $0x28] sm:$0xff]
    %v1970 = vld [vmem:[%s1963 + $0x30] sm:$0xff]
    %v1971 = vld [vmem:[%s1963 + $0x38] sm:$0xff]
    %v1972 = vld [vmem:[%s1963 + $0x40] sm:$0xff]
    %v1973 = vld [vmem:[%s1963 + $0x48] sm:$0xff]
    %v1974 = vld [vmem:[%s1963 + $0x50] sm:$0xff]
    %v1975 = vld [vmem:[%s1963 + $0x58] sm:$0xff]
    %v1976 = vld [vmem:[%s1963 + $0x60] sm:$0xff]
    %v1977 = vld [vmem:[%s1963 + $0x68] sm:$0xff]
    %v1978 = vld [vmem:[%s1963 + $0x70] sm:$0xff]
    %v1979 = vld [vmem:[%s1963 + $0x78] sm:$0xff]
    %s1980 = scalar_lea.vmem %s15, 1
    %v1981 = vld [vmem:[%s1980] sm:$0x1]
    %v1983 = vlaneseq
    %v1984 = vshrl.u32 %v1983, 7
    %v1985 = vsub.s32 0, %v1984
    %v1986 = vrot.slane %v1981, %v1985
    %1988 = vmatprep.subr.mxu0 0.0
    %1989 = vmatpush1.msra.mxu0 %v1964
    %1990 = vmatprep.subr.mxu0 0.0
    %1991 = vmatpush1.msra.mxu0 %v1965
    %1992 = vmatprep.subr.mxu0 0.0
    %1993 = vmatpush1.msra.mxu0 %v1966
    %1994 = vmatprep.subr.mxu0 0.0
    %1995 = vmatpush1.msra.mxu0 %v1967
    %1996 = vmatprep.subr.mxu0 0.0
    %1997 = vmatpush1.msra.mxu0 %v1968
    %1998 = vmatprep.subr.mxu0 0.0
    %1999 = vmatpush1.msra.mxu0 %v1969
    %2000 = vmatprep.subr.mxu0 0.0
    %2001 = vmatpush1.msra.mxu0 %v1970
    %2002 = vmatprep.subr.mxu0 0.0
    %2003 = vmatpush1.msra.mxu0 %v1971
    %2004 = vmatprep.subr.mxu0 0.0
    %2005 = vmatpush1.msra.mxu0 %v1972
    %2006 = vmatprep.subr.mxu0 0.0
    %2007 = vmatpush1.msra.mxu0 %v1973
    %2008 = vmatprep.subr.mxu0 0.0
    %2009 = vmatpush1.msra.mxu0 %v1974
    %2010 = vmatprep.subr.mxu0 0.0
    %2011 = vmatpush1.msra.mxu0 %v1975
    %2012 = vmatprep.subr.mxu0 0.0
    %2013 = vmatpush1.msra.mxu0 %v1976
    %2014 = vmatprep.subr.mxu0 0.0
    %2015 = vmatpush1.msra.mxu0 %v1977
    %2016 = vmatprep.subr.mxu0 0.0
    %2017 = vmatpush1.msra.mxu0 %v1978
    %2018 = vmatprep.subr.mxu0 0.0
    %2019 = vmatpush1.msra.mxu0 %v1979
    %2020 = vmatprep.subr.mxu0 0.0
    %2021 = vmatpush1.msra.mxu0 0.0
    %2022 = vmatprep.subr.mxu0 0.0
    %2023 = vmatpush1.msra.mxu0 0.0
    %2024 = vmatprep.subr.mxu0 0.0
    %2025 = vmatpush1.msra.mxu0 0.0
    %2026 = vmatprep.subr.mxu0 0.0
    %2027 = vmatpush1.msra.mxu0 0.0
    %2028 = vmatprep.subr.mxu0 0.0
    %2029 = vmatpush1.msra.mxu0 0.0
    %2030 = vmatprep.subr.mxu0 0.0
    %2031 = vmatpush1.msra.mxu0 0.0
    %2032 = vmatprep.subr.mxu0 0.0
    %2033 = vmatpush1.msra.mxu0 0.0
    %2034 = vmatprep.subr.mxu0 0.0
    %2035 = vmatpush1.msra.mxu0 0.0
    %2036 = vmatprep.subr.mxu0 0.0
    %2037 = vmatpush1.msra.mxu0 0.0
    %2038 = vmatprep.subr.mxu0 0.0
    %2039 = vmatpush1.msra.mxu0 0.0
    %2040 = vmatprep.subr.mxu0 0.0
    %2041 = vmatpush1.msra.mxu0 0.0
    %2042 = vmatprep.subr.mxu0 0.0
    %2043 = vmatpush1.msra.mxu0 0.0
    %2044 = vmatprep.subr.mxu0 0.0
    %2045 = vmatpush1.msra.mxu0 0.0
    %2046 = vmatprep.subr.mxu0 0.0
    %2047 = vmatpush1.msra.mxu0 0.0
    %2048 = vmatprep.subr.mxu0 0.0
    %2049 = vmatpush1.msra.mxu0 0.0
    %2050 = vmatprep.subr.mxu0 0.0
    %2051 = vmatpush1.msra.mxu0 0.0
    %2052 = vmatprep.mubr.f32.mxu0 0.0
    %2053 = vmatmul.mubr.f32.gmra.mrb[0].mxu0 %v1962
    %v2054 = vpop.f32.mrb[0].mxu0
    %v2055 = vadd.f32 %v1986, %v2054
    %v2056 = vpop.f32.mrb[0].mxu0
    %2057 = vdwg.mxu0
    %v2058 = vrot.slane %v2055, 4
    %v2059 = vadd.f32 %v2055, %v2058
    %v2060 = vrot.slane %v2059, 2
    %v2061 = vadd.f32 %v2059, %v2060
    %v2062 = vrot.slane %v2061, 1
    %v2063 = vadd.f32 %v2061, %v2062
    %v2064 = vmul.f32 %v2063, %v257
    %v2065 = vsub.f32 %v2055, %v2064
    %v2066 = vmul.f32 %v2065, %v2065
    %v2067 = vrot.slane %v2066, 4
    %v2068 = vadd.f32 %v2066, %v2067
    %v2069 = vrot.slane %v2068, 2
    %v2070 = vadd.f32 %v2068, %v2069
    %v2071 = vrot.slane %v2070, 1
    %v2072 = vadd.f32 %v2070, %v2071
    %v2073 = vmul.f32 %v2072, %v257
    %s2074 = scalar_lea.vmem %s16, 1
    %v2075 = vld [vmem:[%s2074] sm:$0x1]
    %v2076 = vadd.f32 %v2073, 1e-05
    %v2077 = vrsqrt.pop %v2076
    %v2078 = vmul.f32 %v2065, %v2077
    %v2080 = vlaneseq
    %v2081 = vshrl.u32 %v2080, 7
    %v2082 = vsub.s32 0, %v2081
    %v2083 = vrot.slane %v2075, %v2082
    %v2085 = vmul.f32 %v2083, %v2078
    %s2086 = scalar_lea.vmem %s17, 1
    %v2087 = vld [vmem:[%s2086] sm:$0x1]
    %v2089 = vlaneseq
    %v2090 = vshrl.u32 %v2089, 7
    %v2091 = vsub.s32 0, %v2090
    %v2092 = vrot.slane %v2087, %v2091
    %v2094 = vadd.f32 %v2085, %v2092
    %vm2095 = vcmp.ge.f32.partialorder %v2094, 0.0
    %v2096 = vmul.f32 %v2094, 0.2
    %v2097 = vsel %vm2095, %v2094, %v2096
    %s2098 = scalar_lea.vmem [#allocation8], 256
    %v2099 = vld [vmem:[%s2098] sm:$0xff]
    %v2100 = vld [vmem:[%s2098 + $0x8] sm:$0xff]
    %v2101 = vld [vmem:[%s2098 + $0x10] sm:$0xff]
    %v2102 = vld [vmem:[%s2098 + $0x18] sm:$0xff]
    %v2103 = vld [vmem:[%s2098 + $0x20] sm:$0xff]
    %v2104 = vld [vmem:[%s2098 + $0x28] sm:$0xff]
    %v2105 = vld [vmem:[%s2098 + $0x30] sm:$0xff]
    %v2106 = vld [vmem:[%s2098 + $0x38] sm:$0xff]
    %v2107 = vld [vmem:[%s2098 + $0x40] sm:$0xff]
    %v2108 = vld [vmem:[%s2098 + $0x48] sm:$0xff]
    %v2109 = vld [vmem:[%s2098 + $0x50] sm:$0xff]
    %v2110 = vld [vmem:[%s2098 + $0x58] sm:$0xff]
    %v2111 = vld [vmem:[%s2098 + $0x60] sm:$0xff]
    %v2112 = vld [vmem:[%s2098 + $0x68] sm:$0xff]
    %v2113 = vld [vmem:[%s2098 + $0x70] sm:$0xff]
    %v2114 = vld [vmem:[%s2098 + $0x78] sm:$0xff]
    %s2115 = scalar_lea.vmem %s15, 2
    %v2116 = vld [vmem:[%s2115] sm:$0x1]
    %v2118 = vlaneseq
    %v2119 = vshrl.u32 %v2118, 7
    %v2120 = vsub.s32 0, %v2119
    %v2121 = vrot.slane %v2116, %v2120
    %2123 = vmatprep.subr.mxu0 0.0
    %2124 = vmatpush1.msra.mxu0 %v2099
    %2125 = vmatprep.subr.mxu0 0.0
    %2126 = vmatpush1.msra.mxu0 %v2100
    %2127 = vmatprep.subr.mxu0 0.0
    %2128 = vmatpush1.msra.mxu0 %v2101
    %2129 = vmatprep.subr.mxu0 0.0
    %2130 = vmatpush1.msra.mxu0 %v2102
    %2131 = vmatprep.subr.mxu0 0.0
    %2132 = vmatpush1.msra.mxu0 %v2103
    %2133 = vmatprep.subr.mxu0 0.0
    %2134 = vmatpush1.msra.mxu0 %v2104
    %2135 = vmatprep.subr.mxu0 0.0
    %2136 = vmatpush1.msra.mxu0 %v2105
    %2137 = vmatprep.subr.mxu0 0.0
    %2138 = vmatpush1.msra.mxu0 %v2106
    %2139 = vmatprep.subr.mxu0 0.0
    %2140 = vmatpush1.msra.mxu0 %v2107
    %2141 = vmatprep.subr.mxu0 0.0
    %2142 = vmatpush1.msra.mxu0 %v2108
    %2143 = vmatprep.subr.mxu0 0.0
    %2144 = vmatpush1.msra.mxu0 %v2109
    %2145 = vmatprep.subr.mxu0 0.0
    %2146 = vmatpush1.msra.mxu0 %v2110
    %2147 = vmatprep.subr.mxu0 0.0
    %2148 = vmatpush1.msra.mxu0 %v2111
    %2149 = vmatprep.subr.mxu0 0.0
    %2150 = vmatpush1.msra.mxu0 %v2112
    %2151 = vmatprep.subr.mxu0 0.0
    %2152 = vmatpush1.msra.mxu0 %v2113
    %2153 = vmatprep.subr.mxu0 0.0
    %2154 = vmatpush1.msra.mxu0 %v2114
    %2155 = vmatprep.subr.mxu0 0.0
    %2156 = vmatpush1.msra.mxu0 0.0
    %2157 = vmatprep.subr.mxu0 0.0
    %2158 = vmatpush1.msra.mxu0 0.0
    %2159 = vmatprep.subr.mxu0 0.0
    %2160 = vmatpush1.msra.mxu0 0.0
    %2161 = vmatprep.subr.mxu0 0.0
    %2162 = vmatpush1.msra.mxu0 0.0
    %2163 = vmatprep.subr.mxu0 0.0
    %2164 = vmatpush1.msra.mxu0 0.0
    %2165 = vmatprep.subr.mxu0 0.0
    %2166 = vmatpush1.msra.mxu0 0.0
    %2167 = vmatprep.subr.mxu0 0.0
    %2168 = vmatpush1.msra.mxu0 0.0
    %2169 = vmatprep.subr.mxu0 0.0
    %2170 = vmatpush1.msra.mxu0 0.0
    %2171 = vmatprep.subr.mxu0 0.0
    %2172 = vmatpush1.msra.mxu0 0.0
    %2173 = vmatprep.subr.mxu0 0.0
    %2174 = vmatpush1.msra.mxu0 0.0
    %2175 = vmatprep.subr.mxu0 0.0
    %2176 = vmatpush1.msra.mxu0 0.0
    %2177 = vmatprep.subr.mxu0 0.0
    %2178 = vmatpush1.msra.mxu0 0.0
    %2179 = vmatprep.subr.mxu0 0.0
    %2180 = vmatpush1.msra.mxu0 0.0
    %2181 = vmatprep.subr.mxu0 0.0
    %2182 = vmatpush1.msra.mxu0 0.0
    %2183 = vmatprep.subr.mxu0 0.0
    %2184 = vmatpush1.msra.mxu0 0.0
    %2185 = vmatprep.subr.mxu0 0.0
    %2186 = vmatpush1.msra.mxu0 0.0
    %2187 = vmatprep.mubr.f32.mxu0 0.0
    %2188 = vmatmul.mubr.f32.gmra.mrb[0].mxu0 %v2097
    %v2189 = vpop.f32.mrb[0].mxu0
    %v2190 = vadd.f32 %v2121, %v2189
    %v2191 = vpop.f32.mrb[0].mxu0
    %2192 = vdwg.mxu0
    %v2193 = vrot.slane %v2190, 4
    %v2194 = vadd.f32 %v2190, %v2193
    %v2195 = vrot.slane %v2194, 2
    %v2196 = vadd.f32 %v2194, %v2195
    %v2197 = vrot.slane %v2196, 1
    %v2198 = vadd.f32 %v2196, %v2197
    %v2199 = vmul.f32 %v2198, %v257
    %v2200 = vsub.f32 %v2190, %v2199
    %v2201 = vmul.f32 %v2200, %v2200
    %v2202 = vrot.slane %v2201, 4
    %v2203 = vadd.f32 %v2201, %v2202
    %v2204 = vrot.slane %v2203, 2
    %v2205 = vadd.f32 %v2203, %v2204
    %v2206 = vrot.slane %v2205, 1
    %v2207 = vadd.f32 %v2205, %v2206
    %v2208 = vmul.f32 %v2207, %v257
    %s2209 = scalar_lea.vmem %s16, 2
    %v2210 = vld [vmem:[%s2209] sm:$0x1]
    %v2211 = vadd.f32 %v2208, 1e-05
    %v2212 = vrsqrt.pop %v2211
    %v2213 = vmul.f32 %v2200, %v2212
    %v2215 = vlaneseq
    %v2216 = vshrl.u32 %v2215, 7
    %v2217 = vsub.s32 0, %v2216
    %v2218 = vrot.slane %v2210, %v2217
    %v2220 = vmul.f32 %v2218, %v2213
    %s2221 = scalar_lea.vmem %s17, 2
    %v2222 = vld [vmem:[%s2221] sm:$0x1]
    %v2224 = vlaneseq
    %v2225 = vshrl.u32 %v2224, 7
    %v2226 = vsub.s32 0, %v2225
    %v2227 = vrot.slane %v2222, %v2226
    %v2229 = vadd.f32 %v2220, %v2227
    %vm2230 = vcmp.ge.f32.partialorder %v2229, 0.0
    %v2231 = vmul.f32 %v2229, 0.2
    %v2232 = vsel %vm2230, %v2229, %v2231
    %s2233 = scalar_lea.vmem [#allocation8], 384
    %v2234 = vld [vmem:[%s2233] sm:$0xff]
    %v2235 = vld [vmem:[%s2233 + $0x8] sm:$0xff]
    %v2236 = vld [vmem:[%s2233 + $0x10] sm:$0xff]
    %v2237 = vld [vmem:[%s2233 + $0x18] sm:$0xff]
    %v2238 = vld [vmem:[%s2233 + $0x20] sm:$0xff]
    %v2239 = vld [vmem:[%s2233 + $0x28] sm:$0xff]
    %v2240 = vld [vmem:[%s2233 + $0x30] sm:$0xff]
    %v2241 = vld [vmem:[%s2233 + $0x38] sm:$0xff]
    %v2242 = vld [vmem:[%s2233 + $0x40] sm:$0xff]
    %v2243 = vld [vmem:[%s2233 + $0x48] sm:$0xff]
    %v2244 = vld [vmem:[%s2233 + $0x50] sm:$0xff]
    %v2245 = vld [vmem:[%s2233 + $0x58] sm:$0xff]
    %v2246 = vld [vmem:[%s2233 + $0x60] sm:$0xff]
    %v2247 = vld [vmem:[%s2233 + $0x68] sm:$0xff]
    %v2248 = vld [vmem:[%s2233 + $0x70] sm:$0xff]
    %v2249 = vld [vmem:[%s2233 + $0x78] sm:$0xff]
    %s2250 = scalar_lea.vmem %s15, 3
    %v2251 = vld [vmem:[%s2250] sm:$0x1]
    %v2253 = vlaneseq
    %v2254 = vshrl.u32 %v2253, 7
    %v2255 = vsub.s32 0, %v2254
    %v2256 = vrot.slane %v2251, %v2255
    %2258 = vmatprep.subr.mxu0 0.0
    %2259 = vmatpush1.msra.mxu0 %v2234
    %2260 = vmatprep.subr.mxu0 0.0
    %2261 = vmatpush1.msra.mxu0 %v2235
    %2262 = vmatprep.subr.mxu0 0.0
    %2263 = vmatpush1.msra.mxu0 %v2236
    %2264 = vmatprep.subr.mxu0 0.0
    %2265 = vmatpush1.msra.mxu0 %v2237
    %2266 = vmatprep.subr.mxu0 0.0
    %2267 = vmatpush1.msra.mxu0 %v2238
    %2268 = vmatprep.subr.mxu0 0.0
    %2269 = vmatpush1.msra.mxu0 %v2239
    %2270 = vmatprep.subr.mxu0 0.0
    %2271 = vmatpush1.msra.mxu0 %v2240
    %2272 = vmatprep.subr.mxu0 0.0
    %2273 = vmatpush1.msra.mxu0 %v2241
    %2274 = vmatprep.subr.mxu0 0.0
    %2275 = vmatpush1.msra.mxu0 %v2242
    %2276 = vmatprep.subr.mxu0 0.0
    %2277 = vmatpush1.msra.mxu0 %v2243
    %2278 = vmatprep.subr.mxu0 0.0
    %2279 = vmatpush1.msra.mxu0 %v2244
    %2280 = vmatprep.subr.mxu0 0.0
    %2281 = vmatpush1.msra.mxu0 %v2245
    %2282 = vmatprep.subr.mxu0 0.0
    %2283 = vmatpush1.msra.mxu0 %v2246
    %2284 = vmatprep.subr.mxu0 0.0
    %2285 = vmatpush1.msra.mxu0 %v2247
    %2286 = vmatprep.subr.mxu0 0.0
    %2287 = vmatpush1.msra.mxu0 %v2248
    %2288 = vmatprep.subr.mxu0 0.0
    %2289 = vmatpush1.msra.mxu0 %v2249
    %2290 = vmatprep.subr.mxu0 0.0
    %2291 = vmatpush1.msra.mxu0 0.0
    %2292 = vmatprep.subr.mxu0 0.0
    %2293 = vmatpush1.msra.mxu0 0.0
    %2294 = vmatprep.subr.mxu0 0.0
    %2295 = vmatpush1.msra.mxu0 0.0
    %2296 = vmatprep.subr.mxu0 0.0
    %2297 = vmatpush1.msra.mxu0 0.0
    %2298 = vmatprep.subr.mxu0 0.0
    %2299 = vmatpush1.msra.mxu0 0.0
    %2300 = vmatprep.subr.mxu0 0.0
    %2301 = vmatpush1.msra.mxu0 0.0
    %2302 = vmatprep.subr.mxu0 0.0
    %2303 = vmatpush1.msra.mxu0 0.0
    %2304 = vmatprep.subr.mxu0 0.0
    %2305 = vmatpush1.msra.mxu0 0.0
    %2306 = vmatprep.subr.mxu0 0.0
    %2307 = vmatpush1.msra.mxu0 0.0
    %2308 = vmatprep.subr.mxu0 0.0
    %2309 = vmatpush1.msra.mxu0 0.0
    %2310 = vmatprep.subr.mxu0 0.0
    %2311 = vmatpush1.msra.mxu0 0.0
    %2312 = vmatprep.subr.mxu0 0.0
    %2313 = vmatpush1.msra.mxu0 0.0
    %2314 = vmatprep.subr.mxu0 0.0
    %2315 = vmatpush1.msra.mxu0 0.0
    %2316 = vmatprep.subr.mxu0 0.0
    %2317 = vmatpush1.msra.mxu0 0.0
    %2318 = vmatprep.subr.mxu0 0.0
    %2319 = vmatpush1.msra.mxu0 0.0
    %2320 = vmatprep.subr.mxu0 0.0
    %2321 = vmatpush1.msra.mxu0 0.0
    %2322 = vmatprep.mubr.f32.mxu0 0.0
    %2323 = vmatmul.mubr.f32.gmra.mrb[0].mxu0 %v2232
    %v2324 = vpop.f32.mrb[0].mxu0
    %v2325 = vadd.f32 %v2256, %v2324
    %v2326 = vpop.f32.mrb[0].mxu0
    %2327 = vdwg.mxu0
    %2328 = vst [vmem:[#allocation14] sm:$0xff] %v2325
    // Predicated region
    $region110: #{autoencoder_forward.1} parent=1 // pred_check
      _
    $region111: #{autoencoder_forward.1} parent=1 // pred_check_branch
      %2330 = sbr.rel (0) target = $region113
    $region112: #{autoencoder_forward.1} parent=1 // pred_region
      %s2332 = ssub.s32 128, 128
      %2333 = vsyncadd [#allocation4], %s2332
      %s2335 = sshll.u32 [#allocation13], 4
      %s2336 = int_to_ptr.vmem [resolvable:$true] %s2335
      %2338 = dma.vmem_to_hbm [thread:$0]  %s2336, 128, %s21, [#allocation4]
    $region113: #{autoencoder_forward.1} parent=1 // pred_fallthru
      _
    // Predicated region
    $region114: #{autoencoder_forward.1} parent=1 // pred_check
      _
    $region115: #{autoencoder_forward.1} parent=1 // pred_check_branch
      %2340 = sbr.rel (0) target = $region117
    $region116: #{autoencoder_forward.1} parent=1 // pred_region
      %s2342 = ssub.s32 128, 128
      %2343 = vsyncadd [#allocation15], %s2342
      %s2345 = sshll.u32 [#allocation14], 4
      %s2346 = int_to_ptr.vmem [resolvable:$true] %s2345
      %2348 = dma.vmem_to_hbm [thread:$0]  %s2346, 128, %s22, [#allocation15]
    $region117: #{autoencoder_forward.1} parent=1 // pred_fallthru
      _
    // Predicated region
    $region118: #{autoencoder_forward.1} parent=1 // pred_check
      _
    $region119: #{autoencoder_forward.1} parent=1 // pred_check_branch
      %2350 = sbr.rel (0) target = $region121
    $region120: #{autoencoder_forward.1} parent=1 // pred_region
      _
    $region121: #{autoencoder_forward.1} parent=1 // pred_fallthru
      _
    // Predicated region
    $region122: #{autoencoder_forward.1} parent=1 // pred_check
      _
    $region123: #{autoencoder_forward.1} parent=1 // pred_check_branch
      %2352 = sbr.rel (0) target = $region125
    $region124: #{autoencoder_forward.1} parent=1 // pred_region
      _
    $region125: #{autoencoder_forward.1} parent=1 // pred_fallthru
      _
    // Predicated region
    $region126: #{autoencoder_forward.1} parent=1 // pred_check
      _
    $region127: #{autoencoder_forward.1} parent=1 // pred_check_branch
      %2354 = sbr.rel (0) target = $region129
    $region128: #{autoencoder_forward.1} parent=1 // pred_region
      _
    $region129: #{autoencoder_forward.1} parent=1 // pred_fallthru
      _
    // Predicated region
    $region130: #{autoencoder_forward.1} parent=1 // pred_check
      _
    $region131: #{autoencoder_forward.1} parent=1 // pred_check_branch
      %2356 = sbr.rel (0) target = $region133
    $region132: #{autoencoder_forward.1} parent=1 // pred_region
      %2357 = dma.done [#allocation4], 128
    $region133: #{autoencoder_forward.1} parent=1 // pred_fallthru
      _
    // Predicated region
    $region134: #{autoencoder_forward.1} parent=1 // pred_check
      _
    $region135: #{autoencoder_forward.1} parent=1 // pred_check_branch
      %2359 = sbr.rel (0) target = $region137
    $region136: #{autoencoder_forward.1} parent=1 // pred_region
      %2360 = dma.done [#allocation15], 128
    $region137: #{autoencoder_forward.1} parent=1 // pred_fallthru
      _
    // Predicated region
    $region138: #{autoencoder_forward.1} parent=1 // pred_check
      _
    $region139: #{autoencoder_forward.1} parent=1 // pred_check_branch
      %2362 = sbr.rel (0) target = $region141
    $region140: #{autoencoder_forward.1} parent=1 // pred_region
      _
    $region141: #{autoencoder_forward.1} parent=1 // pred_fallthru
      _
    // Predicated region
    $region142: #{autoencoder_forward.1} parent=1 // pred_check
      _
    $region143: #{autoencoder_forward.1} parent=1 // pred_check_branch
      %2364 = sbr.rel (0) target = $region145
    $region144: #{autoencoder_forward.1} parent=1 // pred_region
      _
    $region145: #{autoencoder_forward.1} parent=1 // pred_fallthru
      _
    // Predicated region
    $region146: #{autoencoder_forward.1} parent=1 // pred_check
      _
    $region147: #{autoencoder_forward.1} parent=1 // pred_check_branch
      %2366 = sbr.rel (0) target = $region149
    $region148: #{autoencoder_forward.1} parent=1 // pred_region
      _
    $region149: #{autoencoder_forward.1} parent=1 // pred_fallthru
      _
    %2367 = vsyncpa [#allocation3], 1
    %2368 = vsyncpa [#allocation6], 1
    %2369 = vsyncpa [#allocation9], 1
    %2370 = vsyncpa [#allocation12], 1
    %2371 = vsyncpa [#allocation4], 1
    %2372 = vsyncpa [#allocation15], 1

</llo_original>
